<compile_context>
chip_gen: v6e
topology: v6e:2x2x1
jax: 0.10.0
libtpu: 0.0.40
codegen_flags: <defaults>
</compile_context>

<pallas_src>
import math
import functools

import numpy as np
import jax
import jax.numpy as jnp
from jax import lax
from jax.experimental import pallas as pl
from jax.experimental.pallas import tpu as pltpu


# ----------------------------------------------------------------------------
# Kernel: one grid step == one graph (batch element)
# ----------------------------------------------------------------------------

def _attention_value_net_kernel(
    x_ref,        # (N, node_dim+1)   node features + ones column
    init_w_ref,   # (node_dim+1, D)   init_embed weight with bias as last row
    wqkv_ref,     # (L*3*H, D, kd)    per-head W_q / W_k / W_v, type-major
    wo_ref,       # (L*H, kd, D)      per-head W_out
    w1_ref,       # (L, D, F)
    w2_ref,       # (L, F, D)
    b12_ref,      # (2L, 1, F)        [2l] = b1, [2l+1][:, :D] = b2
    dec_w_ref,    # (3, D, D)         decoder weights (w3 zero-padded to D cols)
    dec_b_ref,    # (3, 1, D)         decoder biases  (b3 zero-padded)
    h_out_ref,    # (N, D)
    out_ref,      # (1, 1, D)
    *, n_layers, n_heads, norm, embed_dim,
):
    N = x_ref.shape[0]
    D = embed_dim
    H = n_heads
    f32 = jnp.float32

    # --- init embedding (bias folded via the ones column of x) --------------
    h = jnp.dot(x_ref[...], init_w_ref[...], preferred_element_type=f32)   # (N, D)

    for l in range(n_layers):
        # ---- skip-MHA: per-head projections + per-head output accumulation --
        acc = h
        for hd in range(H):
            wq = wqkv_ref[(3 * l + 0) * H + hd]                 # (D, kd)
            wk = wqkv_ref[(3 * l + 1) * H + hd]
            wv = wqkv_ref[(3 * l + 2) * H + hd]
            q = jnp.dot(h, wq, preferred_element_type=f32)      # (N, kd)
            k = jnp.dot(h, wk, preferred_element_type=f32)
            v = jnp.dot(h, wv, preferred_element_type=f32)
            # scores = norm * q @ k.T, contracting kd directly (no k.T copy)
            s = norm * lax.dot_general(q, k, (((1,), (1,)), ((), ())),
                                       preferred_element_type=f32)         # (N, N)
            s = s - jnp.max(s, axis=-1, keepdims=True)
            e = jnp.exp(s)
            inv = pl.reciprocal(jnp.sum(e, axis=-1, keepdims=True), approx=True)
            a = e * inv
            hv = jnp.dot(a, v, preferred_element_type=f32)      # (N, kd)
            # accumulate this head's contribution to the output projection
            acc = acc + jnp.dot(hv, wo_ref[l * H + hd],
                                preferred_element_type=f32)     # (N, D)
        h = acc

        # ---- skip-FFN:  h <- h + W2 relu(W1 h + b1) + b2 ---------------------
        b1 = b12_ref[2 * l]                                     # (1, F)
        b2 = b12_ref[2 * l + 1][:, :D]                          # (1, D), offset-0 slice
        z = jnp.maximum(jnp.dot(h, w1_ref[l], preferred_element_type=f32) + b1, 0.0)
        h = h + jnp.dot(z, w2_ref[l], preferred_element_type=f32) + b2

    h_out_ref[...] = h

    # ---- graph mean: one MXU push against a constant averaging row ----------
    avg = jnp.full((1, N), 1.0 / N, dtype=f32)
    hg = jnp.dot(avg, h, preferred_element_type=f32)            # (1, D)

    # ---- decoder: Linear -> ReLU -> Linear -> ReLU -> Linear -----------------
    d = jnp.maximum(jnp.dot(hg, dec_w_ref[0], preferred_element_type=f32)
                    + dec_b_ref[0], 0.0)
    d = jnp.maximum(jnp.dot(d, dec_w_ref[1], preferred_element_type=f32)
                    + dec_b_ref[1], 0.0)
    out_ref[0] = jnp.dot(d, dec_w_ref[2], preferred_element_type=f32) + dec_b_ref[2]


# ----------------------------------------------------------------------------
# Parameter packing (few, structured inputs -> few prologue DMAs) and wrapper
# ----------------------------------------------------------------------------

def _pack_params(params):
    layers = params["layers"]
    L = len(layers)
    H, D, kd = layers[0]["wq"].shape
    F = layers[0]["w1"].shape[1]
    out_dim = params["dec"]["w3"].shape[1]
    assert F >= D and D >= out_dim

    # init bias folded into an augmented weight (x gets a ones column)
    init_w_aug = jnp.concatenate([params["init_w"], params["init_b"]], axis=0)

    # (L*3*H, D, kd): index = (3*l + type)*H + head, type in {q, k, v}
    wqkv = jnp.concatenate(
        [jnp.stack([lp["wq"], lp["wk"], lp["wv"]]).reshape(3 * H, D, kd)
         for lp in layers], axis=0)
    # (L*H, kd, D)
    wo = jnp.concatenate([lp["wo"] for lp in layers], axis=0)
    w1 = jnp.stack([lp["w1"] for lp in layers])                       # (L, D, F)
    w2 = jnp.stack([lp["w2"] for lp in layers])                       # (L, F, D)
    # (2L, 1, F): [2l] = b1, [2l+1][:, :D] = b2 (zero-padded)
    b12 = jnp.concatenate(
        [jnp.stack([lp["b1"], jnp.pad(lp["b2"], ((0, 0), (0, F - D)))])
         for lp in layers], axis=0)

    dec = params["dec"]
    dec_w = jnp.stack([dec["w1"], dec["w2"],
                       jnp.pad(dec["w3"], ((0, 0), (0, D - out_dim)))])   # (3, D, D)
    dec_b = jnp.stack([dec["b1"], dec["b2"],
                       jnp.pad(dec["b3"], ((0, 0), (0, D - out_dim)))])   # (3, 1, D)

    packed = dict(init_w_aug=init_w_aug, wqkv=wqkv, wo=wo, w1=w1, w2=w2,
                  b12=b12, dec_w=dec_w, dec_b=dec_b)
    return packed, H, kd, F, out_dim, L


def attention_value_net_pallas(params, x):
    B, N, node_dim = x.shape
    D = params["init_w"].shape[1]
    packed, H, kd, F, out_dim, L = _pack_params(params)

    # node features + ones column (folds init bias into the init weight)
    x_aug = jnp.concatenate(
        [x.reshape(B * N, node_dim), jnp.ones((B * N, 1), x.dtype)], axis=1)

    kernel = functools.partial(
        _attention_value_net_kernel,
        n_layers=L, n_heads=H, norm=1.0 / math.sqrt(kd), embed_dim=D)

    def weight_spec(a):
        return pl.BlockSpec(a.shape, lambda b, _n=a.ndim: (0,) * _n,
                            memory_space=pltpu.MemorySpace.VMEM)

    h_flat, out3 = pl.pallas_call(
        kernel,
        grid=(B,),  # one graph per grid step; "parallel" -> both TCs on v7x
        in_specs=[
            pl.BlockSpec((N, node_dim + 1), lambda b: (b, 0),
                         memory_space=pltpu.MemorySpace.VMEM),
            weight_spec(packed["init_w_aug"]),
            weight_spec(packed["wqkv"]),
            weight_spec(packed["wo"]),
            weight_spec(packed["w1"]),
            weight_spec(packed["w2"]),
            weight_spec(packed["b12"]),
            weight_spec(packed["dec_w"]),
            weight_spec(packed["dec_b"]),
        ],
        out_specs=(
            pl.BlockSpec((N, D), lambda b: (b, 0),
                         memory_space=pltpu.MemorySpace.VMEM),
            pl.BlockSpec((1, 1, D), lambda b: (b, 0, 0),
                         memory_space=pltpu.MemorySpace.VMEM),
        ),
        out_shape=(jax.ShapeDtypeStruct((B * N, D), jnp.float32),
                   jax.ShapeDtypeStruct((B, 1, D), jnp.float32)),
        compiler_params=pltpu.CompilerParams(
            dimension_semantics=("parallel",),
            vmem_limit_bytes=32 * 1024 * 1024),
    )(x_aug, packed["init_w_aug"], packed["wqkv"], packed["wo"],
      packed["w1"], packed["w2"], packed["b12"],
      packed["dec_w"], packed["dec_b"])

    return h_flat.reshape(B, N, D), out3[:, 0, :out_dim]


# ----------------------------------------------------------------------------
# Parameter construction (deterministic, mimics the torch init scheme)
# ----------------------------------------------------------------------------

def _uniform(key, shape, stdv):
    return jax.random.uniform(key, shape, jnp.float32, minval=-stdv, maxval=stdv)


def init_params(key, *, n_heads, embed_dim, n_layers, node_dim, ff_hidden, out_dim):
    kd = embed_dim // n_heads
    params = {}
    key, kw, kb = jax.random.split(key, 3)
    stdv = 1.0 / math.sqrt(node_dim)
    params["init_w"] = _uniform(kw, (node_dim, embed_dim), stdv)
    params["init_b"] = _uniform(kb, (1, embed_dim), stdv)

    layers = []
    for _ in range(n_layers):
        key, kq, kk, kv, ko, k1w, k1b, k2w, k2b = jax.random.split(key, 9)
        layers.append({
            "wq": _uniform(kq, (n_heads, embed_dim, kd), 1.0 / math.sqrt(kd)),
            "wk": _uniform(kk, (n_heads, embed_dim, kd), 1.0 / math.sqrt(kd)),
            "wv": _uniform(kv, (n_heads, embed_dim, kd), 1.0 / math.sqrt(kd)),
            "wo": _uniform(ko, (n_heads, kd, embed_dim), 1.0 / math.sqrt(embed_dim)),
            "w1": _uniform(k1w, (embed_dim, ff_hidden), 1.0 / math.sqrt(embed_dim)),
            "b1": _uniform(k1b, (1, ff_hidden), 1.0 / math.sqrt(embed_dim)),
            "w2": _uniform(k2w, (ff_hidden, embed_dim), 1.0 / math.sqrt(ff_hidden)),
            "b2": _uniform(k2b, (1, embed_dim), 1.0 / math.sqrt(ff_hidden)),
        })
    params["layers"] = layers

    key, kd1w, kd1b, kd2w, kd2b, kd3w, kd3b = jax.random.split(key, 7)
    s = 1.0 / math.sqrt(embed_dim)
    params["dec"] = {
        "w1": _uniform(kd1w, (embed_dim, embed_dim), s),
        "b1": _uniform(kd1b, (1, embed_dim), s),
        "w2": _uniform(kd2w, (embed_dim, embed_dim), s),
        "b2": _uniform(kd2b, (1, embed_dim), s),
        "w3": _uniform(kd3w, (embed_dim, out_dim), s),
        "b3": _uniform(kd3b, (1, out_dim), s),
    }
    return params


# ----------------------------------------------------------------------------
# Pure-JAX reference (mirrors the torch forward exactly)
# ----------------------------------------------------------------------------

def attention_value_net_ref(params, x):
    B, N, node_dim = x.shape
    D = params["init_w"].shape[1]
    h = (x.reshape(B * N, node_dim) @ params["init_w"]
         + params["init_b"]).reshape(B, N, D)
    for lp in params["layers"]:
        kd = lp["wq"].shape[-1]
        norm = 1.0 / math.sqrt(kd)
        Q = jnp.einsum("bnd,hdk->hbnk", h, lp["wq"])
        K = jnp.einsum("bnd,hdk->hbnk", h, lp["wk"])
        V = jnp.einsum("bnd,hdk->hbnk", h, lp["wv"])
        compat = norm * jnp.einsum("hbnk,hbmk->hbnm", Q, K)
        attn = jax.nn.softmax(compat, axis=-1)
        heads = jnp.einsum("hbnm,hbmk->hbnk", attn, V)
        h = h + jnp.einsum("hbnk,hkd->bnd", heads, lp["wo"])
        z = jnp.maximum(jnp.einsum("bnd,df->bnf", h, lp["w1"]) + lp["b1"][0], 0.0)
        h = h + jnp.einsum("bnf,fd->bnd", z, lp["w2"]) + lp["b2"][0]
    hg = jnp.mean(h, axis=1)
    dec = params["dec"]
    d = jnp.maximum(hg @ dec["w1"] + dec["b1"], 0.0)
    d = jnp.maximum(d @ dec["w2"] + dec["b2"], 0.0)
    out = d @ dec["w3"] + dec["b3"]
    return h, out


# ----------------------------------------------------------------------------
# Main
# ----------------------------------------------------------------------------

if __name__ == "__main__":
    n_heads = 4
    hidden_dim = 32        # embed_dim
    n_layers = 2
    node_dim = 4
    out_dim = 8
    ff_hidden = 512
    batch = 2
    graph_size = 8

    key = jax.random.PRNGKey(0)
    key, k_params, k_x = jax.random.split(key, 3)
    params = init_params(
        k_params, n_heads=n_heads, embed_dim=hidden_dim, n_layers=n_layers,
        node_dim=node_dim, ff_hidden=ff_hidden, out_dim=out_dim)
    x = jax.random.normal(k_x, (batch, graph_size, node_dim), jnp.float32)

    h, out = attention_value_net_pallas(params, x)
    h = jax.block_until_ready(h)
    out = jax.block_until_ready(out)

    h_exp, out_exp = attention_value_net_ref(params, x)
    # approx reciprocal in the softmax introduces ~1e-4 relative error.
    np.testing.assert_allclose(np.asarray(h), np.asarray(h_exp), rtol=2e-3, atol=2e-3)
    np.testing.assert_allclose(np.asarray(out), np.asarray(out_exp), rtol=2e-3, atol=2e-3)

    assert h.shape == (batch, graph_size, hidden_dim)
    assert out.shape == (batch, out_dim)
    print("KERNEL_OK")
</pallas_src>

<mosaic_0001>
module attributes {stable_mosaic.version = 11 : i64} {
  func.func @_attention_value_net_kernel(%arg0: i32, %arg1: memref<8x5xf32, #tpu.memory_space<vmem>>, %arg2: memref<5x32xf32, #tpu.memory_space<vmem>>, %arg3: memref<24x32x8xf32, #tpu.memory_space<vmem>>, %arg4: memref<8x8x32xf32, #tpu.memory_space<vmem>>, %arg5: memref<2x32x512xf32, #tpu.memory_space<vmem>>, %arg6: memref<2x512x32xf32, #tpu.memory_space<vmem>>, %arg7: memref<4x1x512xf32, #tpu.memory_space<vmem>>, %arg8: memref<3x32x32xf32, #tpu.memory_space<vmem>>, %arg9: memref<3x1x32xf32, #tpu.memory_space<vmem>>, %arg10: memref<8x32xf32, #tpu.memory_space<vmem>>, %arg11: memref<1x1x32xf32, #tpu.memory_space<vmem>>) attributes {dimension_semantics = [#tpu.dimension_semantics<parallel>], iteration_bounds = array<i64: 2>, scalar_prefetch = 0 : i64, scratch_operands = 0 : i64, tpu.core_type = #tpu.core_type<tc>, window_params = [{transform_indices = @transform_0, window_bounds = array<i64: 8, 5>}, {pipeline_mode = #tpu.pipeline_mode<synchronous>, transform_indices = @transform_1, window_bounds = array<i64: 5, 32>}, {pipeline_mode = #tpu.pipeline_mode<synchronous>, transform_indices = @transform_2, window_bounds = array<i64: 24, 32, 8>}, {pipeline_mode = #tpu.pipeline_mode<synchronous>, transform_indices = @transform_3, window_bounds = array<i64: 8, 8, 32>}, {pipeline_mode = #tpu.pipeline_mode<synchronous>, transform_indices = @transform_4, window_bounds = array<i64: 2, 32, 512>}, {pipeline_mode = #tpu.pipeline_mode<synchronous>, transform_indices = @transform_5, window_bounds = array<i64: 2, 512, 32>}, {pipeline_mode = #tpu.pipeline_mode<synchronous>, transform_indices = @transform_6, window_bounds = array<i64: 4, 1, 512>}, {pipeline_mode = #tpu.pipeline_mode<synchronous>, transform_indices = @transform_7, window_bounds = array<i64: 3, 32, 32>}, {pipeline_mode = #tpu.pipeline_mode<synchronous>, transform_indices = @transform_8, window_bounds = array<i64: 3, 1, 32>}, {transform_indices = @transform_9, window_bounds = array<i64: 8, 32>}, {transform_indices = @transform_10, window_bounds = array<i64: 1, 1, 32>}]} {
    %c0 = arith.constant 0 : index
    %c0_0 = arith.constant 0 : index
    %0 = vector.load %arg1[%c0, %c0_0] : memref<8x5xf32, #tpu.memory_space<vmem>>, vector<8x5xf32>
    %c0_1 = arith.constant 0 : index
    %c0_2 = arith.constant 0 : index
    %1 = vector.load %arg2[%c0_1, %c0_2] : memref<5x32xf32, #tpu.memory_space<vmem>>, vector<5x32xf32>
    %cst = arith.constant dense<0.000000e+00> : vector<8x32xf32>
    %2 = tpu.matmul %0, %1, %cst {dimension_numbers = #tpu.dot_dimension_numbers<[1], [0], [0], [1], [0, 0, 1, 1], [], []>} : vector<8x5xf32>, vector<5x32xf32>, vector<8x32xf32> -> vector<8x32xf32>
    %c0_3 = arith.constant 0 : index
    %c0_4 = arith.constant 0 : index
    %c0_5 = arith.constant 0 : index
    %3 = vector.load %arg3[%c0_3, %c0_4, %c0_5] : memref<24x32x8xf32, #tpu.memory_space<vmem>>, vector<1x32x8xf32>
    %4 = vector.shape_cast %3 : vector<1x32x8xf32> to vector<32x8xf32>
    %c4 = arith.constant 4 : index
    %c0_6 = arith.constant 0 : index
    %c0_7 = arith.constant 0 : index
    %5 = vector.load %arg3[%c4, %c0_6, %c0_7] : memref<24x32x8xf32, #tpu.memory_space<vmem>>, vector<1x32x8xf32>
    %6 = vector.shape_cast %5 : vector<1x32x8xf32> to vector<32x8xf32>
    %c8 = arith.constant 8 : index
    %c0_8 = arith.constant 0 : index
    %c0_9 = arith.constant 0 : index
    %7 = vector.load %arg3[%c8, %c0_8, %c0_9] : memref<24x32x8xf32, #tpu.memory_space<vmem>>, vector<1x32x8xf32>
    %8 = vector.shape_cast %7 : vector<1x32x8xf32> to vector<32x8xf32>
    %cst_10 = arith.constant dense<0.000000e+00> : vector<8x8xf32>
    %9 = tpu.matmul %2, %4, %cst_10 {dimension_numbers = #tpu.dot_dimension_numbers<[1], [0], [0], [1], [0, 0, 1, 1], [], []>} : vector<8x32xf32>, vector<32x8xf32>, vector<8x8xf32> -> vector<8x8xf32>
    %cst_11 = arith.constant dense<0.000000e+00> : vector<8x8xf32>
    %10 = tpu.matmul %2, %6, %cst_11 {dimension_numbers = #tpu.dot_dimension_numbers<[1], [0], [0], [1], [0, 0, 1, 1], [], []>} : vector<8x32xf32>, vector<32x8xf32>, vector<8x8xf32> -> vector<8x8xf32>
    %cst_12 = arith.constant dense<0.000000e+00> : vector<8x8xf32>
    %11 = tpu.matmul %2, %8, %cst_12 {dimension_numbers = #tpu.dot_dimension_numbers<[1], [0], [0], [1], [0, 0, 1, 1], [], []>} : vector<8x32xf32>, vector<32x8xf32>, vector<8x8xf32> -> vector<8x8xf32>
    %cst_13 = arith.constant dense<0.000000e+00> : vector<8x8xf32>
    %12 = tpu.matmul %9, %10, %cst_13 {dimension_numbers = #tpu.dot_dimension_numbers<[1], [1], [0], [0], [0, 0, 1, 0], [], []>} : vector<8x8xf32>, vector<8x8xf32>, vector<8x8xf32> -> vector<8x8xf32>
    %cst_14 = arith.constant 0.353553385 : f32
    %13 = vector.broadcast %cst_14 : f32 to vector<8x8xf32>
    %14 = arith.mulf %13, %12 : vector<8x8xf32>
    %cst_15 = arith.constant dense<0xFF800000> : vector<8xf32>
    %15 = vector.multi_reduction <maximumf>, %14, %cst_15 [1] : vector<8x8xf32> to vector<8xf32>
    %16 = vector.shape_cast %15 : vector<8xf32> to vector<8x1xf32>
    %17 = vector.broadcast %16 : vector<8x1xf32> to vector<8x8xf32>
    %18 = arith.subf %14, %17 : vector<8x8xf32>
    %19 = math.exp %18 : vector<8x8xf32>
    %cst_16 = arith.constant dense<0.000000e+00> : vector<8xf32>
    %20 = vector.multi_reduction <add>, %19, %cst_16 [1] : vector<8x8xf32> to vector<8xf32>
    %21 = vector.shape_cast %20 : vector<8xf32> to vector<8x1xf32>
    %22 = tpu.reciprocal %21 {approx = true} : vector<8x1xf32> -> vector<8x1xf32>
    %23 = vector.broadcast %22 : vector<8x1xf32> to vector<8x8xf32>
    %24 = arith.mulf %19, %23 : vector<8x8xf32>
    %cst_17 = arith.constant dense<0.000000e+00> : vector<8x8xf32>
    %25 = tpu.matmul %24, %11, %cst_17 {dimension_numbers = #tpu.dot_dimension_numbers<[1], [0], [0], [1], [0, 0, 1, 1], [], []>} : vector<8x8xf32>, vector<8x8xf32>, vector<8x8xf32> -> vector<8x8xf32>
    %c0_18 = arith.constant 0 : index
    %c0_19 = arith.constant 0 : index
    %c0_20 = arith.constant 0 : index
    %26 = vector.load %arg4[%c0_18, %c0_19, %c0_20] : memref<8x8x32xf32, #tpu.memory_space<vmem>>, vector<1x8x32xf32>
    %27 = vector.shape_cast %26 : vector<1x8x32xf32> to vector<8x32xf32>
    %cst_21 = arith.constant dense<0.000000e+00> : vector<8x32xf32>
    %28 = tpu.matmul %25, %27, %cst_21 {dimension_numbers = #tpu.dot_dimension_numbers<[1], [0], [0], [1], [0, 0, 1, 1], [], []>} : vector<8x8xf32>, vector<8x32xf32>, vector<8x32xf32> -> vector<8x32xf32>
    %29 = arith.addf %2, %28 : vector<8x32xf32>
    %c1 = arith.constant 1 : index
    %c0_22 = arith.constant 0 : index
    %c0_23 = arith.constant 0 : index
    %30 = vector.load %arg3[%c1, %c0_22, %c0_23] : memref<24x32x8xf32, #tpu.memory_space<vmem>>, vector<1x32x8xf32>
    %31 = vector.shape_cast %30 : vector<1x32x8xf32> to vector<32x8xf32>
    %c5 = arith.constant 5 : index
    %c0_24 = arith.constant 0 : index
    %c0_25 = arith.constant 0 : index
    %32 = vector.load %arg3[%c5, %c0_24, %c0_25] : memref<24x32x8xf32, #tpu.memory_space<vmem>>, vector<1x32x8xf32>
    %33 = vector.shape_cast %32 : vector<1x32x8xf32> to vector<32x8xf32>
    %c9 = arith.constant 9 : index
    %c0_26 = arith.constant 0 : index
    %c0_27 = arith.constant 0 : index
    %34 = vector.load %arg3[%c9, %c0_26, %c0_27] : memref<24x32x8xf32, #tpu.memory_space<vmem>>, vector<1x32x8xf32>
    %35 = vector.shape_cast %34 : vector<1x32x8xf32> to vector<32x8xf32>
    %cst_28 = arith.constant dense<0.000000e+00> : vector<8x8xf32>
    %36 = tpu.matmul %2, %31, %cst_28 {dimension_numbers = #tpu.dot_dimension_numbers<[1], [0], [0], [1], [0, 0, 1, 1], [], []>} : vector<8x32xf32>, vector<32x8xf32>, vector<8x8xf32> -> vector<8x8xf32>
    %cst_29 = arith.constant dense<0.000000e+00> : vector<8x8xf32>
    %37 = tpu.matmul %2, %33, %cst_29 {dimension_numbers = #tpu.dot_dimension_numbers<[1], [0], [0], [1], [0, 0, 1, 1], [], []>} : vector<8x32xf32>, vector<32x8xf32>, vector<8x8xf32> -> vector<8x8xf32>
    %cst_30 = arith.constant dense<0.000000e+00> : vector<8x8xf32>
    %38 = tpu.matmul %2, %35, %cst_30 {dimension_numbers = #tpu.dot_dimension_numbers<[1], [0], [0], [1], [0, 0, 1, 1], [], []>} : vector<8x32xf32>, vector<32x8xf32>, vector<8x8xf32> -> vector<8x8xf32>
    %cst_31 = arith.constant dense<0.000000e+00> : vector<8x8xf32>
    %39 = tpu.matmul %36, %37, %cst_31 {dimension_numbers = #tpu.dot_dimension_numbers<[1], [1], [0], [0], [0, 0, 1, 0], [], []>} : vector<8x8xf32>, vector<8x8xf32>, vector<8x8xf32> -> vector<8x8xf32>
    %cst_32 = arith.constant 0.353553385 : f32
    %40 = vector.broadcast %cst_32 : f32 to vector<8x8xf32>
    %41 = arith.mulf %40, %39 : vector<8x8xf32>
    %cst_33 = arith.constant dense<0xFF800000> : vector<8xf32>
    %42 = vector.multi_reduction <maximumf>, %41, %cst_33 [1] : vector<8x8xf32> to vector<8xf32>
    %43 = vector.shape_cast %42 : vector<8xf32> to vector<8x1xf32>
    %44 = vector.broadcast %43 : vector<8x1xf32> to vector<8x8xf32>
    %45 = arith.subf %41, %44 : vector<8x8xf32>
    %46 = math.exp %45 : vector<8x8xf32>
    %cst_34 = arith.constant dense<0.000000e+00> : vector<8xf32>
    %47 = vector.multi_reduction <add>, %46, %cst_34 [1] : vector<8x8xf32> to vector<8xf32>
    %48 = vector.shape_cast %47 : vector<8xf32> to vector<8x1xf32>
    %49 = tpu.reciprocal %48 {approx = true} : vector<8x1xf32> -> vector<8x1xf32>
    %50 = vector.broadcast %49 : vector<8x1xf32> to vector<8x8xf32>
    %51 = arith.mulf %46, %50 : vector<8x8xf32>
    %cst_35 = arith.constant dense<0.000000e+00> : vector<8x8xf32>
    %52 = tpu.matmul %51, %38, %cst_35 {dimension_numbers = #tpu.dot_dimension_numbers<[1], [0], [0], [1], [0, 0, 1, 1], [], []>} : vector<8x8xf32>, vector<8x8xf32>, vector<8x8xf32> -> vector<8x8xf32>
    %c1_36 = arith.constant 1 : index
    %c0_37 = arith.constant 0 : index
    %c0_38 = arith.constant 0 : index
    %53 = vector.load %arg4[%c1_36, %c0_37, %c0_38] : memref<8x8x32xf32, #tpu.memory_space<vmem>>, vector<1x8x32xf32>
    %54 = vector.shape_cast %53 : vector<1x8x32xf32> to vector<8x32xf32>
    %cst_39 = arith.constant dense<0.000000e+00> : vector<8x32xf32>
    %55 = tpu.matmul %52, %54, %cst_39 {dimension_numbers = #tpu.dot_dimension_numbers<[1], [0], [0], [1], [0, 0, 1, 1], [], []>} : vector<8x8xf32>, vector<8x32xf32>, vector<8x32xf32> -> vector<8x32xf32>
    %56 = arith.addf %29, %55 : vector<8x32xf32>
    %c2 = arith.constant 2 : index
    %c0_40 = arith.constant 0 : index
    %c0_41 = arith.constant 0 : index
    %57 = vector.load %arg3[%c2, %c0_40, %c0_41] : memref<24x32x8xf32, #tpu.memory_space<vmem>>, vector<1x32x8xf32>
    %58 = vector.shape_cast %57 : vector<1x32x8xf32> to vector<32x8xf32>
    %c6 = arith.constant 6 : index
    %c0_42 = arith.constant 0 : index
    %c0_43 = arith.constant 0 : index
    %59 = vector.load %arg3[%c6, %c0_42, %c0_43] : memref<24x32x8xf32, #tpu.memory_space<vmem>>, vector<1x32x8xf32>
    %60 = vector.shape_cast %59 : vector<1x32x8xf32> to vector<32x8xf32>
    %c10 = arith.constant 10 : index
    %c0_44 = arith.constant 0 : index
    %c0_45 = arith.constant 0 : index
    %61 = vector.load %arg3[%c10, %c0_44, %c0_45] : memref<24x32x8xf32, #tpu.memory_space<vmem>>, vector<1x32x8xf32>
    %62 = vector.shape_cast %61 : vector<1x32x8xf32> to vector<32x8xf32>
    %cst_46 = arith.constant dense<0.000000e+00> : vector<8x8xf32>
    %63 = tpu.matmul %2, %58, %cst_46 {dimension_numbers = #tpu.dot_dimension_numbers<[1], [0], [0], [1], [0, 0, 1, 1], [], []>} : vector<8x32xf32>, vector<32x8xf32>, vector<8x8xf32> -> vector<8x8xf32>
    %cst_47 = arith.constant dense<0.000000e+00> : vector<8x8xf32>
    %64 = tpu.matmul %2, %60, %cst_47 {dimension_numbers = #tpu.dot_dimension_numbers<[1], [0], [0], [1], [0, 0, 1, 1], [], []>} : vector<8x32xf32>, vector<32x8xf32>, vector<8x8xf32> -> vector<8x8xf32>
    %cst_48 = arith.constant dense<0.000000e+00> : vector<8x8xf32>
    %65 = tpu.matmul %2, %62, %cst_48 {dimension_numbers = #tpu.dot_dimension_numbers<[1], [0], [0], [1], [0, 0, 1, 1], [], []>} : vector<8x32xf32>, vector<32x8xf32>, vector<8x8xf32> -> vector<8x8xf32>
    %cst_49 = arith.constant dense<0.000000e+00> : vector<8x8xf32>
    %66 = tpu.matmul %63, %64, %cst_49 {dimension_numbers = #tpu.dot_dimension_numbers<[1], [1], [0], [0], [0, 0, 1, 0], [], []>} : vector<8x8xf32>, vector<8x8xf32>, vector<8x8xf32> -> vector<8x8xf32>
    %cst_50 = arith.constant 0.353553385 : f32
    %67 = vector.broadcast %cst_50 : f32 to vector<8x8xf32>
    %68 = arith.mulf %67, %66 : vector<8x8xf32>
    %cst_51 = arith.constant dense<0xFF800000> : vector<8xf32>
    %69 = vector.multi_reduction <maximumf>, %68, %cst_51 [1] : vector<8x8xf32> to vector<8xf32>
    %70 = vector.shape_cast %69 : vector<8xf32> to vector<8x1xf32>
    %71 = vector.broadcast %70 : vector<8x1xf32> to vector<8x8xf32>
    %72 = arith.subf %68, %71 : vector<8x8xf32>
    %73 = math.exp %72 : vector<8x8xf32>
    %cst_52 = arith.constant dense<0.000000e+00> : vector<8xf32>
    %74 = vector.multi_reduction <add>, %73, %cst_52 [1] : vector<8x8xf32> to vector<8xf32>
    %75 = vector.shape_cast %74 : vector<8xf32> to vector<8x1xf32>
    %76 = tpu.reciprocal %75 {approx = true} : vector<8x1xf32> -> vector<8x1xf32>
    %77 = vector.broadcast %76 : vector<8x1xf32> to vector<8x8xf32>
    %78 = arith.mulf %73, %77 : vector<8x8xf32>
    %cst_53 = arith.constant dense<0.000000e+00> : vector<8x8xf32>
    %79 = tpu.matmul %78, %65, %cst_53 {dimension_numbers = #tpu.dot_dimension_numbers<[1], [0], [0], [1], [0, 0, 1, 1], [], []>} : vector<8x8xf32>, vector<8x8xf32>, vector<8x8xf32> -> vector<8x8xf32>
    %c2_54 = arith.constant 2 : index
    %c0_55 = arith.constant 0 : index
    %c0_56 = arith.constant 0 : index
    %80 = vector.load %arg4[%c2_54, %c0_55, %c0_56] : memref<8x8x32xf32, #tpu.memory_space<vmem>>, vector<1x8x32xf32>
    %81 = vector.shape_cast %80 : vector<1x8x32xf32> to vector<8x32xf32>
    %cst_57 = arith.constant dense<0.000000e+00> : vector<8x32xf32>
    %82 = tpu.matmul %79, %81, %cst_57 {dimension_numbers = #tpu.dot_dimension_numbers<[1], [0], [0], [1], [0, 0, 1, 1], [], []>} : vector<8x8xf32>, vector<8x32xf32>, vector<8x32xf32> -> vector<8x32xf32>
    %83 = arith.addf %56, %82 : vector<8x32xf32>
    %c3 = arith.constant 3 : index
    %c0_58 = arith.constant 0 : index
    %c0_59 = arith.constant 0 : index
    %84 = vector.load %arg3[%c3, %c0_58, %c0_59] : memref<24x32x8xf32, #tpu.memory_space<vmem>>, vector<1x32x8xf32>
    %85 = vector.shape_cast %84 : vector<1x32x8xf32> to vector<32x8xf32>
    %c7 = arith.constant 7 : index
    %c0_60 = arith.constant 0 : index
    %c0_61 = arith.constant 0 : index
    %86 = vector.load %arg3[%c7, %c0_60, %c0_61] : memref<24x32x8xf32, #tpu.memory_space<vmem>>, vector<1x32x8xf32>
    %87 = vector.shape_cast %86 : vector<1x32x8xf32> to vector<32x8xf32>
    %c11 = arith.constant 11 : index
    %c0_62 = arith.constant 0 : index
    %c0_63 = arith.constant 0 : index
    %88 = vector.load %arg3[%c11, %c0_62, %c0_63] : memref<24x32x8xf32, #tpu.memory_space<vmem>>, vector<1x32x8xf32>
    %89 = vector.shape_cast %88 : vector<1x32x8xf32> to vector<32x8xf32>
    %cst_64 = arith.constant dense<0.000000e+00> : vector<8x8xf32>
    %90 = tpu.matmul %2, %85, %cst_64 {dimension_numbers = #tpu.dot_dimension_numbers<[1], [0], [0], [1], [0, 0, 1, 1], [], []>} : vector<8x32xf32>, vector<32x8xf32>, vector<8x8xf32> -> vector<8x8xf32>
    %cst_65 = arith.constant dense<0.000000e+00> : vector<8x8xf32>
    %91 = tpu.matmul %2, %87, %cst_65 {dimension_numbers = #tpu.dot_dimension_numbers<[1], [0], [0], [1], [0, 0, 1, 1], [], []>} : vector<8x32xf32>, vector<32x8xf32>, vector<8x8xf32> -> vector<8x8xf32>
    %cst_66 = arith.constant dense<0.000000e+00> : vector<8x8xf32>
    %92 = tpu.matmul %2, %89, %cst_66 {dimension_numbers = #tpu.dot_dimension_numbers<[1], [0], [0], [1], [0, 0, 1, 1], [], []>} : vector<8x32xf32>, vector<32x8xf32>, vector<8x8xf32> -> vector<8x8xf32>
    %cst_67 = arith.constant dense<0.000000e+00> : vector<8x8xf32>
    %93 = tpu.matmul %90, %91, %cst_67 {dimension_numbers = #tpu.dot_dimension_numbers<[1], [1], [0], [0], [0, 0, 1, 0], [], []>} : vector<8x8xf32>, vector<8x8xf32>, vector<8x8xf32> -> vector<8x8xf32>
    %cst_68 = arith.constant 0.353553385 : f32
    %94 = vector.broadcast %cst_68 : f32 to vector<8x8xf32>
    %95 = arith.mulf %94, %93 : vector<8x8xf32>
    %cst_69 = arith.constant dense<0xFF800000> : vector<8xf32>
    %96 = vector.multi_reduction <maximumf>, %95, %cst_69 [1] : vector<8x8xf32> to vector<8xf32>
    %97 = vector.shape_cast %96 : vector<8xf32> to vector<8x1xf32>
    %98 = vector.broadcast %97 : vector<8x1xf32> to vector<8x8xf32>
    %99 = arith.subf %95, %98 : vector<8x8xf32>
    %100 = math.exp %99 : vector<8x8xf32>
    %cst_70 = arith.constant dense<0.000000e+00> : vector<8xf32>
    %101 = vector.multi_reduction <add>, %100, %cst_70 [1] : vector<8x8xf32> to vector<8xf32>
    %102 = vector.shape_cast %101 : vector<8xf32> to vector<8x1xf32>
    %103 = tpu.reciprocal %102 {approx = true} : vector<8x1xf32> -> vector<8x1xf32>
    %104 = vector.broadcast %103 : vector<8x1xf32> to vector<8x8xf32>
    %105 = arith.mulf %100, %104 : vector<8x8xf32>
    %cst_71 = arith.constant dense<0.000000e+00> : vector<8x8xf32>
    %106 = tpu.matmul %105, %92, %cst_71 {dimension_numbers = #tpu.dot_dimension_numbers<[1], [0], [0], [1], [0, 0, 1, 1], [], []>} : vector<8x8xf32>, vector<8x8xf32>, vector<8x8xf32> -> vector<8x8xf32>
    %c3_72 = arith.constant 3 : index
    %c0_73 = arith.constant 0 : index
    %c0_74 = arith.constant 0 : index
    %107 = vector.load %arg4[%c3_72, %c0_73, %c0_74] : memref<8x8x32xf32, #tpu.memory_space<vmem>>, vector<1x8x32xf32>
    %108 = vector.shape_cast %107 : vector<1x8x32xf32> to vector<8x32xf32>
    %cst_75 = arith.constant dense<0.000000e+00> : vector<8x32xf32>
    %109 = tpu.matmul %106, %108, %cst_75 {dimension_numbers = #tpu.dot_dimension_numbers<[1], [0], [0], [1], [0, 0, 1, 1], [], []>} : vector<8x8xf32>, vector<8x32xf32>, vector<8x32xf32> -> vector<8x32xf32>
    %110 = arith.addf %83, %109 : vector<8x32xf32>
    %c0_76 = arith.constant 0 : index
    %c0_77 = arith.constant 0 : index
    %c0_78 = arith.constant 0 : index
    %111 = vector.load %arg7[%c0_76, %c0_77, %c0_78] : memref<4x1x512xf32, #tpu.memory_space<vmem>>, vector<1x1x512xf32>
    %112 = vector.shape_cast %111 : vector<1x1x512xf32> to vector<1x512xf32>
    %c1_79 = arith.constant 1 : index
    %c0_80 = arith.constant 0 : index
    %c0_81 = arith.constant 0 : index
    %113 = vector.load %arg7[%c1_79, %c0_80, %c0_81] : memref<4x1x512xf32, #tpu.memory_space<vmem>>, vector<1x1x512xf32>
    %114 = vector.shape_cast %113 : vector<1x1x512xf32> to vector<1x512xf32>
    %115 = vector.extract_strided_slice %114 {offsets = [0, 0], sizes = [1, 32], strides = [1, 1]} : vector<1x512xf32> to vector<1x32xf32>
    %c0_82 = arith.constant 0 : index
    %c0_83 = arith.constant 0 : index
    %c0_84 = arith.constant 0 : index
    %116 = vector.load %arg5[%c0_82, %c0_83, %c0_84] : memref<2x32x512xf32, #tpu.memory_space<vmem>>, vector<1x32x512xf32>
    %117 = vector.shape_cast %116 : vector<1x32x512xf32> to vector<32x512xf32>
    %cst_85 = arith.constant dense<0.000000e+00> : vector<8x512xf32>
    %118 = tpu.matmul %110, %117, %cst_85 {dimension_numbers = #tpu.dot_dimension_numbers<[1], [0], [0], [1], [0, 0, 1, 1], [], []>} : vector<8x32xf32>, vector<32x512xf32>, vector<8x512xf32> -> vector<8x512xf32>
    %119 = vector.broadcast %112 : vector<1x512xf32> to vector<8x512xf32>
    %120 = arith.addf %118, %119 : vector<8x512xf32>
    %cst_86 = arith.constant 0.000000e+00 : f32
    %121 = vector.broadcast %cst_86 : f32 to vector<8x512xf32>
    %122 = arith.maximumf %120, %121 : vector<8x512xf32>
    %c0_87 = arith.constant 0 : index
    %c0_88 = arith.constant 0 : index
    %c0_89 = arith.constant 0 : index
    %123 = vector.load %arg6[%c0_87, %c0_88, %c0_89] : memref<2x512x32xf32, #tpu.memory_space<vmem>>, vector<1x512x32xf32>
    %124 = vector.shape_cast %123 : vector<1x512x32xf32> to vector<512x32xf32>
    %cst_90 = arith.constant dense<0.000000e+00> : vector<8x32xf32>
    %125 = tpu.matmul %122, %124, %cst_90 {dimension_numbers = #tpu.dot_dimension_numbers<[1], [0], [0], [1], [0, 0, 1, 1], [], []>} : vector<8x512xf32>, vector<512x32xf32>, vector<8x32xf32> -> vector<8x32xf32>
    %126 = arith.addf %110, %125 : vector<8x32xf32>
    %127 = vector.broadcast %115 : vector<1x32xf32> to vector<8x32xf32>
    %128 = arith.addf %126, %127 : vector<8x32xf32>
    %c12 = arith.constant 12 : index
    %c0_91 = arith.constant 0 : index
    %c0_92 = arith.constant 0 : index
    %129 = vector.load %arg3[%c12, %c0_91, %c0_92] : memref<24x32x8xf32, #tpu.memory_space<vmem>>, vector<1x32x8xf32>
    %130 = vector.shape_cast %129 : vector<1x32x8xf32> to vector<32x8xf32>
    %c16 = arith.constant 16 : index
    %c0_93 = arith.constant 0 : index
    %c0_94 = arith.constant 0 : index
    %131 = vector.load %arg3[%c16, %c0_93, %c0_94] : memref<24x32x8xf32, #tpu.memory_space<vmem>>, vector<1x32x8xf32>
    %132 = vector.shape_cast %131 : vector<1x32x8xf32> to vector<32x8xf32>
    %c20 = arith.constant 20 : index
    %c0_95 = arith.constant 0 : index
    %c0_96 = arith.constant 0 : index
    %133 = vector.load %arg3[%c20, %c0_95, %c0_96] : memref<24x32x8xf32, #tpu.memory_space<vmem>>, vector<1x32x8xf32>
    %134 = vector.shape_cast %133 : vector<1x32x8xf32> to vector<32x8xf32>
    %cst_97 = arith.constant dense<0.000000e+00> : vector<8x8xf32>
    %135 = tpu.matmul %128, %130, %cst_97 {dimension_numbers = #tpu.dot_dimension_numbers<[1], [0], [0], [1], [0, 0, 1, 1], [], []>} : vector<8x32xf32>, vector<32x8xf32>, vector<8x8xf32> -> vector<8x8xf32>
    %cst_98 = arith.constant dense<0.000000e+00> : vector<8x8xf32>
    %136 = tpu.matmul %128, %132, %cst_98 {dimension_numbers = #tpu.dot_dimension_numbers<[1], [0], [0], [1], [0, 0, 1, 1], [], []>} : vector<8x32xf32>, vector<32x8xf32>, vector<8x8xf32> -> vector<8x8xf32>
    %cst_99 = arith.constant dense<0.000000e+00> : vector<8x8xf32>
    %137 = tpu.matmul %128, %134, %cst_99 {dimension_numbers = #tpu.dot_dimension_numbers<[1], [0], [0], [1], [0, 0, 1, 1], [], []>} : vector<8x32xf32>, vector<32x8xf32>, vector<8x8xf32> -> vector<8x8xf32>
    %cst_100 = arith.constant dense<0.000000e+00> : vector<8x8xf32>
    %138 = tpu.matmul %135, %136, %cst_100 {dimension_numbers = #tpu.dot_dimension_numbers<[1], [1], [0], [0], [0, 0, 1, 0], [], []>} : vector<8x8xf32>, vector<8x8xf32>, vector<8x8xf32> -> vector<8x8xf32>
    %cst_101 = arith.constant 0.353553385 : f32
    %139 = vector.broadcast %cst_101 : f32 to vector<8x8xf32>
    %140 = arith.mulf %139, %138 : vector<8x8xf32>
    %cst_102 = arith.constant dense<0xFF800000> : vector<8xf32>
    %141 = vector.multi_reduction <maximumf>, %140, %cst_102 [1] : vector<8x8xf32> to vector<8xf32>
    %142 = vector.shape_cast %141 : vector<8xf32> to vector<8x1xf32>
    %143 = vector.broadcast %142 : vector<8x1xf32> to vector<8x8xf32>
    %144 = arith.subf %140, %143 : vector<8x8xf32>
    %145 = math.exp %144 : vector<8x8xf32>
    %cst_103 = arith.constant dense<0.000000e+00> : vector<8xf32>
    %146 = vector.multi_reduction <add>, %145, %cst_103 [1] : vector<8x8xf32> to vector<8xf32>
    %147 = vector.shape_cast %146 : vector<8xf32> to vector<8x1xf32>
    %148 = tpu.reciprocal %147 {approx = true} : vector<8x1xf32> -> vector<8x1xf32>
    %149 = vector.broadcast %148 : vector<8x1xf32> to vector<8x8xf32>
    %150 = arith.mulf %145, %149 : vector<8x8xf32>
    %cst_104 = arith.constant dense<0.000000e+00> : vector<8x8xf32>
    %151 = tpu.matmul %150, %137, %cst_104 {dimension_numbers = #tpu.dot_dimension_numbers<[1], [0], [0], [1], [0, 0, 1, 1], [], []>} : vector<8x8xf32>, vector<8x8xf32>, vector<8x8xf32> -> vector<8x8xf32>
    %c4_105 = arith.constant 4 : index
    %c0_106 = arith.constant 0 : index
    %c0_107 = arith.constant 0 : index
    %152 = vector.load %arg4[%c4_105, %c0_106, %c0_107] : memref<8x8x32xf32, #tpu.memory_space<vmem>>, vector<1x8x32xf32>
    %153 = vector.shape_cast %152 : vector<1x8x32xf32> to vector<8x32xf32>
    %cst_108 = arith.constant dense<0.000000e+00> : vector<8x32xf32>
    %154 = tpu.matmul %151, %153, %cst_108 {dimension_numbers = #tpu.dot_dimension_numbers<[1], [0], [0], [1], [0, 0, 1, 1], [], []>} : vector<8x8xf32>, vector<8x32xf32>, vector<8x32xf32> -> vector<8x32xf32>
    %155 = arith.addf %128, %154 : vector<8x32xf32>
    %c13 = arith.constant 13 : index
    %c0_109 = arith.constant 0 : index
    %c0_110 = arith.constant 0 : index
    %156 = vector.load %arg3[%c13, %c0_109, %c0_110] : memref<24x32x8xf32, #tpu.memory_space<vmem>>, vector<1x32x8xf32>
    %157 = vector.shape_cast %156 : vector<1x32x8xf32> to vector<32x8xf32>
    %c17 = arith.constant 17 : index
    %c0_111 = arith.constant 0 : index
    %c0_112 = arith.constant 0 : index
    %158 = vector.load %arg3[%c17, %c0_111, %c0_112] : memref<24x32x8xf32, #tpu.memory_space<vmem>>, vector<1x32x8xf32>
    %159 = vector.shape_cast %158 : vector<1x32x8xf32> to vector<32x8xf32>
    %c21 = arith.constant 21 : index
    %c0_113 = arith.constant 0 : index
    %c0_114 = arith.constant 0 : index
    %160 = vector.load %arg3[%c21, %c0_113, %c0_114] : memref<24x32x8xf32, #tpu.memory_space<vmem>>, vector<1x32x8xf32>
    %161 = vector.shape_cast %160 : vector<1x32x8xf32> to vector<32x8xf32>
    %cst_115 = arith.constant dense<0.000000e+00> : vector<8x8xf32>
    %162 = tpu.matmul %128, %157, %cst_115 {dimension_numbers = #tpu.dot_dimension_numbers<[1], [0], [0], [1], [0, 0, 1, 1], [], []>} : vector<8x32xf32>, vector<32x8xf32>, vector<8x8xf32> -> vector<8x8xf32>
    %cst_116 = arith.constant dense<0.000000e+00> : vector<8x8xf32>
    %163 = tpu.matmul %128, %159, %cst_116 {dimension_numbers = #tpu.dot_dimension_numbers<[1], [0], [0], [1], [0, 0, 1, 1], [], []>} : vector<8x32xf32>, vector<32x8xf32>, vector<8x8xf32> -> vector<8x8xf32>
    %cst_117 = arith.constant dense<0.000000e+00> : vector<8x8xf32>
    %164 = tpu.matmul %128, %161, %cst_117 {dimension_numbers = #tpu.dot_dimension_numbers<[1], [0], [0], [1], [0, 0, 1, 1], [], []>} : vector<8x32xf32>, vector<32x8xf32>, vector<8x8xf32> -> vector<8x8xf32>
    %cst_118 = arith.constant dense<0.000000e+00> : vector<8x8xf32>
    %165 = tpu.matmul %162, %163, %cst_118 {dimension_numbers = #tpu.dot_dimension_numbers<[1], [1], [0], [0], [0, 0, 1, 0], [], []>} : vector<8x8xf32>, vector<8x8xf32>, vector<8x8xf32> -> vector<8x8xf32>
    %cst_119 = arith.constant 0.353553385 : f32
    %166 = vector.broadcast %cst_119 : f32 to vector<8x8xf32>
    %167 = arith.mulf %166, %165 : vector<8x8xf32>
    %cst_120 = arith.constant dense<0xFF800000> : vector<8xf32>
    %168 = vector.multi_reduction <maximumf>, %167, %cst_120 [1] : vector<8x8xf32> to vector<8xf32>
    %169 = vector.shape_cast %168 : vector<8xf32> to vector<8x1xf32>
    %170 = vector.broadcast %169 : vector<8x1xf32> to vector<8x8xf32>
    %171 = arith.subf %167, %170 : vector<8x8xf32>
    %172 = math.exp %171 : vector<8x8xf32>
    %cst_121 = arith.constant dense<0.000000e+00> : vector<8xf32>
    %173 = vector.multi_reduction <add>, %172, %cst_121 [1] : vector<8x8xf32> to vector<8xf32>
    %174 = vector.shape_cast %173 : vector<8xf32> to vector<8x1xf32>
    %175 = tpu.reciprocal %174 {approx = true} : vector<8x1xf32> -> vector<8x1xf32>
    %176 = vector.broadcast %175 : vector<8x1xf32> to vector<8x8xf32>
    %177 = arith.mulf %172, %176 : vector<8x8xf32>
    %cst_122 = arith.constant dense<0.000000e+00> : vector<8x8xf32>
    %178 = tpu.matmul %177, %164, %cst_122 {dimension_numbers = #tpu.dot_dimension_numbers<[1], [0], [0], [1], [0, 0, 1, 1], [], []>} : vector<8x8xf32>, vector<8x8xf32>, vector<8x8xf32> -> vector<8x8xf32>
    %c5_123 = arith.constant 5 : index
    %c0_124 = arith.constant 0 : index
    %c0_125 = arith.constant 0 : index
    %179 = vector.load %arg4[%c5_123, %c0_124, %c0_125] : memref<8x8x32xf32, #tpu.memory_space<vmem>>, vector<1x8x32xf32>
    %180 = vector.shape_cast %179 : vector<1x8x32xf32> to vector<8x32xf32>
    %cst_126 = arith.constant dense<0.000000e+00> : vector<8x32xf32>
    %181 = tpu.matmul %178, %180, %cst_126 {dimension_numbers = #tpu.dot_dimension_numbers<[1], [0], [0], [1], [0, 0, 1, 1], [], []>} : vector<8x8xf32>, vector<8x32xf32>, vector<8x32xf32> -> vector<8x32xf32>
    %182 = arith.addf %155, %181 : vector<8x32xf32>
    %c14 = arith.constant 14 : index
    %c0_127 = arith.constant 0 : index
    %c0_128 = arith.constant 0 : index
    %183 = vector.load %arg3[%c14, %c0_127, %c0_128] : memref<24x32x8xf32, #tpu.memory_space<vmem>>, vector<1x32x8xf32>
    %184 = vector.shape_cast %183 : vector<1x32x8xf32> to vector<32x8xf32>
    %c18 = arith.constant 18 : index
    %c0_129 = arith.constant 0 : index
    %c0_130 = arith.constant 0 : index
    %185 = vector.load %arg3[%c18, %c0_129, %c0_130] : memref<24x32x8xf32, #tpu.memory_space<vmem>>, vector<1x32x8xf32>
    %186 = vector.shape_cast %185 : vector<1x32x8xf32> to vector<32x8xf32>
    %c22 = arith.constant 22 : index
    %c0_131 = arith.constant 0 : index
    %c0_132 = arith.constant 0 : index
    %187 = vector.load %arg3[%c22, %c0_131, %c0_132] : memref<24x32x8xf32, #tpu.memory_space<vmem>>, vector<1x32x8xf32>
    %188 = vector.shape_cast %187 : vector<1x32x8xf32> to vector<32x8xf32>
    %cst_133 = arith.constant dense<0.000000e+00> : vector<8x8xf32>
    %189 = tpu.matmul %128, %184, %cst_133 {dimension_numbers = #tpu.dot_dimension_numbers<[1], [0], [0], [1], [0, 0, 1, 1], [], []>} : vector<8x32xf32>, vector<32x8xf32>, vector<8x8xf32> -> vector<8x8xf32>
    %cst_134 = arith.constant dense<0.000000e+00> : vector<8x8xf32>
    %190 = tpu.matmul %128, %186, %cst_134 {dimension_numbers = #tpu.dot_dimension_numbers<[1], [0], [0], [1], [0, 0, 1, 1], [], []>} : vector<8x32xf32>, vector<32x8xf32>, vector<8x8xf32> -> vector<8x8xf32>
    %cst_135 = arith.constant dense<0.000000e+00> : vector<8x8xf32>
    %191 = tpu.matmul %128, %188, %cst_135 {dimension_numbers = #tpu.dot_dimension_numbers<[1], [0], [0], [1], [0, 0, 1, 1], [], []>} : vector<8x32xf32>, vector<32x8xf32>, vector<8x8xf32> -> vector<8x8xf32>
    %cst_136 = arith.constant dense<0.000000e+00> : vector<8x8xf32>
    %192 = tpu.matmul %189, %190, %cst_136 {dimension_numbers = #tpu.dot_dimension_numbers<[1], [1], [0], [0], [0, 0, 1, 0], [], []>} : vector<8x8xf32>, vector<8x8xf32>, vector<8x8xf32> -> vector<8x8xf32>
    %cst_137 = arith.constant 0.353553385 : f32
    %193 = vector.broadcast %cst_137 : f32 to vector<8x8xf32>
    %194 = arith.mulf %193, %192 : vector<8x8xf32>
    %cst_138 = arith.constant dense<0xFF800000> : vector<8xf32>
    %195 = vector.multi_reduction <maximumf>, %194, %cst_138 [1] : vector<8x8xf32> to vector<8xf32>
    %196 = vector.shape_cast %195 : vector<8xf32> to vector<8x1xf32>
    %197 = vector.broadcast %196 : vector<8x1xf32> to vector<8x8xf32>
    %198 = arith.subf %194, %197 : vector<8x8xf32>
    %199 = math.exp %198 : vector<8x8xf32>
    %cst_139 = arith.constant dense<0.000000e+00> : vector<8xf32>
    %200 = vector.multi_reduction <add>, %199, %cst_139 [1] : vector<8x8xf32> to vector<8xf32>
    %201 = vector.shape_cast %200 : vector<8xf32> to vector<8x1xf32>
    %202 = tpu.reciprocal %201 {approx = true} : vector<8x1xf32> -> vector<8x1xf32>
    %203 = vector.broadcast %202 : vector<8x1xf32> to vector<8x8xf32>
    %204 = arith.mulf %199, %203 : vector<8x8xf32>
    %cst_140 = arith.constant dense<0.000000e+00> : vector<8x8xf32>
    %205 = tpu.matmul %204, %191, %cst_140 {dimension_numbers = #tpu.dot_dimension_numbers<[1], [0], [0], [1], [0, 0, 1, 1], [], []>} : vector<8x8xf32>, vector<8x8xf32>, vector<8x8xf32> -> vector<8x8xf32>
    %c6_141 = arith.constant 6 : index
    %c0_142 = arith.constant 0 : index
    %c0_143 = arith.constant 0 : index
    %206 = vector.load %arg4[%c6_141, %c0_142, %c0_143] : memref<8x8x32xf32, #tpu.memory_space<vmem>>, vector<1x8x32xf32>
    %207 = vector.shape_cast %206 : vector<1x8x32xf32> to vector<8x32xf32>
    %cst_144 = arith.constant dense<0.000000e+00> : vector<8x32xf32>
    %208 = tpu.matmul %205, %207, %cst_144 {dimension_numbers = #tpu.dot_dimension_numbers<[1], [0], [0], [1], [0, 0, 1, 1], [], []>} : vector<8x8xf32>, vector<8x32xf32>, vector<8x32xf32> -> vector<8x32xf32>
    %209 = arith.addf %182, %208 : vector<8x32xf32>
    %c15 = arith.constant 15 : index
    %c0_145 = arith.constant 0 : index
    %c0_146 = arith.constant 0 : index
    %210 = vector.load %arg3[%c15, %c0_145, %c0_146] : memref<24x32x8xf32, #tpu.memory_space<vmem>>, vector<1x32x8xf32>
    %211 = vector.shape_cast %210 : vector<1x32x8xf32> to vector<32x8xf32>
    %c19 = arith.constant 19 : index
    %c0_147 = arith.constant 0 : index
    %c0_148 = arith.constant 0 : index
    %212 = vector.load %arg3[%c19, %c0_147, %c0_148] : memref<24x32x8xf32, #tpu.memory_space<vmem>>, vector<1x32x8xf32>
    %213 = vector.shape_cast %212 : vector<1x32x8xf32> to vector<32x8xf32>
    %c23 = arith.constant 23 : index
    %c0_149 = arith.constant 0 : index
    %c0_150 = arith.constant 0 : index
    %214 = vector.load %arg3[%c23, %c0_149, %c0_150] : memref<24x32x8xf32, #tpu.memory_space<vmem>>, vector<1x32x8xf32>
    %215 = vector.shape_cast %214 : vector<1x32x8xf32> to vector<32x8xf32>
    %cst_151 = arith.constant dense<0.000000e+00> : vector<8x8xf32>
    %216 = tpu.matmul %128, %211, %cst_151 {dimension_numbers = #tpu.dot_dimension_numbers<[1], [0], [0], [1], [0, 0, 1, 1], [], []>} : vector<8x32xf32>, vector<32x8xf32>, vector<8x8xf32> -> vector<8x8xf32>
    %cst_152 = arith.constant dense<0.000000e+00> : vector<8x8xf32>
    %217 = tpu.matmul %128, %213, %cst_152 {dimension_numbers = #tpu.dot_dimension_numbers<[1], [0], [0], [1], [0, 0, 1, 1], [], []>} : vector<8x32xf32>, vector<32x8xf32>, vector<8x8xf32> -> vector<8x8xf32>
    %cst_153 = arith.constant dense<0.000000e+00> : vector<8x8xf32>
    %218 = tpu.matmul %128, %215, %cst_153 {dimension_numbers = #tpu.dot_dimension_numbers<[1], [0], [0], [1], [0, 0, 1, 1], [], []>} : vector<8x32xf32>, vector<32x8xf32>, vector<8x8xf32> -> vector<8x8xf32>
    %cst_154 = arith.constant dense<0.000000e+00> : vector<8x8xf32>
    %219 = tpu.matmul %216, %217, %cst_154 {dimension_numbers = #tpu.dot_dimension_numbers<[1], [1], [0], [0], [0, 0, 1, 0], [], []>} : vector<8x8xf32>, vector<8x8xf32>, vector<8x8xf32> -> vector<8x8xf32>
    %cst_155 = arith.constant 0.353553385 : f32
    %220 = vector.broadcast %cst_155 : f32 to vector<8x8xf32>
    %221 = arith.mulf %220, %219 : vector<8x8xf32>
    %cst_156 = arith.constant dense<0xFF800000> : vector<8xf32>
    %222 = vector.multi_reduction <maximumf>, %221, %cst_156 [1] : vector<8x8xf32> to vector<8xf32>
    %223 = vector.shape_cast %222 : vector<8xf32> to vector<8x1xf32>
    %224 = vector.broadcast %223 : vector<8x1xf32> to vector<8x8xf32>
    %225 = arith.subf %221, %224 : vector<8x8xf32>
    %226 = math.exp %225 : vector<8x8xf32>
    %cst_157 = arith.constant dense<0.000000e+00> : vector<8xf32>
    %227 = vector.multi_reduction <add>, %226, %cst_157 [1] : vector<8x8xf32> to vector<8xf32>
    %228 = vector.shape_cast %227 : vector<8xf32> to vector<8x1xf32>
    %229 = tpu.reciprocal %228 {approx = true} : vector<8x1xf32> -> vector<8x1xf32>
    %230 = vector.broadcast %229 : vector<8x1xf32> to vector<8x8xf32>
    %231 = arith.mulf %226, %230 : vector<8x8xf32>
    %cst_158 = arith.constant dense<0.000000e+00> : vector<8x8xf32>
    %232 = tpu.matmul %231, %218, %cst_158 {dimension_numbers = #tpu.dot_dimension_numbers<[1], [0], [0], [1], [0, 0, 1, 1], [], []>} : vector<8x8xf32>, vector<8x8xf32>, vector<8x8xf32> -> vector<8x8xf32>
    %c7_159 = arith.constant 7 : index
    %c0_160 = arith.constant 0 : index
    %c0_161 = arith.constant 0 : index
    %233 = vector.load %arg4[%c7_159, %c0_160, %c0_161] : memref<8x8x32xf32, #tpu.memory_space<vmem>>, vector<1x8x32xf32>
    %234 = vector.shape_cast %233 : vector<1x8x32xf32> to vector<8x32xf32>
    %cst_162 = arith.constant dense<0.000000e+00> : vector<8x32xf32>
    %235 = tpu.matmul %232, %234, %cst_162 {dimension_numbers = #tpu.dot_dimension_numbers<[1], [0], [0], [1], [0, 0, 1, 1], [], []>} : vector<8x8xf32>, vector<8x32xf32>, vector<8x32xf32> -> vector<8x32xf32>
    %236 = arith.addf %209, %235 : vector<8x32xf32>
    %c2_163 = arith.constant 2 : index
    %c0_164 = arith.constant 0 : index
    %c0_165 = arith.constant 0 : index
    %237 = vector.load %arg7[%c2_163, %c0_164, %c0_165] : memref<4x1x512xf32, #tpu.memory_space<vmem>>, vector<1x1x512xf32>
    %238 = vector.shape_cast %237 : vector<1x1x512xf32> to vector<1x512xf32>
    %c3_166 = arith.constant 3 : index
    %c0_167 = arith.constant 0 : index
    %c0_168 = arith.constant 0 : index
    %239 = vector.load %arg7[%c3_166, %c0_167, %c0_168] : memref<4x1x512xf32, #tpu.memory_space<vmem>>, vector<1x1x512xf32>
    %240 = vector.shape_cast %239 : vector<1x1x512xf32> to vector<1x512xf32>
    %241 = vector.extract_strided_slice %240 {offsets = [0, 0], sizes = [1, 32], strides = [1, 1]} : vector<1x512xf32> to vector<1x32xf32>
    %c1_169 = arith.constant 1 : index
    %c0_170 = arith.constant 0 : index
    %c0_171 = arith.constant 0 : index
    %242 = vector.load %arg5[%c1_169, %c0_170, %c0_171] : memref<2x32x512xf32, #tpu.memory_space<vmem>>, vector<1x32x512xf32>
    %243 = vector.shape_cast %242 : vector<1x32x512xf32> to vector<32x512xf32>
    %cst_172 = arith.constant dense<0.000000e+00> : vector<8x512xf32>
    %244 = tpu.matmul %236, %243, %cst_172 {dimension_numbers = #tpu.dot_dimension_numbers<[1], [0], [0], [1], [0, 0, 1, 1], [], []>} : vector<8x32xf32>, vector<32x512xf32>, vector<8x512xf32> -> vector<8x512xf32>
    %245 = vector.broadcast %238 : vector<1x512xf32> to vector<8x512xf32>
    %246 = arith.addf %244, %245 : vector<8x512xf32>
    %cst_173 = arith.constant 0.000000e+00 : f32
    %247 = vector.broadcast %cst_173 : f32 to vector<8x512xf32>
    %248 = arith.maximumf %246, %247 : vector<8x512xf32>
    %c1_174 = arith.constant 1 : index
    %c0_175 = arith.constant 0 : index
    %c0_176 = arith.constant 0 : index
    %249 = vector.load %arg6[%c1_174, %c0_175, %c0_176] : memref<2x512x32xf32, #tpu.memory_space<vmem>>, vector<1x512x32xf32>
    %250 = vector.shape_cast %249 : vector<1x512x32xf32> to vector<512x32xf32>
    %cst_177 = arith.constant dense<0.000000e+00> : vector<8x32xf32>
    %251 = tpu.matmul %248, %250, %cst_177 {dimension_numbers = #tpu.dot_dimension_numbers<[1], [0], [0], [1], [0, 0, 1, 1], [], []>} : vector<8x512xf32>, vector<512x32xf32>, vector<8x32xf32> -> vector<8x32xf32>
    %252 = arith.addf %236, %251 : vector<8x32xf32>
    %253 = vector.broadcast %241 : vector<1x32xf32> to vector<8x32xf32>
    %254 = arith.addf %252, %253 : vector<8x32xf32>
    %c0_178 = arith.constant 0 : index
    %c0_179 = arith.constant 0 : index
    %255 = vector.load %arg10[%c0_178, %c0_179] : memref<8x32xf32, #tpu.memory_space<vmem>>, vector<8x32xf32>
    tpu.vector_store %arg10[%c0_178, %c0_179], %254 {strides = array<i32>} : memref<8x32xf32, #tpu.memory_space<vmem>>, vector<8x32xf32>,
    %cst_180 = arith.constant 1.250000e-01 : f32
    %256 = vector.broadcast %cst_180 : f32 to vector<1x8xf32>
    %cst_181 = arith.constant dense<0.000000e+00> : vector<1x32xf32>
    %257 = tpu.matmul %256, %254, %cst_181 {dimension_numbers = #tpu.dot_dimension_numbers<[1], [0], [0], [1], [0, 0, 1, 1], [], []>} : vector<1x8xf32>, vector<8x32xf32>, vector<1x32xf32> -> vector<1x32xf32>
    %c0_182 = arith.constant 0 : index
    %c0_183 = arith.constant 0 : index
    %c0_184 = arith.constant 0 : index
    %258 = vector.load %arg8[%c0_182, %c0_183, %c0_184] : memref<3x32x32xf32, #tpu.memory_space<vmem>>, vector<1x32x32xf32>
    %259 = vector.shape_cast %258 : vector<1x32x32xf32> to vector<32x32xf32>
    %cst_185 = arith.constant dense<0.000000e+00> : vector<1x32xf32>
    %260 = tpu.matmul %257, %259, %cst_185 {dimension_numbers = #tpu.dot_dimension_numbers<[1], [0], [0], [1], [0, 0, 1, 1], [], []>} : vector<1x32xf32>, vector<32x32xf32>, vector<1x32xf32> -> vector<1x32xf32>
    %c0_186 = arith.constant 0 : index
    %c0_187 = arith.constant 0 : index
    %c0_188 = arith.constant 0 : index
    %261 = vector.load %arg9[%c0_186, %c0_187, %c0_188] : memref<3x1x32xf32, #tpu.memory_space<vmem>>, vector<1x1x32xf32>
    %262 = vector.shape_cast %261 : vector<1x1x32xf32> to vector<1x32xf32>
    %263 = arith.addf %260, %262 : vector<1x32xf32>
    %cst_189 = arith.constant 0.000000e+00 : f32
    %264 = vector.broadcast %cst_189 : f32 to vector<1x32xf32>
    %265 = arith.maximumf %263, %264 : vector<1x32xf32>
    %c1_190 = arith.constant 1 : index
    %c0_191 = arith.constant 0 : index
    %c0_192 = arith.constant 0 : index
    %266 = vector.load %arg8[%c1_190, %c0_191, %c0_192] : memref<3x32x32xf32, #tpu.memory_space<vmem>>, vector<1x32x32xf32>
    %267 = vector.shape_cast %266 : vector<1x32x32xf32> to vector<32x32xf32>
    %cst_193 = arith.constant dense<0.000000e+00> : vector<1x32xf32>
    %268 = tpu.matmul %265, %267, %cst_193 {dimension_numbers = #tpu.dot_dimension_numbers<[1], [0], [0], [1], [0, 0, 1, 1], [], []>} : vector<1x32xf32>, vector<32x32xf32>, vector<1x32xf32> -> vector<1x32xf32>
    %c1_194 = arith.constant 1 : index
    %c0_195 = arith.constant 0 : index
    %c0_196 = arith.constant 0 : index
    %269 = vector.load %arg9[%c1_194, %c0_195, %c0_196] : memref<3x1x32xf32, #tpu.memory_space<vmem>>, vector<1x1x32xf32>
    %270 = vector.shape_cast %269 : vector<1x1x32xf32> to vector<1x32xf32>
    %271 = arith.addf %268, %270 : vector<1x32xf32>
    %cst_197 = arith.constant 0.000000e+00 : f32
    %272 = vector.broadcast %cst_197 : f32 to vector<1x32xf32>
    %273 = arith.maximumf %271, %272 : vector<1x32xf32>
    %c2_198 = arith.constant 2 : index
    %c0_199 = arith.constant 0 : index
    %c0_200 = arith.constant 0 : index
    %274 = vector.load %arg8[%c2_198, %c0_199, %c0_200] : memref<3x32x32xf32, #tpu.memory_space<vmem>>, vector<1x32x32xf32>
    %275 = vector.shape_cast %274 : vector<1x32x32xf32> to vector<32x32xf32>
    %cst_201 = arith.constant dense<0.000000e+00> : vector<1x32xf32>
    %276 = tpu.matmul %273, %275, %cst_201 {dimension_numbers = #tpu.dot_dimension_numbers<[1], [0], [0], [1], [0, 0, 1, 1], [], []>} : vector<1x32xf32>, vector<32x32xf32>, vector<1x32xf32> -> vector<1x32xf32>
    %c2_202 = arith.constant 2 : index
    %c0_203 = arith.constant 0 : index
    %c0_204 = arith.constant 0 : index
    %277 = vector.load %arg9[%c2_202, %c0_203, %c0_204] : memref<3x1x32xf32, #tpu.memory_space<vmem>>, vector<1x1x32xf32>
    %278 = vector.shape_cast %277 : vector<1x1x32xf32> to vector<1x32xf32>
    %279 = arith.addf %276, %278 : vector<1x32xf32>
    %c0_205 = arith.constant 0 : index
    %c0_206 = arith.constant 0 : index
    %c0_207 = arith.constant 0 : index
    %280 = vector.load %arg11[%c0_205, %c0_206, %c0_207] : memref<1x1x32xf32, #tpu.memory_space<vmem>>, vector<1x1x32xf32>
    %281 = vector.shape_cast %280 : vector<1x1x32xf32> to vector<1x32xf32>
    %282 = vector.shape_cast %279 : vector<1x32xf32> to vector<1x1x32xf32>
    tpu.vector_store %arg11[%c0_205, %c0_206, %c0_207], %282 {strides = array<i32>} : memref<1x1x32xf32, #tpu.memory_space<vmem>>, vector<1x1x32xf32>,
    return
  }
  func.func @transform_0(%arg0: i32) -> (i32, i32) {
    %c0_i32 = arith.constant 0 : i32
    %c0_i32_0 = arith.constant 0 : i32
    return %arg0, %c0_i32 : i32, i32
  }
  func.func @transform_1(%arg0: i32) -> (i32, i32) {
    %c0_i32 = arith.constant 0 : i32
    %c0_i32_0 = arith.constant 0 : i32
    %c0_i32_1 = arith.constant 0 : i32
    return %c0_i32, %c0_i32_0 : i32, i32
  }
  func.func @transform_2(%arg0: i32) -> (i32, i32, i32) {
    %c0_i32 = arith.constant 0 : i32
    %c0_i32_0 = arith.constant 0 : i32
    %c0_i32_1 = arith.constant 0 : i32
    %c0_i32_2 = arith.constant 0 : i32
    return %c0_i32, %c0_i32_0, %c0_i32_1 : i32, i32, i32
  }
  func.func @transform_3(%arg0: i32) -> (i32, i32, i32) {
    %c0_i32 = arith.constant 0 : i32
    %c0_i32_0 = arith.constant 0 : i32
    %c0_i32_1 = arith.constant 0 : i32
    %c0_i32_2 = arith.constant 0 : i32
    return %c0_i32, %c0_i32_0, %c0_i32_1 : i32, i32, i32
  }
  func.func @transform_4(%arg0: i32) -> (i32, i32, i32) {
    %c0_i32 = arith.constant 0 : i32
    %c0_i32_0 = arith.constant 0 : i32
    %c0_i32_1 = arith.constant 0 : i32
    %c0_i32_2 = arith.constant 0 : i32
    return %c0_i32, %c0_i32_0, %c0_i32_1 : i32, i32, i32
  }
  func.func @transform_5(%arg0: i32) -> (i32, i32, i32) {
    %c0_i32 = arith.constant 0 : i32
    %c0_i32_0 = arith.constant 0 : i32
    %c0_i32_1 = arith.constant 0 : i32
    %c0_i32_2 = arith.constant 0 : i32
    return %c0_i32, %c0_i32_0, %c0_i32_1 : i32, i32, i32
  }
  func.func @transform_6(%arg0: i32) -> (i32, i32, i32) {
    %c0_i32 = arith.constant 0 : i32
    %c0_i32_0 = arith.constant 0 : i32
    %c0_i32_1 = arith.constant 0 : i32
    %c0_i32_2 = arith.constant 0 : i32
    return %c0_i32, %c0_i32_0, %c0_i32_1 : i32, i32, i32
  }
  func.func @transform_7(%arg0: i32) -> (i32, i32, i32) {
    %c0_i32 = arith.constant 0 : i32
    %c0_i32_0 = arith.constant 0 : i32
    %c0_i32_1 = arith.constant 0 : i32
    %c0_i32_2 = arith.constant 0 : i32
    return %c0_i32, %c0_i32_0, %c0_i32_1 : i32, i32, i32
  }
  func.func @transform_8(%arg0: i32) -> (i32, i32, i32) {
    %c0_i32 = arith.constant 0 : i32
    %c0_i32_0 = arith.constant 0 : i32
    %c0_i32_1 = arith.constant 0 : i32
    %c0_i32_2 = arith.constant 0 : i32
    return %c0_i32, %c0_i32_0, %c0_i32_1 : i32, i32, i32
  }
  func.func @transform_9(%arg0: i32) -> (i32, i32) {
    %c0_i32 = arith.constant 0 : i32
    %c0_i32_0 = arith.constant 0 : i32
    return %arg0, %c0_i32 : i32, i32
  }
  func.func @transform_10(%arg0: i32) -> (i32, i32, i32) {
    %c0_i32 = arith.constant 0 : i32
    %c0_i32_0 = arith.constant 0 : i32
    %c0_i32_1 = arith.constant 0 : i32
    return %arg0, %c0_i32, %c0_i32_0 : i32, i32, i32
  }
}

</mosaic_0001>

<llo_original>
// kernel: tpu_custom_call.1
$region0: #{tpu_custom_call.1}
  #allocation0 [shape = 'u32[]', space=smem, size = 0x4, offset = 0x4, fixed_abs, tag = 'smem constant byte address 0x4 - core index']
  #allocation1 [shape = 'u32[144,128]{1,0:T(1,128)}', space=vmem, size = 0x12000, scoped, tag = 'internal scratch']
  %s0 = inlined_call_operand.vmem [shape: f32[16,5], index: 0, kind: input, shape index: {}]
  %s1 = inlined_call_operand.vmem [shape: f32[5,32], index: 1, kind: input, shape index: {}]
  %s2 = inlined_call_operand.vmem [shape: f32[24,32,8], index: 2, kind: input, shape index: {}]
  %s3 = inlined_call_operand.vmem [shape: f32[8,8,32], index: 3, kind: input, shape index: {}]
  %s4 = inlined_call_operand.vmem [shape: f32[2,32,512], index: 4, kind: input, shape index: {}]
  %s5 = inlined_call_operand.vmem [shape: f32[2,512,32], index: 5, kind: input, shape index: {}]
  %s6 = inlined_call_operand.vmem [shape: f32[4,1,512], index: 6, kind: input, shape index: {}]
  %s7 = inlined_call_operand.vmem [shape: f32[3,32,32], index: 7, kind: input, shape index: {}]
  %s8 = inlined_call_operand.vmem [shape: f32[3,1,32], index: 8, kind: input, shape index: {}]
  %s9 = inlined_call_operand.hbm [shape: f32[16,32], index: 9, kind: output, shape index: {0}]
  %s10 = inlined_call_operand.hbm [shape: f32[2,1,32], index: 10, kind: output, shape index: {1}]
  %11 = xla_tuple %s9, %s10
  %s12 = sld [smem:[#allocation0]]
  $region77: #{tpu_custom_call.1} parent=0
    _
  %s14 = ssub.s32 1, %s12
  %s15 = scalar_select 0, %s14, %s12
  $region1: #{tpu_custom_call.1} parent=0
    #allocation2 [shape = 'u8[8192]{0}', space=vmem, size = 0x2000, scoped, tag = 'output window, operand 0']
    #allocation3 [shape = 's32[2]{0}', space=sflag, size = 0x8, scoped, tag = 'scoped memory for tpu_custom_call.1']
    #allocation4 [shape = 'u8[1024]{0}', space=vmem, size = 0x400, scoped, tag = 'output window, operand 1']
    #allocation5 [shape = 's32[2]{0}', space=sflag, size = 0x8, scoped, tag = 'scoped memory for tpu_custom_call.1']
    %16 = vsyncpa [#allocation3], 0
    %s17 = scalar_lea.sflag [#allocation3], 1
    %18 = vsyncpa %s17, 0
    %19 = vsyncpa [#allocation5], 0
    %s20 = scalar_lea.sflag [#allocation5], 1
    %21 = vsyncpa %s20, 0
    loop: start=0, step=1, limit=4
    $region2: #{tpu_custom_call.1} parent=1 // loop_pre_header
      _
    $region3: #{tpu_custom_call.1} parent=1 // loop_header
      %s23 = sphi 0, %s27
      %p24 = scmp.ge.s32.totalorder %s23, 4
      %s33 = sphi 0, %s35
      %s36 = sphi 0, %s33
      %s37 = sphi 0, %s36
      %s53 = sphi 0, %s37
      %s57 = sphi 0, %s57
      %s59 = sphi 0, %s57
      %s60 = sphi 0, %s59
      %s74 = sphi 0, %s60
      %s78 = sphi 0, %s78
      %s80 = sphi 0, %s78
      %s81 = sphi 0, %s80
      %s95 = sphi 0, %s81
      %s99 = sphi 0, %s99
      %s101 = sphi 0, %s99
      %s102 = sphi 0, %s101
      %s116 = sphi 0, %s102
      %s120 = sphi 0, %s120
      %s122 = sphi 0, %s120
      %s123 = sphi 0, %s122
      %s137 = sphi 0, %s123
      %s141 = sphi 0, %s141
      %s143 = sphi 0, %s141
      %s144 = sphi 0, %s143
      %s158 = sphi 0, %s144
      %s162 = sphi 0, %s162
      %s164 = sphi 0, %s162
      %s165 = sphi 0, %s164
      %s179 = sphi 0, %s165
      %s183 = sphi 0, %s183
      %s185 = sphi 0, %s183
      %s186 = sphi 0, %s185
      %s200 = sphi 0, %s186
      %s204 = sphi 0, %s204
      %s206 = sphi 0, %s204
      %s207 = sphi 0, %s206
      %s221 = sphi 0, %s207
      %s227 = sphi 0, %s229
      %s230 = sphi 0, %s227
      %s231 = sphi 0, %s230
      %s247 = sphi 0, %s231
      %s253 = sphi 0, %s255
      %s256 = sphi 0, %s253
      %s257 = sphi 0, %s256
      %s273 = sphi 0, %s257
    $region4: #{tpu_custom_call.1} parent=1 // loop_header_branch
      %26 = sbr.rel (%p24) target = $region8
    $region5: #{tpu_custom_call.1} parent=1 // loop_body
      %s28 = ssub.s32 %s23, 1
      %s29 = ssub.s32 %s23, 2
      %s30 = sadd.s32 %s23, 1
      %s31 = ssub.s32 %s23, %s30
      %p32 = scmp.eq.s32.totalorder %s31, 0
      %s34 = sadd.s32 %s33, 1
      %s35 = scalar_select %p32, %s33, %s34
      %p38 = pneg %p32
      %p39 = scmp.eq.s32.totalorder %s23, 1
      %p40 = por %p38, %p39
      %p41 = scmp.ne.s32.totalorder %s33, %s36
      %p42 = scmp.eq.s32.totalorder %s23, 0
      %p43 = por %p41, %p42
      %p44 = scmp.ne.s32.totalorder %s33, %s36
      %p45 = scmp.eq.s32.totalorder %s28, 1
      %p46 = por %p44, %p45
      %p47 = scmp.ne.s32.totalorder %s36, %s37
      %p48 = scmp.eq.s32.totalorder %s28, 0
      %p49 = por %p47, %p48
      %p50 = scmp.ne.s32.totalorder %s36, %s37
      %p51 = scmp.eq.s32.totalorder %s29, 1
      %p52 = por %p50, %p51
      %p54 = scmp.ne.s32.totalorder %s37, %s53
      %p55 = scmp.eq.s32.totalorder %s29, 0
      %p56 = por %p54, %p55
      %s58 = sadd.s32 %s57, 1
      %p61 = scmp.eq.s32.totalorder %s23, 1
      %p62 = scmp.ne.s32.totalorder %s57, %s59
      %p63 = scmp.eq.s32.totalorder %s23, 0
      %p64 = por %p62, %p63
      %p65 = scmp.ne.s32.totalorder %s57, %s59
      %p66 = scmp.eq.s32.totalorder %s28, 1
      %p67 = por %p65, %p66
      %p68 = scmp.ne.s32.totalorder %s59, %s60
      %p69 = scmp.eq.s32.totalorder %s28, 0
      %p70 = por %p68, %p69
      %p71 = scmp.ne.s32.totalorder %s59, %s60
      %p72 = scmp.eq.s32.totalorder %s29, 1
      %p73 = por %p71, %p72
      %p75 = scmp.ne.s32.totalorder %s60, %s74
      %p76 = scmp.eq.s32.totalorder %s29, 0
      %p77 = por %p75, %p76
      %s79 = sadd.s32 %s78, 1
      %p82 = scmp.eq.s32.totalorder %s23, 1
      %p83 = scmp.ne.s32.totalorder %s78, %s80
      %p84 = scmp.eq.s32.totalorder %s23, 0
      %p85 = por %p83, %p84
      %p86 = scmp.ne.s32.totalorder %s78, %s80
      %p87 = scmp.eq.s32.totalorder %s28, 1
      %p88 = por %p86, %p87
      %p89 = scmp.ne.s32.totalorder %s80, %s81
      %p90 = scmp.eq.s32.totalorder %s28, 0
      %p91 = por %p89, %p90
      %p92 = scmp.ne.s32.totalorder %s80, %s81
      %p93 = scmp.eq.s32.totalorder %s29, 1
      %p94 = por %p92, %p93
      %p96 = scmp.ne.s32.totalorder %s81, %s95
      %p97 = scmp.eq.s32.totalorder %s29, 0
      %p98 = por %p96, %p97
      %s100 = sadd.s32 %s99, 1
      %p103 = scmp.eq.s32.totalorder %s23, 1
      %p104 = scmp.ne.s32.totalorder %s99, %s101
      %p105 = scmp.eq.s32.totalorder %s23, 0
      %p106 = por %p104, %p105
      %p107 = scmp.ne.s32.totalorder %s99, %s101
      %p108 = scmp.eq.s32.totalorder %s28, 1
      %p109 = por %p107, %p108
      %p110 = scmp.ne.s32.totalorder %s101, %s102
      %p111 = scmp.eq.s32.totalorder %s28, 0
      %p112 = por %p110, %p111
      %p113 = scmp.ne.s32.totalorder %s101, %s102
      %p114 = scmp.eq.s32.totalorder %s29, 1
      %p115 = por %p113, %p114
      %p117 = scmp.ne.s32.totalorder %s102, %s116
      %p118 = scmp.eq.s32.totalorder %s29, 0
      %p119 = por %p117, %p118
      %s121 = sadd.s32 %s120, 1
      %p124 = scmp.eq.s32.totalorder %s23, 1
      %p125 = scmp.ne.s32.totalorder %s120, %s122
      %p126 = scmp.eq.s32.totalorder %s23, 0
      %p127 = por %p125, %p126
      %p128 = scmp.ne.s32.totalorder %s120, %s122
      %p129 = scmp.eq.s32.totalorder %s28, 1
      %p130 = por %p128, %p129
      %p131 = scmp.ne.s32.totalorder %s122, %s123
      %p132 = scmp.eq.s32.totalorder %s28, 0
      %p133 = por %p131, %p132
      %p134 = scmp.ne.s32.totalorder %s122, %s123
      %p135 = scmp.eq.s32.totalorder %s29, 1
      %p136 = por %p134, %p135
      %p138 = scmp.ne.s32.totalorder %s123, %s137
      %p139 = scmp.eq.s32.totalorder %s29, 0
      %p140 = por %p138, %p139
      %s142 = sadd.s32 %s141, 1
      %p145 = scmp.eq.s32.totalorder %s23, 1
      %p146 = scmp.ne.s32.totalorder %s141, %s143
      %p147 = scmp.eq.s32.totalorder %s23, 0
      %p148 = por %p146, %p147
      %p149 = scmp.ne.s32.totalorder %s141, %s143
      %p150 = scmp.eq.s32.totalorder %s28, 1
      %p151 = por %p149, %p150
      %p152 = scmp.ne.s32.totalorder %s143, %s144
      %p153 = scmp.eq.s32.totalorder %s28, 0
      %p154 = por %p152, %p153
      %p155 = scmp.ne.s32.totalorder %s143, %s144
      %p156 = scmp.eq.s32.totalorder %s29, 1
      %p157 = por %p155, %p156
      %p159 = scmp.ne.s32.totalorder %s144, %s158
      %p160 = scmp.eq.s32.totalorder %s29, 0
      %p161 = por %p159, %p160
      %s163 = sadd.s32 %s162, 1
      %p166 = scmp.eq.s32.totalorder %s23, 1
      %p167 = scmp.ne.s32.totalorder %s162, %s164
      %p168 = scmp.eq.s32.totalorder %s23, 0
      %p169 = por %p167, %p168
      %p170 = scmp.ne.s32.totalorder %s162, %s164
      %p171 = scmp.eq.s32.totalorder %s28, 1
      %p172 = por %p170, %p171
      %p173 = scmp.ne.s32.totalorder %s164, %s165
      %p174 = scmp.eq.s32.totalorder %s28, 0
      %p175 = por %p173, %p174
      %p176 = scmp.ne.s32.totalorder %s164, %s165
      %p177 = scmp.eq.s32.totalorder %s29, 1
      %p178 = por %p176, %p177
      %p180 = scmp.ne.s32.totalorder %s165, %s179
      %p181 = scmp.eq.s32.totalorder %s29, 0
      %p182 = por %p180, %p181
      %s184 = sadd.s32 %s183, 1
      %p187 = scmp.eq.s32.totalorder %s23, 1
      %p188 = scmp.ne.s32.totalorder %s183, %s185
      %p189 = scmp.eq.s32.totalorder %s23, 0
      %p190 = por %p188, %p189
      %p191 = scmp.ne.s32.totalorder %s183, %s185
      %p192 = scmp.eq.s32.totalorder %s28, 1
      %p193 = por %p191, %p192
      %p194 = scmp.ne.s32.totalorder %s185, %s186
      %p195 = scmp.eq.s32.totalorder %s28, 0
      %p196 = por %p194, %p195
      %p197 = scmp.ne.s32.totalorder %s185, %s186
      %p198 = scmp.eq.s32.totalorder %s29, 1
      %p199 = por %p197, %p198
      %p201 = scmp.ne.s32.totalorder %s186, %s200
      %p202 = scmp.eq.s32.totalorder %s29, 0
      %p203 = por %p201, %p202
      %s205 = sadd.s32 %s204, 1
      %p208 = scmp.eq.s32.totalorder %s23, 1
      %p209 = scmp.ne.s32.totalorder %s204, %s206
      %p210 = scmp.eq.s32.totalorder %s23, 0
      %p211 = por %p209, %p210
      %p212 = scmp.ne.s32.totalorder %s204, %s206
      %p213 = scmp.eq.s32.totalorder %s28, 1
      %p214 = por %p212, %p213
      %p215 = scmp.ne.s32.totalorder %s206, %s207
      %p216 = scmp.eq.s32.totalorder %s28, 0
      %p217 = por %p215, %p216
      %p218 = scmp.ne.s32.totalorder %s206, %s207
      %p219 = scmp.eq.s32.totalorder %s29, 1
      %p220 = por %p218, %p219
      %p222 = scmp.ne.s32.totalorder %s207, %s221
      %p223 = scmp.eq.s32.totalorder %s29, 0
      %p224 = por %p222, %p223
      %s225 = ssub.s32 %s23, %s30
      %p226 = scmp.eq.s32.totalorder %s225, 0
      %s228 = sadd.s32 %s227, 1
      %s229 = scalar_select %p226, %s227, %s228
      %p232 = pneg %p226
      %p233 = scmp.eq.s32.totalorder %s23, 1
      %p234 = por %p232, %p233
      %p235 = scmp.ne.s32.totalorder %s227, %s230
      %p236 = scmp.eq.s32.totalorder %s23, 0
      %p237 = por %p235, %p236
      %p238 = scmp.ne.s32.totalorder %s227, %s230
      %p239 = scmp.eq.s32.totalorder %s28, 1
      %p240 = por %p238, %p239
      %p241 = scmp.ne.s32.totalorder %s230, %s231
      %p242 = scmp.eq.s32.totalorder %s28, 0
      %p243 = por %p241, %p242
      %p244 = scmp.ne.s32.totalorder %s230, %s231
      %p245 = scmp.eq.s32.totalorder %s29, 1
      %p246 = por %p244, %p245
      %p248 = scmp.ne.s32.totalorder %s231, %s247
      %p249 = scmp.eq.s32.totalorder %s29, 0
      %p250 = por %p248, %p249
      %s251 = ssub.s32 %s23, %s30
      %p252 = scmp.eq.s32.totalorder %s251, 0
      %s254 = sadd.s32 %s253, 1
      %s255 = scalar_select %p252, %s253, %s254
      %p258 = pneg %p252
      %p259 = scmp.eq.s32.totalorder %s23, 1
      %p260 = por %p258, %p259
      %p261 = scmp.ne.s32.totalorder %s253, %s256
      %p262 = scmp.eq.s32.totalorder %s23, 0
      %p263 = por %p261, %p262
      %p264 = scmp.ne.s32.totalorder %s253, %s256
      %p265 = scmp.eq.s32.totalorder %s28, 1
      %p266 = por %p264, %p265
      %p267 = scmp.ne.s32.totalorder %s256, %s257
      %p268 = scmp.eq.s32.totalorder %s28, 0
      %p269 = por %p267, %p268
      %p270 = scmp.ne.s32.totalorder %s256, %s257
      %p271 = scmp.eq.s32.totalorder %s29, 1
      %p272 = por %p270, %p271
      %p274 = scmp.ne.s32.totalorder %s257, %s273
      %p275 = scmp.eq.s32.totalorder %s29, 0
      %p276 = por %p274, %p275
      %p277 = scmp.le.s32.totalorder 1, %s23
      %p278 = scmp.lt.s32.totalorder %s23, 3
      %p279 = pnand %p277, %p278
      %p280 = pneg %p279
      // Predicated region
      $region9: #{tpu_custom_call.1} parent=5 // pred_check
        _
      $region10: #{tpu_custom_call.1} parent=5 // pred_check_branch
        %282 = sbr.rel (%p279) target = $region12
      $region11: #{tpu_custom_call.1} parent=5 // pred_region
        %s283 = ssub.s32 %s23, 1
        // Predicated region
        $region13: #{tpu_custom_call.1} parent=11 // pred_check
          %p284 = pneg %p70
        $region14: #{tpu_custom_call.1} parent=11 // pred_check_branch
          %286 = sbr.rel (%p284) target = $region16
        $region15: #{tpu_custom_call.1} parent=11 // pred_region
          _
        $region16: #{tpu_custom_call.1} parent=11 // pred_fallthru
          _
        // Predicated region
        $region17: #{tpu_custom_call.1} parent=11 // pred_check
          %p287 = pneg %p91
        $region18: #{tpu_custom_call.1} parent=11 // pred_check_branch
          %289 = sbr.rel (%p287) target = $region20
        $region19: #{tpu_custom_call.1} parent=11 // pred_region
          _
        $region20: #{tpu_custom_call.1} parent=11 // pred_fallthru
          _
        // Predicated region
        $region21: #{tpu_custom_call.1} parent=11 // pred_check
          %p290 = pneg %p112
        $region22: #{tpu_custom_call.1} parent=11 // pred_check_branch
          %292 = sbr.rel (%p290) target = $region24
        $region23: #{tpu_custom_call.1} parent=11 // pred_region
          _
        $region24: #{tpu_custom_call.1} parent=11 // pred_fallthru
          _
        // Predicated region
        $region25: #{tpu_custom_call.1} parent=11 // pred_check
          %p293 = pneg %p133
        $region26: #{tpu_custom_call.1} parent=11 // pred_check_branch
          %295 = sbr.rel (%p293) target = $region28
        $region27: #{tpu_custom_call.1} parent=11 // pred_region
          _
        $region28: #{tpu_custom_call.1} parent=11 // pred_fallthru
          _
        // Predicated region
        $region29: #{tpu_custom_call.1} parent=11 // pred_check
          %p296 = pneg %p154
        $region30: #{tpu_custom_call.1} parent=11 // pred_check_branch
          %298 = sbr.rel (%p296) target = $region32
        $region31: #{tpu_custom_call.1} parent=11 // pred_region
          _
        $region32: #{tpu_custom_call.1} parent=11 // pred_fallthru
          _
        // Predicated region
        $region33: #{tpu_custom_call.1} parent=11 // pred_check
          %p299 = pneg %p175
        $region34: #{tpu_custom_call.1} parent=11 // pred_check_branch
          %301 = sbr.rel (%p299) target = $region36
        $region35: #{tpu_custom_call.1} parent=11 // pred_region
          _
        $region36: #{tpu_custom_call.1} parent=11 // pred_fallthru
          _
        // Predicated region
        $region37: #{tpu_custom_call.1} parent=11 // pred_check
          %p302 = pneg %p196
        $region38: #{tpu_custom_call.1} parent=11 // pred_check_branch
          %304 = sbr.rel (%p302) target = $region40
        $region39: #{tpu_custom_call.1} parent=11 // pred_region
          _
        $region40: #{tpu_custom_call.1} parent=11 // pred_fallthru
          _
        // Predicated region
        $region41: #{tpu_custom_call.1} parent=11 // pred_check
          %p305 = pneg %p217
        $region42: #{tpu_custom_call.1} parent=11 // pred_check_branch
          %307 = sbr.rel (%p305) target = $region44
        $region43: #{tpu_custom_call.1} parent=11 // pred_region
          _
        $region44: #{tpu_custom_call.1} parent=11 // pred_fallthru
          _
      $region12: #{tpu_custom_call.1} parent=5 // pred_fallthru
        _
      %p308 = scmp.lt.s32.totalorder %s23, 2
      // Predicated region
      $region45: #{tpu_custom_call.1} parent=5 // pred_check
        %p309 = pneg %p308
      $region46: #{tpu_custom_call.1} parent=5 // pred_check_branch
        %311 = sbr.rel (%p309) target = $region48
      $region47: #{tpu_custom_call.1} parent=5 // pred_region
        // Predicated region
        $region49: #{tpu_custom_call.1} parent=47 // pred_check
          %p312 = pneg %p43
        $region50: #{tpu_custom_call.1} parent=47 // pred_check_branch
          %314 = sbr.rel (%p312) target = $region52
        $region51: #{tpu_custom_call.1} parent=47 // pred_region
          %p315 = scmp.lt.s32.totalorder %s23, 1
          %s316 = scalar_select %p315, %s23, 1
          %s317 = smul.addr %s316, 8
          %s318 = scalar_lea.vmem %s0, %s317
        $region52: #{tpu_custom_call.1} parent=47 // pred_fallthru
          _
      $region48: #{tpu_custom_call.1} parent=5 // pred_fallthru
        _
      %p319 = scmp.le.s32.totalorder 1, %s23
      %p320 = scmp.lt.s32.totalorder %s23, 3
      %p321 = pnand %p319, %p320
      %p322 = pneg %p321
      // Predicated region
      $region53: #{tpu_custom_call.1} parent=5 // pred_check
        _
      $region54: #{tpu_custom_call.1} parent=5 // pred_check_branch
        %324 = sbr.rel (%p321) target = $region56
      $region55: #{tpu_custom_call.1} parent=5 // pred_region
        %s325 = ssub.s32 %s23, 1
        %p326 = scmp.lt.s32.totalorder %s28, 1
        %s327 = scalar_select %p326, %s28, 1
        %s328 = smul.addr %s327, 8
        %s329 = scalar_lea.vmem %s0, %s328
        %p330 = pneg %p49
        %p331 = pneg %p46
        %p332 = pneg %p70
        %p333 = pneg %p67
        %p334 = pneg %p91
        %p335 = pneg %p88
        %p336 = pneg %p112
        %p337 = pneg %p109
        %p338 = pneg %p133
        %p339 = pneg %p130
        %p340 = pneg %p154
        %p341 = pneg %p151
        %p342 = pneg %p175
        %p343 = pneg %p172
        %p344 = pneg %p196
        %p345 = pneg %p193
        %p346 = pneg %p217
        %p347 = pneg %p214
        %p348 = pneg %p243
        %p349 = pneg %p240
        %s350 = sand.u32 %s230, 1
        %s351 = scalar_lea.sflag [#allocation3], %s350
        %s352 = sand.u32 %s230, 1
        %s353 = smul.addr %s352, 8
        %s354 = scalar_lea.vmem [#allocation2], %s353
        %p355 = pneg %p269
        %p356 = pneg %p266
        %s357 = sand.u32 %s256, 1
        %s358 = scalar_lea.sflag [#allocation5], %s357
        %s359 = sand.u32 %s256, 1
        %s360 = scalar_lea.vmem [#allocation4], %s359
        %p361 = scmp.lt.s32.totalorder %s28, 1
        %s362 = scalar_select %p361, %s28, 1
        %s363 = smul.addr %s362, 8
        %s364 = scalar_lea.vmem %s0, %s363
        %v365 = vld [vmem:[%s364] sm:$0xff]
        %v366 = vld [vmem:[%s1] sm:$0x1f]
        %vm367 = vcmask 39936
        %v369 = vsel %vm367, %v365, 0
        %vm371 = vcmask 1044480
        %v373 = vsel %vm371, %v366, 0
        %375 = vmatprep.subr.mxu0 0.0
        %376 = vmatpush1.msra.mxu0 0.0
        %377 = vmatprep.subr.mxu0 0.0
        %378 = vmatpush1.msra.mxu0 0.0
        %379 = vmatprep.subr.mxu0 0.0
        %380 = vmatpush1.msra.mxu0 0.0
        %381 = vmatprep.subr.mxu0 0.0
        %382 = vmatpush1.msra.mxu0 0.0
        %383 = vmatprep.subr.mxu0 0.0
        %384 = vmatpush1.msra.mxu0 0.0
        %385 = vmatprep.subr.mxu0 0.0
        %386 = vmatpush1.msra.mxu0 0.0
        %387 = vmatprep.subr.mxu0 0.0
        %388 = vmatpush1.msra.mxu0 0.0
        %389 = vmatprep.subr.mxu0 0.0
        %390 = vmatpush1.msra.mxu0 0.0
        %391 = vmatprep.subr.mxu0 0.0
        %392 = vmatpush1.msra.mxu0 0.0
        %393 = vmatprep.subr.mxu0 0.0
        %394 = vmatpush1.msra.mxu0 0.0
        %395 = vmatprep.subr.mxu0 0.0
        %396 = vmatpush1.msra.mxu0 0.0
        %397 = vmatprep.subr.mxu0 0.0
        %398 = vmatpush1.msra.mxu0 0.0
        %399 = vmatprep.subr.mxu0 0.0
        %400 = vmatpush1.msra.mxu0 0.0
        %401 = vmatprep.subr.mxu0 0.0
        %402 = vmatpush1.msra.mxu0 0.0
        %403 = vmatprep.subr.mxu0 0.0
        %404 = vmatpush1.msra.mxu0 0.0
        %405 = vmatprep.subr.mxu0 0.0
        %406 = vmatpush1.msra.mxu0 %v373
        %407 = vmatprep.subr.mxu0 0.0
        %408 = vmatpush2.msra.mxu0 0.0
        %409 = vmatprep.subr.mxu0 0.0
        %410 = vmatpush2.msra.mxu0 0.0
        %411 = vmatprep.subr.mxu0 0.0
        %412 = vmatpush2.msra.mxu0 0.0
        %413 = vmatprep.subr.mxu0 0.0
        %414 = vmatpush2.msra.mxu0 0.0
        %415 = vmatprep.subr.mxu0 0.0
        %416 = vmatpush2.msra.mxu0 0.0
        %417 = vmatprep.subr.mxu0 0.0
        %418 = vmatpush2.msra.mxu0 0.0
        %419 = vmatprep.subr.mxu0 0.0
        %420 = vmatpush2.msra.mxu0 0.0
        %421 = vmatprep.subr.mxu0 0.0
        %422 = vmatpush2.msra.mxu0 0.0
        %423 = vmatprep.subr.mxu0 0.0
        %424 = vmatpush2.msra.mxu0 0.0
        %425 = vmatprep.subr.mxu0 0.0
        %426 = vmatpush2.msra.mxu0 0.0
        %427 = vmatprep.subr.mxu0 0.0
        %428 = vmatpush2.msra.mxu0 0.0
        %429 = vmatprep.subr.mxu0 0.0
        %430 = vmatpush2.msra.mxu0 0.0
        %431 = vmatprep.subr.mxu0 0.0
        %432 = vmatpush2.msra.mxu0 0.0
        %433 = vmatprep.subr.mxu0 0.0
        %434 = vmatpush2.msra.mxu0 0.0
        %435 = vmatprep.subr.mxu0 0.0
        %436 = vmatpush2.msra.mxu0 0.0
        %437 = vmatprep.subr.mxu0 0.0
        %438 = vmatpush2.msra.mxu0 0.0
        %439 = vmatprep.mubr.f32.mxu0 0.0
        %440 = vmatmul.mubr.f32.gmra.mxu0 %v369
        %v441 = vpop.f32.mrf.mxu0
        %v442 = vadd.f32 0.0, %v441
        %v443 = vpop.f32.mrf.mxu0
        %444 = vdwg.mxu0
        %v445 = vld [vmem:[%s2] sm:$0xff]
        %v446 = vld [vmem:[%s2 + $0x8] sm:$0xff]
        %v447 = vld [vmem:[%s2 + $0x10] sm:$0xff]
        %v448 = vld [vmem:[%s2 + $0x18] sm:$0xff]
        %s449 = scalar_lea.vmem %s2, 128
        %v450 = vld [vmem:[%s449] sm:$0xff]
        %v451 = vld [vmem:[%s449 + $0x8] sm:$0xff]
        %v452 = vld [vmem:[%s449 + $0x10] sm:$0xff]
        %v453 = vld [vmem:[%s449 + $0x18] sm:$0xff]
        %s454 = scalar_lea.vmem %s2, 256
        %v455 = vld [vmem:[%s454] sm:$0xff]
        %v456 = vld [vmem:[%s454 + $0x8] sm:$0xff]
        %v457 = vld [vmem:[%s454 + $0x10] sm:$0xff]
        %v458 = vld [vmem:[%s454 + $0x18] sm:$0xff]
        %vm459 = vcmask 261120
        %v461 = vsel %vm459, %v442, 0
        %463 = vmatprep.subr.mxu0 0.0
        %464 = vmatpush1.msra.mxu0 0.0
        %465 = vmatprep.subr.mxu0 0.0
        %466 = vmatpush1.msra.mxu0 0.0
        %467 = vmatprep.subr.mxu0 0.0
        %468 = vmatpush1.msra.mxu0 0.0
        %469 = vmatprep.subr.mxu0 0.0
        %470 = vmatpush1.msra.mxu0 0.0
        %471 = vmatprep.subr.mxu0 0.0
        %472 = vmatpush1.msra.mxu0 0.0
        %473 = vmatprep.subr.mxu0 0.0
        %474 = vmatpush1.msra.mxu0 0.0
        %475 = vmatprep.subr.mxu0 0.0
        %476 = vmatpush1.msra.mxu0 0.0
        %477 = vmatprep.subr.mxu0 0.0
        %478 = vmatpush1.msra.mxu0 0.0
        %479 = vmatprep.subr.mxu0 0.0
        %480 = vmatpush1.msra.mxu0 0.0
        %481 = vmatprep.subr.mxu0 0.0
        %482 = vmatpush1.msra.mxu0 0.0
        %483 = vmatprep.subr.mxu0 0.0
        %484 = vmatpush1.msra.mxu0 0.0
        %485 = vmatprep.subr.mxu0 0.0
        %486 = vmatpush1.msra.mxu0 0.0
        %487 = vmatprep.subr.mxu0 0.0
        %488 = vmatpush1.msra.mxu0 %v448
        %489 = vmatprep.subr.mxu0 0.0
        %490 = vmatpush1.msra.mxu0 %v447
        %491 = vmatprep.subr.mxu0 0.0
        %492 = vmatpush1.msra.mxu0 %v446
        %493 = vmatprep.subr.mxu0 0.0
        %494 = vmatpush1.msra.mxu0 %v445
        %495 = vmatprep.subr.mxu0 0.0
        %496 = vmatpush2.msra.mxu0 0.0
        %497 = vmatprep.subr.mxu0 0.0
        %498 = vmatpush2.msra.mxu0 0.0
        %499 = vmatprep.subr.mxu0 0.0
        %500 = vmatpush2.msra.mxu0 0.0
        %501 = vmatprep.subr.mxu0 0.0
        %502 = vmatpush2.msra.mxu0 0.0
        %503 = vmatprep.subr.mxu0 0.0
        %504 = vmatpush2.msra.mxu0 0.0
        %505 = vmatprep.subr.mxu0 0.0
        %506 = vmatpush2.msra.mxu0 0.0
        %507 = vmatprep.subr.mxu0 0.0
        %508 = vmatpush2.msra.mxu0 0.0
        %509 = vmatprep.subr.mxu0 0.0
        %510 = vmatpush2.msra.mxu0 0.0
        %511 = vmatprep.subr.mxu0 0.0
        %512 = vmatpush2.msra.mxu0 0.0
        %513 = vmatprep.subr.mxu0 0.0
        %514 = vmatpush2.msra.mxu0 0.0
        %515 = vmatprep.subr.mxu0 0.0
        %516 = vmatpush2.msra.mxu0 0.0
        %517 = vmatprep.subr.mxu0 0.0
        %518 = vmatpush2.msra.mxu0 0.0
        %519 = vmatprep.subr.mxu0 0.0
        %520 = vmatpush2.msra.mxu0 0.0
        %521 = vmatprep.subr.mxu0 0.0
        %522 = vmatpush2.msra.mxu0 0.0
        %523 = vmatprep.subr.mxu0 0.0
        %524 = vmatpush2.msra.mxu0 0.0
        %525 = vmatprep.subr.mxu0 0.0
        %526 = vmatpush2.msra.mxu0 0.0
        %527 = vmatprep.mubr.f32.mxu0 0.0
        %528 = vmatmul.mubr.f32.gmra.mxu0 %v461
        %v529 = vpop.f32.mrf.mxu0
        %v530 = vadd.f32 0.0, %v529
        %v531 = vpop.f32.mrf.mxu0
        %532 = vdwg.mxu0
        %533 = vmatprep.subr.mxu0 0.0
        %534 = vmatpush1.msra.mxu0 0.0
        %535 = vmatprep.subr.mxu0 0.0
        %536 = vmatpush1.msra.mxu0 0.0
        %537 = vmatprep.subr.mxu0 0.0
        %538 = vmatpush1.msra.mxu0 0.0
        %539 = vmatprep.subr.mxu0 0.0
        %540 = vmatpush1.msra.mxu0 0.0
        %541 = vmatprep.subr.mxu0 0.0
        %542 = vmatpush1.msra.mxu0 0.0
        %543 = vmatprep.subr.mxu0 0.0
        %544 = vmatpush1.msra.mxu0 0.0
        %545 = vmatprep.subr.mxu0 0.0
        %546 = vmatpush1.msra.mxu0 0.0
        %547 = vmatprep.subr.mxu0 0.0
        %548 = vmatpush1.msra.mxu0 0.0
        %549 = vmatprep.subr.mxu0 0.0
        %550 = vmatpush1.msra.mxu0 0.0
        %551 = vmatprep.subr.mxu0 0.0
        %552 = vmatpush1.msra.mxu0 0.0
        %553 = vmatprep.subr.mxu0 0.0
        %554 = vmatpush1.msra.mxu0 0.0
        %555 = vmatprep.subr.mxu0 0.0
        %556 = vmatpush1.msra.mxu0 0.0
        %557 = vmatprep.subr.mxu0 0.0
        %558 = vmatpush1.msra.mxu0 %v453
        %559 = vmatprep.subr.mxu0 0.0
        %560 = vmatpush1.msra.mxu0 %v452
        %561 = vmatprep.subr.mxu0 0.0
        %562 = vmatpush1.msra.mxu0 %v451
        %563 = vmatprep.subr.mxu0 0.0
        %564 = vmatpush1.msra.mxu0 %v450
        %565 = vmatprep.subr.mxu0 0.0
        %566 = vmatpush2.msra.mxu0 0.0
        %567 = vmatprep.subr.mxu0 0.0
        %568 = vmatpush2.msra.mxu0 0.0
        %569 = vmatprep.subr.mxu0 0.0
        %570 = vmatpush2.msra.mxu0 0.0
        %571 = vmatprep.subr.mxu0 0.0
        %572 = vmatpush2.msra.mxu0 0.0
        %573 = vmatprep.subr.mxu0 0.0
        %574 = vmatpush2.msra.mxu0 0.0
        %575 = vmatprep.subr.mxu0 0.0
        %576 = vmatpush2.msra.mxu0 0.0
        %577 = vmatprep.subr.mxu0 0.0
        %578 = vmatpush2.msra.mxu0 0.0
        %579 = vmatprep.subr.mxu0 0.0
        %580 = vmatpush2.msra.mxu0 0.0
        %581 = vmatprep.subr.mxu0 0.0
        %582 = vmatpush2.msra.mxu0 0.0
        %583 = vmatprep.subr.mxu0 0.0
        %584 = vmatpush2.msra.mxu0 0.0
        %585 = vmatprep.subr.mxu0 0.0
        %586 = vmatpush2.msra.mxu0 0.0
        %587 = vmatprep.subr.mxu0 0.0
        %588 = vmatpush2.msra.mxu0 0.0
        %589 = vmatprep.subr.mxu0 0.0
        %590 = vmatpush2.msra.mxu0 0.0
        %591 = vmatprep.subr.mxu0 0.0
        %592 = vmatpush2.msra.mxu0 0.0
        %593 = vmatprep.subr.mxu0 0.0
        %594 = vmatpush2.msra.mxu0 0.0
        %595 = vmatprep.subr.mxu0 0.0
        %596 = vmatpush2.msra.mxu0 0.0
        %597 = vmatprep.mubr.f32.mxu0 0.0
        %598 = vmatmul.mubr.f32.gmra.mxu0 %v461
        %v599 = vpop.f32.mrf.mxu0
        %v600 = vadd.f32 0.0, %v599
        %v601 = vpop.f32.mrf.mxu0
        %602 = vdwg.mxu0
        %603 = vmatprep.subr.mxu0 0.0
        %604 = vmatpush1.msra.mxu0 0.0
        %605 = vmatprep.subr.mxu0 0.0
        %606 = vmatpush1.msra.mxu0 0.0
        %607 = vmatprep.subr.mxu0 0.0
        %608 = vmatpush1.msra.mxu0 0.0
        %609 = vmatprep.subr.mxu0 0.0
        %610 = vmatpush1.msra.mxu0 0.0
        %611 = vmatprep.subr.mxu0 0.0
        %612 = vmatpush1.msra.mxu0 0.0
        %613 = vmatprep.subr.mxu0 0.0
        %614 = vmatpush1.msra.mxu0 0.0
        %615 = vmatprep.subr.mxu0 0.0
        %616 = vmatpush1.msra.mxu0 0.0
        %617 = vmatprep.subr.mxu0 0.0
        %618 = vmatpush1.msra.mxu0 0.0
        %619 = vmatprep.subr.mxu0 0.0
        %620 = vmatpush1.msra.mxu0 0.0
        %621 = vmatprep.subr.mxu0 0.0
        %622 = vmatpush1.msra.mxu0 0.0
        %623 = vmatprep.subr.mxu0 0.0
        %624 = vmatpush1.msra.mxu0 0.0
        %625 = vmatprep.subr.mxu0 0.0
        %626 = vmatpush1.msra.mxu0 0.0
        %627 = vmatprep.subr.mxu0 0.0
        %628 = vmatpush1.msra.mxu0 %v458
        %629 = vmatprep.subr.mxu0 0.0
        %630 = vmatpush1.msra.mxu0 %v457
        %631 = vmatprep.subr.mxu0 0.0
        %632 = vmatpush1.msra.mxu0 %v456
        %633 = vmatprep.subr.mxu0 0.0
        %634 = vmatpush1.msra.mxu0 %v455
        %635 = vmatprep.subr.mxu0 0.0
        %636 = vmatpush2.msra.mxu0 0.0
        %637 = vmatprep.subr.mxu0 0.0
        %638 = vmatpush2.msra.mxu0 0.0
        %639 = vmatprep.subr.mxu0 0.0
        %640 = vmatpush2.msra.mxu0 0.0
        %641 = vmatprep.subr.mxu0 0.0
        %642 = vmatpush2.msra.mxu0 0.0
        %643 = vmatprep.subr.mxu0 0.0
        %644 = vmatpush2.msra.mxu0 0.0
        %645 = vmatprep.subr.mxu0 0.0
        %646 = vmatpush2.msra.mxu0 0.0
        %647 = vmatprep.subr.mxu0 0.0
        %648 = vmatpush2.msra.mxu0 0.0
        %649 = vmatprep.subr.mxu0 0.0
        %650 = vmatpush2.msra.mxu0 0.0
        %651 = vmatprep.subr.mxu0 0.0
        %652 = vmatpush2.msra.mxu0 0.0
        %653 = vmatprep.subr.mxu0 0.0
        %654 = vmatpush2.msra.mxu0 0.0
        %655 = vmatprep.subr.mxu0 0.0
        %656 = vmatpush2.msra.mxu0 0.0
        %657 = vmatprep.subr.mxu0 0.0
        %658 = vmatpush2.msra.mxu0 0.0
        %659 = vmatprep.subr.mxu0 0.0
        %660 = vmatpush2.msra.mxu0 0.0
        %661 = vmatprep.subr.mxu0 0.0
        %662 = vmatpush2.msra.mxu0 0.0
        %663 = vmatprep.subr.mxu0 0.0
        %664 = vmatpush2.msra.mxu0 0.0
        %665 = vmatprep.subr.mxu0 0.0
        %666 = vmatpush2.msra.mxu0 0.0
        %667 = vmatprep.mubr.f32.mxu0 0.0
        %668 = vmatmul.mubr.f32.gmra.mxu0 %v461
        %v669 = vpop.f32.mrf.mxu0
        %v670 = vadd.f32 0.0, %v669
        %v671 = vpop.f32.mrf.mxu0
        %672 = vdwg.mxu0
        %vm673 = vcmask 64512
        %v675 = vsel %vm673, %v530, 0
        %v678 = vsel %vm673, %v600, 0
        %680 = vmatprep.subr.mxu0 0.0
        %681 = vmatpush1.xpose.msra.mxu0 0.0
        %682 = vmatprep.subr.mxu0 0.0
        %683 = vmatpush1.xpose.msra.mxu0 0.0
        %684 = vmatprep.subr.mxu0 0.0
        %685 = vmatpush1.xpose.msra.mxu0 0.0
        %686 = vmatprep.subr.mxu0 0.0
        %687 = vmatpush1.xpose.msra.mxu0 0.0
        %688 = vmatprep.subr.mxu0 0.0
        %689 = vmatpush1.xpose.msra.mxu0 0.0
        %690 = vmatprep.subr.mxu0 0.0
        %691 = vmatpush1.xpose.msra.mxu0 0.0
        %692 = vmatprep.subr.mxu0 0.0
        %693 = vmatpush1.xpose.msra.mxu0 0.0
        %694 = vmatprep.subr.mxu0 0.0
        %695 = vmatpush1.xpose.msra.mxu0 0.0
        %696 = vmatprep.subr.mxu0 0.0
        %697 = vmatpush1.xpose.msra.mxu0 0.0
        %698 = vmatprep.subr.mxu0 0.0
        %699 = vmatpush1.xpose.msra.mxu0 0.0
        %700 = vmatprep.subr.mxu0 0.0
        %701 = vmatpush1.xpose.msra.mxu0 0.0
        %702 = vmatprep.subr.mxu0 0.0
        %703 = vmatpush1.xpose.msra.mxu0 0.0
        %704 = vmatprep.subr.mxu0 0.0
        %705 = vmatpush1.xpose.msra.mxu0 0.0
        %706 = vmatprep.subr.mxu0 0.0
        %707 = vmatpush1.xpose.msra.mxu0 0.0
        %708 = vmatprep.subr.mxu0 0.0
        %709 = vmatpush1.xpose.msra.mxu0 0.0
        %710 = vmatprep.subr.mxu0 0.0
        %711 = vmatpush1.xpose.msra.mxu0 %v678
        %712 = vmatprep.subr.mxu0 0.0
        %713 = vmatpush2.xpose.msra.mxu0 0.0
        %714 = vmatprep.subr.mxu0 0.0
        %715 = vmatpush2.xpose.msra.mxu0 0.0
        %716 = vmatprep.subr.mxu0 0.0
        %717 = vmatpush2.xpose.msra.mxu0 0.0
        %718 = vmatprep.subr.mxu0 0.0
        %719 = vmatpush2.xpose.msra.mxu0 0.0
        %720 = vmatprep.subr.mxu0 0.0
        %721 = vmatpush2.xpose.msra.mxu0 0.0
        %722 = vmatprep.subr.mxu0 0.0
        %723 = vmatpush2.xpose.msra.mxu0 0.0
        %724 = vmatprep.subr.mxu0 0.0
        %725 = vmatpush2.xpose.msra.mxu0 0.0
        %726 = vmatprep.subr.mxu0 0.0
        %727 = vmatpush2.xpose.msra.mxu0 0.0
        %728 = vmatprep.subr.mxu0 0.0
        %729 = vmatpush2.xpose.msra.mxu0 0.0
        %730 = vmatprep.subr.mxu0 0.0
        %731 = vmatpush2.xpose.msra.mxu0 0.0
        %732 = vmatprep.subr.mxu0 0.0
        %733 = vmatpush2.xpose.msra.mxu0 0.0
        %734 = vmatprep.subr.mxu0 0.0
        %735 = vmatpush2.xpose.msra.mxu0 0.0
        %736 = vmatprep.subr.mxu0 0.0
        %737 = vmatpush2.xpose.msra.mxu0 0.0
        %738 = vmatprep.subr.mxu0 0.0
        %739 = vmatpush2.xpose.msra.mxu0 0.0
        %740 = vmatprep.subr.mxu0 0.0
        %741 = vmatpush2.xpose.msra.mxu0 0.0
        %742 = vmatprep.subr.mxu0 0.0
        %743 = vmatpush2.xpose.msra.mxu0 0.0
        %744 = vmatprep.mubr.f32.mxu0 0.0
        %745 = vmatmul.mubr.f32.gmra.mxu0 %v675
        %v746 = vpop.f32.mrf.mxu0
        %v747 = vadd.f32 0.0, %v746
        %v748 = vpop.f32.mrf.mxu0
        %749 = vdwg.mxu0
        %v750 = vmul.f32 %v747, 0.35355338
        %v751 = vsel %vm673, %v750, -inf
        %752 = vmax.xlane.f32.xlu0 %v751
        %v753 = vpop.xlane.xlu0 %752
        %v754 = vsub.f32 %v750, %v753
        %v755 = vmul.f32 %v754, 1.442695
        %v756 = vpow.pop %v755
        %v757 = vsel %vm673, %v756, 0.0
        %758 = vadd.xlane.f32.xlu0 %v757
        %v759 = vpop.xlane.xlu0 %758
        %v760 = vrcp.pop %v759
        %v761 = vmul.f32 %v756, %v760
        %v763 = vsel %vm673, %v761, 0
        %765 = vmatprep.subr.mxu0 0.0
        %766 = vmatpush1.msra.mxu0 0.0
        %767 = vmatprep.subr.mxu0 0.0
        %768 = vmatpush1.msra.mxu0 0.0
        %769 = vmatprep.subr.mxu0 0.0
        %770 = vmatpush1.msra.mxu0 0.0
        %771 = vmatprep.subr.mxu0 0.0
        %772 = vmatpush1.msra.mxu0 0.0
        %773 = vmatprep.subr.mxu0 0.0
        %774 = vmatpush1.msra.mxu0 0.0
        %775 = vmatprep.subr.mxu0 0.0
        %776 = vmatpush1.msra.mxu0 0.0
        %777 = vmatprep.subr.mxu0 0.0
        %778 = vmatpush1.msra.mxu0 0.0
        %779 = vmatprep.subr.mxu0 0.0
        %780 = vmatpush1.msra.mxu0 0.0
        %781 = vmatprep.subr.mxu0 0.0
        %782 = vmatpush1.msra.mxu0 0.0
        %783 = vmatprep.subr.mxu0 0.0
        %784 = vmatpush1.msra.mxu0 0.0
        %785 = vmatprep.subr.mxu0 0.0
        %786 = vmatpush1.msra.mxu0 0.0
        %787 = vmatprep.subr.mxu0 0.0
        %788 = vmatpush1.msra.mxu0 0.0
        %789 = vmatprep.subr.mxu0 0.0
        %790 = vmatpush1.msra.mxu0 0.0
        %791 = vmatprep.subr.mxu0 0.0
        %792 = vmatpush1.msra.mxu0 0.0
        %793 = vmatprep.subr.mxu0 0.0
        %794 = vmatpush1.msra.mxu0 0.0
        %795 = vmatprep.subr.mxu0 0.0
        %796 = vmatpush1.msra.mxu0 %v670
        %797 = vmatprep.subr.mxu0 0.0
        %798 = vmatpush2.msra.mxu0 0.0
        %799 = vmatprep.subr.mxu0 0.0
        %800 = vmatpush2.msra.mxu0 0.0
        %801 = vmatprep.subr.mxu0 0.0
        %802 = vmatpush2.msra.mxu0 0.0
        %803 = vmatprep.subr.mxu0 0.0
        %804 = vmatpush2.msra.mxu0 0.0
        %805 = vmatprep.subr.mxu0 0.0
        %806 = vmatpush2.msra.mxu0 0.0
        %807 = vmatprep.subr.mxu0 0.0
        %808 = vmatpush2.msra.mxu0 0.0
        %809 = vmatprep.subr.mxu0 0.0
        %810 = vmatpush2.msra.mxu0 0.0
        %811 = vmatprep.subr.mxu0 0.0
        %812 = vmatpush2.msra.mxu0 0.0
        %813 = vmatprep.subr.mxu0 0.0
        %814 = vmatpush2.msra.mxu0 0.0
        %815 = vmatprep.subr.mxu0 0.0
        %816 = vmatpush2.msra.mxu0 0.0
        %817 = vmatprep.subr.mxu0 0.0
        %818 = vmatpush2.msra.mxu0 0.0
        %819 = vmatprep.subr.mxu0 0.0
        %820 = vmatpush2.msra.mxu0 0.0
        %821 = vmatprep.subr.mxu0 0.0
        %822 = vmatpush2.msra.mxu0 0.0
        %823 = vmatprep.subr.mxu0 0.0
        %824 = vmatpush2.msra.mxu0 0.0
        %825 = vmatprep.subr.mxu0 0.0
        %826 = vmatpush2.msra.mxu0 0.0
        %827 = vmatprep.subr.mxu0 0.0
        %828 = vmatpush2.msra.mxu0 0.0
        %829 = vmatprep.mubr.f32.mxu0 0.0
        %830 = vmatmul.mubr.f32.gmra.mxu0 %v763
        %v831 = vpop.f32.mrf.mxu0
        %v832 = vadd.f32 0.0, %v831
        %v833 = vpop.f32.mrf.mxu0
        %834 = vdwg.mxu0
        %v835 = vld [vmem:[%s3] sm:$0xff]
        %v837 = vsel %vm673, %v832, 0
        %839 = vmatprep.subr.mxu0 0.0
        %840 = vmatpush1.msra.mxu0 0.0
        %841 = vmatprep.subr.mxu0 0.0
        %842 = vmatpush1.msra.mxu0 0.0
        %843 = vmatprep.subr.mxu0 0.0
        %844 = vmatpush1.msra.mxu0 0.0
        %845 = vmatprep.subr.mxu0 0.0
        %846 = vmatpush1.msra.mxu0 0.0
        %847 = vmatprep.subr.mxu0 0.0
        %848 = vmatpush1.msra.mxu0 0.0
        %849 = vmatprep.subr.mxu0 0.0
        %850 = vmatpush1.msra.mxu0 0.0
        %851 = vmatprep.subr.mxu0 0.0
        %852 = vmatpush1.msra.mxu0 0.0
        %853 = vmatprep.subr.mxu0 0.0
        %854 = vmatpush1.msra.mxu0 0.0
        %855 = vmatprep.subr.mxu0 0.0
        %856 = vmatpush1.msra.mxu0 0.0
        %857 = vmatprep.subr.mxu0 0.0
        %858 = vmatpush1.msra.mxu0 0.0
        %859 = vmatprep.subr.mxu0 0.0
        %860 = vmatpush1.msra.mxu0 0.0
        %861 = vmatprep.subr.mxu0 0.0
        %862 = vmatpush1.msra.mxu0 0.0
        %863 = vmatprep.subr.mxu0 0.0
        %864 = vmatpush1.msra.mxu0 0.0
        %865 = vmatprep.subr.mxu0 0.0
        %866 = vmatpush1.msra.mxu0 0.0
        %867 = vmatprep.subr.mxu0 0.0
        %868 = vmatpush1.msra.mxu0 0.0
        %869 = vmatprep.subr.mxu0 0.0
        %870 = vmatpush1.msra.mxu0 %v835
        %871 = vmatprep.subr.mxu0 0.0
        %872 = vmatpush2.msra.mxu0 0.0
        %873 = vmatprep.subr.mxu0 0.0
        %874 = vmatpush2.msra.mxu0 0.0
        %875 = vmatprep.subr.mxu0 0.0
        %876 = vmatpush2.msra.mxu0 0.0
        %877 = vmatprep.subr.mxu0 0.0
        %878 = vmatpush2.msra.mxu0 0.0
        %879 = vmatprep.subr.mxu0 0.0
        %880 = vmatpush2.msra.mxu0 0.0
        %881 = vmatprep.subr.mxu0 0.0
        %882 = vmatpush2.msra.mxu0 0.0
        %883 = vmatprep.subr.mxu0 0.0
        %884 = vmatpush2.msra.mxu0 0.0
        %885 = vmatprep.subr.mxu0 0.0
        %886 = vmatpush2.msra.mxu0 0.0
        %887 = vmatprep.subr.mxu0 0.0
        %888 = vmatpush2.msra.mxu0 0.0
        %889 = vmatprep.subr.mxu0 0.0
        %890 = vmatpush2.msra.mxu0 0.0
        %891 = vmatprep.subr.mxu0 0.0
        %892 = vmatpush2.msra.mxu0 0.0
        %893 = vmatprep.subr.mxu0 0.0
        %894 = vmatpush2.msra.mxu0 0.0
        %895 = vmatprep.subr.mxu0 0.0
        %896 = vmatpush2.msra.mxu0 0.0
        %897 = vmatprep.subr.mxu0 0.0
        %898 = vmatpush2.msra.mxu0 0.0
        %899 = vmatprep.subr.mxu0 0.0
        %900 = vmatpush2.msra.mxu0 0.0
        %901 = vmatprep.subr.mxu0 0.0
        %902 = vmatpush2.msra.mxu0 0.0
        %903 = vmatprep.mubr.f32.mxu0 0.0
        %904 = vmatmul.mubr.f32.gmra.mxu0 %v837
        %v905 = vpop.f32.mrf.mxu0
        %v906 = vadd.f32 0.0, %v905
        %v907 = vpop.f32.mrf.mxu0
        %908 = vdwg.mxu0
        %v909 = vadd.f32 %v442, %v906
        %s910 = scalar_lea.vmem %s2, 32
        %v911 = vld [vmem:[%s910] sm:$0xff]
        %v912 = vld [vmem:[%s910 + $0x8] sm:$0xff]
        %v913 = vld [vmem:[%s910 + $0x10] sm:$0xff]
        %v914 = vld [vmem:[%s910 + $0x18] sm:$0xff]
        %s915 = scalar_lea.vmem %s2, 160
        %v916 = vld [vmem:[%s915] sm:$0xff]
        %v917 = vld [vmem:[%s915 + $0x8] sm:$0xff]
        %v918 = vld [vmem:[%s915 + $0x10] sm:$0xff]
        %v919 = vld [vmem:[%s915 + $0x18] sm:$0xff]
        %s920 = scalar_lea.vmem %s2, 288
        %v921 = vld [vmem:[%s920] sm:$0xff]
        %v922 = vld [vmem:[%s920 + $0x8] sm:$0xff]
        %v923 = vld [vmem:[%s920 + $0x10] sm:$0xff]
        %v924 = vld [vmem:[%s920 + $0x18] sm:$0xff]
        %925 = vmatprep.subr.mxu0 0.0
        %926 = vmatpush1.msra.mxu0 0.0
        %927 = vmatprep.subr.mxu0 0.0
        %928 = vmatpush1.msra.mxu0 0.0
        %929 = vmatprep.subr.mxu0 0.0
        %930 = vmatpush1.msra.mxu0 0.0
        %931 = vmatprep.subr.mxu0 0.0
        %932 = vmatpush1.msra.mxu0 0.0
        %933 = vmatprep.subr.mxu0 0.0
        %934 = vmatpush1.msra.mxu0 0.0
        %935 = vmatprep.subr.mxu0 0.0
        %936 = vmatpush1.msra.mxu0 0.0
        %937 = vmatprep.subr.mxu0 0.0
        %938 = vmatpush1.msra.mxu0 0.0
        %939 = vmatprep.subr.mxu0 0.0
        %940 = vmatpush1.msra.mxu0 0.0
        %941 = vmatprep.subr.mxu0 0.0
        %942 = vmatpush1.msra.mxu0 0.0
        %943 = vmatprep.subr.mxu0 0.0
        %944 = vmatpush1.msra.mxu0 0.0
        %945 = vmatprep.subr.mxu0 0.0
        %946 = vmatpush1.msra.mxu0 0.0
        %947 = vmatprep.subr.mxu0 0.0
        %948 = vmatpush1.msra.mxu0 0.0
        %949 = vmatprep.subr.mxu0 0.0
        %950 = vmatpush1.msra.mxu0 %v914
        %951 = vmatprep.subr.mxu0 0.0
        %952 = vmatpush1.msra.mxu0 %v913
        %953 = vmatprep.subr.mxu0 0.0
        %954 = vmatpush1.msra.mxu0 %v912
        %955 = vmatprep.subr.mxu0 0.0
        %956 = vmatpush1.msra.mxu0 %v911
        %957 = vmatprep.subr.mxu0 0.0
        %958 = vmatpush2.msra.mxu0 0.0
        %959 = vmatprep.subr.mxu0 0.0
        %960 = vmatpush2.msra.mxu0 0.0
        %961 = vmatprep.subr.mxu0 0.0
        %962 = vmatpush2.msra.mxu0 0.0
        %963 = vmatprep.subr.mxu0 0.0
        %964 = vmatpush2.msra.mxu0 0.0
        %965 = vmatprep.subr.mxu0 0.0
        %966 = vmatpush2.msra.mxu0 0.0
        %967 = vmatprep.subr.mxu0 0.0
        %968 = vmatpush2.msra.mxu0 0.0
        %969 = vmatprep.subr.mxu0 0.0
        %970 = vmatpush2.msra.mxu0 0.0
        %971 = vmatprep.subr.mxu0 0.0
        %972 = vmatpush2.msra.mxu0 0.0
        %973 = vmatprep.subr.mxu0 0.0
        %974 = vmatpush2.msra.mxu0 0.0
        %975 = vmatprep.subr.mxu0 0.0
        %976 = vmatpush2.msra.mxu0 0.0
        %977 = vmatprep.subr.mxu0 0.0
        %978 = vmatpush2.msra.mxu0 0.0
        %979 = vmatprep.subr.mxu0 0.0
        %980 = vmatpush2.msra.mxu0 0.0
        %981 = vmatprep.subr.mxu0 0.0
        %982 = vmatpush2.msra.mxu0 0.0
        %983 = vmatprep.subr.mxu0 0.0
        %984 = vmatpush2.msra.mxu0 0.0
        %985 = vmatprep.subr.mxu0 0.0
        %986 = vmatpush2.msra.mxu0 0.0
        %987 = vmatprep.subr.mxu0 0.0
        %988 = vmatpush2.msra.mxu0 0.0
        %989 = vmatprep.mubr.f32.mxu0 0.0
        %990 = vmatmul.mubr.f32.gmra.mxu0 %v461
        %v991 = vpop.f32.mrf.mxu0
        %v992 = vadd.f32 0.0, %v991
        %v993 = vpop.f32.mrf.mxu0
        %994 = vdwg.mxu0
        %995 = vmatprep.subr.mxu0 0.0
        %996 = vmatpush1.msra.mxu0 0.0
        %997 = vmatprep.subr.mxu0 0.0
        %998 = vmatpush1.msra.mxu0 0.0
        %999 = vmatprep.subr.mxu0 0.0
        %1000 = vmatpush1.msra.mxu0 0.0
        %1001 = vmatprep.subr.mxu0 0.0
        %1002 = vmatpush1.msra.mxu0 0.0
        %1003 = vmatprep.subr.mxu0 0.0
        %1004 = vmatpush1.msra.mxu0 0.0
        %1005 = vmatprep.subr.mxu0 0.0
        %1006 = vmatpush1.msra.mxu0 0.0
        %1007 = vmatprep.subr.mxu0 0.0
        %1008 = vmatpush1.msra.mxu0 0.0
        %1009 = vmatprep.subr.mxu0 0.0
        %1010 = vmatpush1.msra.mxu0 0.0
        %1011 = vmatprep.subr.mxu0 0.0
        %1012 = vmatpush1.msra.mxu0 0.0
        %1013 = vmatprep.subr.mxu0 0.0
        %1014 = vmatpush1.msra.mxu0 0.0
        %1015 = vmatprep.subr.mxu0 0.0
        %1016 = vmatpush1.msra.mxu0 0.0
        %1017 = vmatprep.subr.mxu0 0.0
        %1018 = vmatpush1.msra.mxu0 0.0
        %1019 = vmatprep.subr.mxu0 0.0
        %1020 = vmatpush1.msra.mxu0 %v919
        %1021 = vmatprep.subr.mxu0 0.0
        %1022 = vmatpush1.msra.mxu0 %v918
        %1023 = vmatprep.subr.mxu0 0.0
        %1024 = vmatpush1.msra.mxu0 %v917
        %1025 = vmatprep.subr.mxu0 0.0
        %1026 = vmatpush1.msra.mxu0 %v916
        %1027 = vmatprep.subr.mxu0 0.0
        %1028 = vmatpush2.msra.mxu0 0.0
        %1029 = vmatprep.subr.mxu0 0.0
        %1030 = vmatpush2.msra.mxu0 0.0
        %1031 = vmatprep.subr.mxu0 0.0
        %1032 = vmatpush2.msra.mxu0 0.0
        %1033 = vmatprep.subr.mxu0 0.0
        %1034 = vmatpush2.msra.mxu0 0.0
        %1035 = vmatprep.subr.mxu0 0.0
        %1036 = vmatpush2.msra.mxu0 0.0
        %1037 = vmatprep.subr.mxu0 0.0
        %1038 = vmatpush2.msra.mxu0 0.0
        %1039 = vmatprep.subr.mxu0 0.0
        %1040 = vmatpush2.msra.mxu0 0.0
        %1041 = vmatprep.subr.mxu0 0.0
        %1042 = vmatpush2.msra.mxu0 0.0
        %1043 = vmatprep.subr.mxu0 0.0
        %1044 = vmatpush2.msra.mxu0 0.0
        %1045 = vmatprep.subr.mxu0 0.0
        %1046 = vmatpush2.msra.mxu0 0.0
        %1047 = vmatprep.subr.mxu0 0.0
        %1048 = vmatpush2.msra.mxu0 0.0
        %1049 = vmatprep.subr.mxu0 0.0
        %1050 = vmatpush2.msra.mxu0 0.0
        %1051 = vmatprep.subr.mxu0 0.0
        %1052 = vmatpush2.msra.mxu0 0.0
        %1053 = vmatprep.subr.mxu0 0.0
        %1054 = vmatpush2.msra.mxu0 0.0
        %1055 = vmatprep.subr.mxu0 0.0
        %1056 = vmatpush2.msra.mxu0 0.0
        %1057 = vmatprep.subr.mxu0 0.0
        %1058 = vmatpush2.msra.mxu0 0.0
        %1059 = vmatprep.mubr.f32.mxu0 0.0
        %1060 = vmatmul.mubr.f32.gmra.mxu0 %v461
        %v1061 = vpop.f32.mrf.mxu0
        %v1062 = vadd.f32 0.0, %v1061
        %v1063 = vpop.f32.mrf.mxu0
        %1064 = vdwg.mxu0
        %1065 = vmatprep.subr.mxu0 0.0
        %1066 = vmatpush1.msra.mxu0 0.0
        %1067 = vmatprep.subr.mxu0 0.0
        %1068 = vmatpush1.msra.mxu0 0.0
        %1069 = vmatprep.subr.mxu0 0.0
        %1070 = vmatpush1.msra.mxu0 0.0
        %1071 = vmatprep.subr.mxu0 0.0
        %1072 = vmatpush1.msra.mxu0 0.0
        %1073 = vmatprep.subr.mxu0 0.0
        %1074 = vmatpush1.msra.mxu0 0.0
        %1075 = vmatprep.subr.mxu0 0.0
        %1076 = vmatpush1.msra.mxu0 0.0
        %1077 = vmatprep.subr.mxu0 0.0
        %1078 = vmatpush1.msra.mxu0 0.0
        %1079 = vmatprep.subr.mxu0 0.0
        %1080 = vmatpush1.msra.mxu0 0.0
        %1081 = vmatprep.subr.mxu0 0.0
        %1082 = vmatpush1.msra.mxu0 0.0
        %1083 = vmatprep.subr.mxu0 0.0
        %1084 = vmatpush1.msra.mxu0 0.0
        %1085 = vmatprep.subr.mxu0 0.0
        %1086 = vmatpush1.msra.mxu0 0.0
        %1087 = vmatprep.subr.mxu0 0.0
        %1088 = vmatpush1.msra.mxu0 0.0
        %1089 = vmatprep.subr.mxu0 0.0
        %1090 = vmatpush1.msra.mxu0 %v924
        %1091 = vmatprep.subr.mxu0 0.0
        %1092 = vmatpush1.msra.mxu0 %v923
        %1093 = vmatprep.subr.mxu0 0.0
        %1094 = vmatpush1.msra.mxu0 %v922
        %1095 = vmatprep.subr.mxu0 0.0
        %1096 = vmatpush1.msra.mxu0 %v921
        %1097 = vmatprep.subr.mxu0 0.0
        %1098 = vmatpush2.msra.mxu0 0.0
        %1099 = vmatprep.subr.mxu0 0.0
        %1100 = vmatpush2.msra.mxu0 0.0
        %1101 = vmatprep.subr.mxu0 0.0
        %1102 = vmatpush2.msra.mxu0 0.0
        %1103 = vmatprep.subr.mxu0 0.0
        %1104 = vmatpush2.msra.mxu0 0.0
        %1105 = vmatprep.subr.mxu0 0.0
        %1106 = vmatpush2.msra.mxu0 0.0
        %1107 = vmatprep.subr.mxu0 0.0
        %1108 = vmatpush2.msra.mxu0 0.0
        %1109 = vmatprep.subr.mxu0 0.0
        %1110 = vmatpush2.msra.mxu0 0.0
        %1111 = vmatprep.subr.mxu0 0.0
        %1112 = vmatpush2.msra.mxu0 0.0
        %1113 = vmatprep.subr.mxu0 0.0
        %1114 = vmatpush2.msra.mxu0 0.0
        %1115 = vmatprep.subr.mxu0 0.0
        %1116 = vmatpush2.msra.mxu0 0.0
        %1117 = vmatprep.subr.mxu0 0.0
        %1118 = vmatpush2.msra.mxu0 0.0
        %1119 = vmatprep.subr.mxu0 0.0
        %1120 = vmatpush2.msra.mxu0 0.0
        %1121 = vmatprep.subr.mxu0 0.0
        %1122 = vmatpush2.msra.mxu0 0.0
        %1123 = vmatprep.subr.mxu0 0.0
        %1124 = vmatpush2.msra.mxu0 0.0
        %1125 = vmatprep.subr.mxu0 0.0
        %1126 = vmatpush2.msra.mxu0 0.0
        %1127 = vmatprep.subr.mxu0 0.0
        %1128 = vmatpush2.msra.mxu0 0.0
        %1129 = vmatprep.mubr.f32.mxu0 0.0
        %1130 = vmatmul.mubr.f32.gmra.mxu0 %v461
        %v1131 = vpop.f32.mrf.mxu0
        %v1132 = vadd.f32 0.0, %v1131
        %v1133 = vpop.f32.mrf.mxu0
        %1134 = vdwg.mxu0
        %v1136 = vsel %vm673, %v992, 0
        %v1139 = vsel %vm673, %v1062, 0
        %1141 = vmatprep.subr.mxu0 0.0
        %1142 = vmatpush1.xpose.msra.mxu0 0.0
        %1143 = vmatprep.subr.mxu0 0.0
        %1144 = vmatpush1.xpose.msra.mxu0 0.0
        %1145 = vmatprep.subr.mxu0 0.0
        %1146 = vmatpush1.xpose.msra.mxu0 0.0
        %1147 = vmatprep.subr.mxu0 0.0
        %1148 = vmatpush1.xpose.msra.mxu0 0.0
        %1149 = vmatprep.subr.mxu0 0.0
        %1150 = vmatpush1.xpose.msra.mxu0 0.0
        %1151 = vmatprep.subr.mxu0 0.0
        %1152 = vmatpush1.xpose.msra.mxu0 0.0
        %1153 = vmatprep.subr.mxu0 0.0
        %1154 = vmatpush1.xpose.msra.mxu0 0.0
        %1155 = vmatprep.subr.mxu0 0.0
        %1156 = vmatpush1.xpose.msra.mxu0 0.0
        %1157 = vmatprep.subr.mxu0 0.0
        %1158 = vmatpush1.xpose.msra.mxu0 0.0
        %1159 = vmatprep.subr.mxu0 0.0
        %1160 = vmatpush1.xpose.msra.mxu0 0.0
        %1161 = vmatprep.subr.mxu0 0.0
        %1162 = vmatpush1.xpose.msra.mxu0 0.0
        %1163 = vmatprep.subr.mxu0 0.0
        %1164 = vmatpush1.xpose.msra.mxu0 0.0
        %1165 = vmatprep.subr.mxu0 0.0
        %1166 = vmatpush1.xpose.msra.mxu0 0.0
        %1167 = vmatprep.subr.mxu0 0.0
        %1168 = vmatpush1.xpose.msra.mxu0 0.0
        %1169 = vmatprep.subr.mxu0 0.0
        %1170 = vmatpush1.xpose.msra.mxu0 0.0
        %1171 = vmatprep.subr.mxu0 0.0
        %1172 = vmatpush1.xpose.msra.mxu0 %v1139
        %1173 = vmatprep.subr.mxu0 0.0
        %1174 = vmatpush2.xpose.msra.mxu0 0.0
        %1175 = vmatprep.subr.mxu0 0.0
        %1176 = vmatpush2.xpose.msra.mxu0 0.0
        %1177 = vmatprep.subr.mxu0 0.0
        %1178 = vmatpush2.xpose.msra.mxu0 0.0
        %1179 = vmatprep.subr.mxu0 0.0
        %1180 = vmatpush2.xpose.msra.mxu0 0.0
        %1181 = vmatprep.subr.mxu0 0.0
        %1182 = vmatpush2.xpose.msra.mxu0 0.0
        %1183 = vmatprep.subr.mxu0 0.0
        %1184 = vmatpush2.xpose.msra.mxu0 0.0
        %1185 = vmatprep.subr.mxu0 0.0
        %1186 = vmatpush2.xpose.msra.mxu0 0.0
        %1187 = vmatprep.subr.mxu0 0.0
        %1188 = vmatpush2.xpose.msra.mxu0 0.0
        %1189 = vmatprep.subr.mxu0 0.0
        %1190 = vmatpush2.xpose.msra.mxu0 0.0
        %1191 = vmatprep.subr.mxu0 0.0
        %1192 = vmatpush2.xpose.msra.mxu0 0.0
        %1193 = vmatprep.subr.mxu0 0.0
        %1194 = vmatpush2.xpose.msra.mxu0 0.0
        %1195 = vmatprep.subr.mxu0 0.0
        %1196 = vmatpush2.xpose.msra.mxu0 0.0
        %1197 = vmatprep.subr.mxu0 0.0
        %1198 = vmatpush2.xpose.msra.mxu0 0.0
        %1199 = vmatprep.subr.mxu0 0.0
        %1200 = vmatpush2.xpose.msra.mxu0 0.0
        %1201 = vmatprep.subr.mxu0 0.0
        %1202 = vmatpush2.xpose.msra.mxu0 0.0
        %1203 = vmatprep.subr.mxu0 0.0
        %1204 = vmatpush2.xpose.msra.mxu0 0.0
        %1205 = vmatprep.mubr.f32.mxu0 0.0
        %1206 = vmatmul.mubr.f32.gmra.mxu0 %v1136
        %v1207 = vpop.f32.mrf.mxu0
        %v1208 = vadd.f32 0.0, %v1207
        %v1209 = vpop.f32.mrf.mxu0
        %1210 = vdwg.mxu0
        %v1211 = vmul.f32 %v1208, 0.35355338
        %v1212 = vsel %vm673, %v1211, -inf
        %1213 = vmax.xlane.f32.xlu0 %v1212
        %v1214 = vpop.xlane.xlu0 %1213
        %v1215 = vsub.f32 %v1211, %v1214
        %v1216 = vmul.f32 %v1215, 1.442695
        %v1217 = vpow.pop %v1216
        %v1218 = vsel %vm673, %v1217, 0.0
        %1219 = vadd.xlane.f32.xlu0 %v1218
        %v1220 = vpop.xlane.xlu0 %1219
        %v1221 = vrcp.pop %v1220
        %v1222 = vmul.f32 %v1217, %v1221
        %v1224 = vsel %vm673, %v1222, 0
        %1226 = vmatprep.subr.mxu0 0.0
        %1227 = vmatpush1.msra.mxu0 0.0
        %1228 = vmatprep.subr.mxu0 0.0
        %1229 = vmatpush1.msra.mxu0 0.0
        %1230 = vmatprep.subr.mxu0 0.0
        %1231 = vmatpush1.msra.mxu0 0.0
        %1232 = vmatprep.subr.mxu0 0.0
        %1233 = vmatpush1.msra.mxu0 0.0
        %1234 = vmatprep.subr.mxu0 0.0
        %1235 = vmatpush1.msra.mxu0 0.0
        %1236 = vmatprep.subr.mxu0 0.0
        %1237 = vmatpush1.msra.mxu0 0.0
        %1238 = vmatprep.subr.mxu0 0.0
        %1239 = vmatpush1.msra.mxu0 0.0
        %1240 = vmatprep.subr.mxu0 0.0
        %1241 = vmatpush1.msra.mxu0 0.0
        %1242 = vmatprep.subr.mxu0 0.0
        %1243 = vmatpush1.msra.mxu0 0.0
        %1244 = vmatprep.subr.mxu0 0.0
        %1245 = vmatpush1.msra.mxu0 0.0
        %1246 = vmatprep.subr.mxu0 0.0
        %1247 = vmatpush1.msra.mxu0 0.0
        %1248 = vmatprep.subr.mxu0 0.0
        %1249 = vmatpush1.msra.mxu0 0.0
        %1250 = vmatprep.subr.mxu0 0.0
        %1251 = vmatpush1.msra.mxu0 0.0
        %1252 = vmatprep.subr.mxu0 0.0
        %1253 = vmatpush1.msra.mxu0 0.0
        %1254 = vmatprep.subr.mxu0 0.0
        %1255 = vmatpush1.msra.mxu0 0.0
        %1256 = vmatprep.subr.mxu0 0.0
        %1257 = vmatpush1.msra.mxu0 %v1132
        %1258 = vmatprep.subr.mxu0 0.0
        %1259 = vmatpush2.msra.mxu0 0.0
        %1260 = vmatprep.subr.mxu0 0.0
        %1261 = vmatpush2.msra.mxu0 0.0
        %1262 = vmatprep.subr.mxu0 0.0
        %1263 = vmatpush2.msra.mxu0 0.0
        %1264 = vmatprep.subr.mxu0 0.0
        %1265 = vmatpush2.msra.mxu0 0.0
        %1266 = vmatprep.subr.mxu0 0.0
        %1267 = vmatpush2.msra.mxu0 0.0
        %1268 = vmatprep.subr.mxu0 0.0
        %1269 = vmatpush2.msra.mxu0 0.0
        %1270 = vmatprep.subr.mxu0 0.0
        %1271 = vmatpush2.msra.mxu0 0.0
        %1272 = vmatprep.subr.mxu0 0.0
        %1273 = vmatpush2.msra.mxu0 0.0
        %1274 = vmatprep.subr.mxu0 0.0
        %1275 = vmatpush2.msra.mxu0 0.0
        %1276 = vmatprep.subr.mxu0 0.0
        %1277 = vmatpush2.msra.mxu0 0.0
        %1278 = vmatprep.subr.mxu0 0.0
        %1279 = vmatpush2.msra.mxu0 0.0
        %1280 = vmatprep.subr.mxu0 0.0
        %1281 = vmatpush2.msra.mxu0 0.0
        %1282 = vmatprep.subr.mxu0 0.0
        %1283 = vmatpush2.msra.mxu0 0.0
        %1284 = vmatprep.subr.mxu0 0.0
        %1285 = vmatpush2.msra.mxu0 0.0
        %1286 = vmatprep.subr.mxu0 0.0
        %1287 = vmatpush2.msra.mxu0 0.0
        %1288 = vmatprep.subr.mxu0 0.0
        %1289 = vmatpush2.msra.mxu0 0.0
        %1290 = vmatprep.mubr.f32.mxu0 0.0
        %1291 = vmatmul.mubr.f32.gmra.mxu0 %v1224
        %v1292 = vpop.f32.mrf.mxu0
        %v1293 = vadd.f32 0.0, %v1292
        %v1294 = vpop.f32.mrf.mxu0
        %1295 = vdwg.mxu0
        %s1296 = scalar_lea.vmem %s3, 8
        %v1297 = vld [vmem:[%s1296] sm:$0xff]
        %v1299 = vsel %vm673, %v1293, 0
        %1301 = vmatprep.subr.mxu0 0.0
        %1302 = vmatpush1.msra.mxu0 0.0
        %1303 = vmatprep.subr.mxu0 0.0
        %1304 = vmatpush1.msra.mxu0 0.0
        %1305 = vmatprep.subr.mxu0 0.0
        %1306 = vmatpush1.msra.mxu0 0.0
        %1307 = vmatprep.subr.mxu0 0.0
        %1308 = vmatpush1.msra.mxu0 0.0
        %1309 = vmatprep.subr.mxu0 0.0
        %1310 = vmatpush1.msra.mxu0 0.0
        %1311 = vmatprep.subr.mxu0 0.0
        %1312 = vmatpush1.msra.mxu0 0.0
        %1313 = vmatprep.subr.mxu0 0.0
        %1314 = vmatpush1.msra.mxu0 0.0
        %1315 = vmatprep.subr.mxu0 0.0
        %1316 = vmatpush1.msra.mxu0 0.0
        %1317 = vmatprep.subr.mxu0 0.0
        %1318 = vmatpush1.msra.mxu0 0.0
        %1319 = vmatprep.subr.mxu0 0.0
        %1320 = vmatpush1.msra.mxu0 0.0
        %1321 = vmatprep.subr.mxu0 0.0
        %1322 = vmatpush1.msra.mxu0 0.0
        %1323 = vmatprep.subr.mxu0 0.0
        %1324 = vmatpush1.msra.mxu0 0.0
        %1325 = vmatprep.subr.mxu0 0.0
        %1326 = vmatpush1.msra.mxu0 0.0
        %1327 = vmatprep.subr.mxu0 0.0
        %1328 = vmatpush1.msra.mxu0 0.0
        %1329 = vmatprep.subr.mxu0 0.0
        %1330 = vmatpush1.msra.mxu0 0.0
        %1331 = vmatprep.subr.mxu0 0.0
        %1332 = vmatpush1.msra.mxu0 %v1297
        %1333 = vmatprep.subr.mxu0 0.0
        %1334 = vmatpush2.msra.mxu0 0.0
        %1335 = vmatprep.subr.mxu0 0.0
        %1336 = vmatpush2.msra.mxu0 0.0
        %1337 = vmatprep.subr.mxu0 0.0
        %1338 = vmatpush2.msra.mxu0 0.0
        %1339 = vmatprep.subr.mxu0 0.0
        %1340 = vmatpush2.msra.mxu0 0.0
        %1341 = vmatprep.subr.mxu0 0.0
        %1342 = vmatpush2.msra.mxu0 0.0
        %1343 = vmatprep.subr.mxu0 0.0
        %1344 = vmatpush2.msra.mxu0 0.0
        %1345 = vmatprep.subr.mxu0 0.0
        %1346 = vmatpush2.msra.mxu0 0.0
        %1347 = vmatprep.subr.mxu0 0.0
        %1348 = vmatpush2.msra.mxu0 0.0
        %1349 = vmatprep.subr.mxu0 0.0
        %1350 = vmatpush2.msra.mxu0 0.0
        %1351 = vmatprep.subr.mxu0 0.0
        %1352 = vmatpush2.msra.mxu0 0.0
        %1353 = vmatprep.subr.mxu0 0.0
        %1354 = vmatpush2.msra.mxu0 0.0
        %1355 = vmatprep.subr.mxu0 0.0
        %1356 = vmatpush2.msra.mxu0 0.0
        %1357 = vmatprep.subr.mxu0 0.0
        %1358 = vmatpush2.msra.mxu0 0.0
        %1359 = vmatprep.subr.mxu0 0.0
        %1360 = vmatpush2.msra.mxu0 0.0
        %1361 = vmatprep.subr.mxu0 0.0
        %1362 = vmatpush2.msra.mxu0 0.0
        %1363 = vmatprep.subr.mxu0 0.0
        %1364 = vmatpush2.msra.mxu0 0.0
        %1365 = vmatprep.mubr.f32.mxu0 0.0
        %1366 = vmatmul.mubr.f32.gmra.mxu0 %v1299
        %v1367 = vpop.f32.mrf.mxu0
        %v1368 = vadd.f32 0.0, %v1367
        %v1369 = vpop.f32.mrf.mxu0
        %1370 = vdwg.mxu0
        %v1371 = vadd.f32 %v909, %v1368
        %s1372 = scalar_lea.vmem %s2, 64
        %v1373 = vld [vmem:[%s1372] sm:$0xff]
        %v1374 = vld [vmem:[%s1372 + $0x8] sm:$0xff]
        %v1375 = vld [vmem:[%s1372 + $0x10] sm:$0xff]
        %v1376 = vld [vmem:[%s1372 + $0x18] sm:$0xff]
        %s1377 = scalar_lea.vmem %s2, 192
        %v1378 = vld [vmem:[%s1377] sm:$0xff]
        %v1379 = vld [vmem:[%s1377 + $0x8] sm:$0xff]
        %v1380 = vld [vmem:[%s1377 + $0x10] sm:$0xff]
        %v1381 = vld [vmem:[%s1377 + $0x18] sm:$0xff]
        %s1382 = scalar_lea.vmem %s2, 320
        %v1383 = vld [vmem:[%s1382] sm:$0xff]
        %v1384 = vld [vmem:[%s1382 + $0x8] sm:$0xff]
        %v1385 = vld [vmem:[%s1382 + $0x10] sm:$0xff]
        %v1386 = vld [vmem:[%s1382 + $0x18] sm:$0xff]
        %1387 = vmatprep.subr.mxu0 0.0
        %1388 = vmatpush1.msra.mxu0 0.0
        %1389 = vmatprep.subr.mxu0 0.0
        %1390 = vmatpush1.msra.mxu0 0.0
        %1391 = vmatprep.subr.mxu0 0.0
        %1392 = vmatpush1.msra.mxu0 0.0
        %1393 = vmatprep.subr.mxu0 0.0
        %1394 = vmatpush1.msra.mxu0 0.0
        %1395 = vmatprep.subr.mxu0 0.0
        %1396 = vmatpush1.msra.mxu0 0.0
        %1397 = vmatprep.subr.mxu0 0.0
        %1398 = vmatpush1.msra.mxu0 0.0
        %1399 = vmatprep.subr.mxu0 0.0
        %1400 = vmatpush1.msra.mxu0 0.0
        %1401 = vmatprep.subr.mxu0 0.0
        %1402 = vmatpush1.msra.mxu0 0.0
        %1403 = vmatprep.subr.mxu0 0.0
        %1404 = vmatpush1.msra.mxu0 0.0
        %1405 = vmatprep.subr.mxu0 0.0
        %1406 = vmatpush1.msra.mxu0 0.0
        %1407 = vmatprep.subr.mxu0 0.0
        %1408 = vmatpush1.msra.mxu0 0.0
        %1409 = vmatprep.subr.mxu0 0.0
        %1410 = vmatpush1.msra.mxu0 0.0
        %1411 = vmatprep.subr.mxu0 0.0
        %1412 = vmatpush1.msra.mxu0 %v1376
        %1413 = vmatprep.subr.mxu0 0.0
        %1414 = vmatpush1.msra.mxu0 %v1375
        %1415 = vmatprep.subr.mxu0 0.0
        %1416 = vmatpush1.msra.mxu0 %v1374
        %1417 = vmatprep.subr.mxu0 0.0
        %1418 = vmatpush1.msra.mxu0 %v1373
        %1419 = vmatprep.subr.mxu0 0.0
        %1420 = vmatpush2.msra.mxu0 0.0
        %1421 = vmatprep.subr.mxu0 0.0
        %1422 = vmatpush2.msra.mxu0 0.0
        %1423 = vmatprep.subr.mxu0 0.0
        %1424 = vmatpush2.msra.mxu0 0.0
        %1425 = vmatprep.subr.mxu0 0.0
        %1426 = vmatpush2.msra.mxu0 0.0
        %1427 = vmatprep.subr.mxu0 0.0
        %1428 = vmatpush2.msra.mxu0 0.0
        %1429 = vmatprep.subr.mxu0 0.0
        %1430 = vmatpush2.msra.mxu0 0.0
        %1431 = vmatprep.subr.mxu0 0.0
        %1432 = vmatpush2.msra.mxu0 0.0
        %1433 = vmatprep.subr.mxu0 0.0
        %1434 = vmatpush2.msra.mxu0 0.0
        %1435 = vmatprep.subr.mxu0 0.0
        %1436 = vmatpush2.msra.mxu0 0.0
        %1437 = vmatprep.subr.mxu0 0.0
        %1438 = vmatpush2.msra.mxu0 0.0
        %1439 = vmatprep.subr.mxu0 0.0
        %1440 = vmatpush2.msra.mxu0 0.0
        %1441 = vmatprep.subr.mxu0 0.0
        %1442 = vmatpush2.msra.mxu0 0.0
        %1443 = vmatprep.subr.mxu0 0.0
        %1444 = vmatpush2.msra.mxu0 0.0
        %1445 = vmatprep.subr.mxu0 0.0
        %1446 = vmatpush2.msra.mxu0 0.0
        %1447 = vmatprep.subr.mxu0 0.0
        %1448 = vmatpush2.msra.mxu0 0.0
        %1449 = vmatprep.subr.mxu0 0.0
        %1450 = vmatpush2.msra.mxu0 0.0
        %1451 = vmatprep.mubr.f32.mxu0 0.0
        %1452 = vmatmul.mubr.f32.gmra.mxu0 %v461
        %v1453 = vpop.f32.mrf.mxu0
        %v1454 = vadd.f32 0.0, %v1453
        %v1455 = vpop.f32.mrf.mxu0
        %1456 = vdwg.mxu0
        %1457 = vmatprep.subr.mxu0 0.0
        %1458 = vmatpush1.msra.mxu0 0.0
        %1459 = vmatprep.subr.mxu0 0.0
        %1460 = vmatpush1.msra.mxu0 0.0
        %1461 = vmatprep.subr.mxu0 0.0
        %1462 = vmatpush1.msra.mxu0 0.0
        %1463 = vmatprep.subr.mxu0 0.0
        %1464 = vmatpush1.msra.mxu0 0.0
        %1465 = vmatprep.subr.mxu0 0.0
        %1466 = vmatpush1.msra.mxu0 0.0
        %1467 = vmatprep.subr.mxu0 0.0
        %1468 = vmatpush1.msra.mxu0 0.0
        %1469 = vmatprep.subr.mxu0 0.0
        %1470 = vmatpush1.msra.mxu0 0.0
        %1471 = vmatprep.subr.mxu0 0.0
        %1472 = vmatpush1.msra.mxu0 0.0
        %1473 = vmatprep.subr.mxu0 0.0
        %1474 = vmatpush1.msra.mxu0 0.0
        %1475 = vmatprep.subr.mxu0 0.0
        %1476 = vmatpush1.msra.mxu0 0.0
        %1477 = vmatprep.subr.mxu0 0.0
        %1478 = vmatpush1.msra.mxu0 0.0
        %1479 = vmatprep.subr.mxu0 0.0
        %1480 = vmatpush1.msra.mxu0 0.0
        %1481 = vmatprep.subr.mxu0 0.0
        %1482 = vmatpush1.msra.mxu0 %v1381
        %1483 = vmatprep.subr.mxu0 0.0
        %1484 = vmatpush1.msra.mxu0 %v1380
        %1485 = vmatprep.subr.mxu0 0.0
        %1486 = vmatpush1.msra.mxu0 %v1379
        %1487 = vmatprep.subr.mxu0 0.0
        %1488 = vmatpush1.msra.mxu0 %v1378
        %1489 = vmatprep.subr.mxu0 0.0
        %1490 = vmatpush2.msra.mxu0 0.0
        %1491 = vmatprep.subr.mxu0 0.0
        %1492 = vmatpush2.msra.mxu0 0.0
        %1493 = vmatprep.subr.mxu0 0.0
        %1494 = vmatpush2.msra.mxu0 0.0
        %1495 = vmatprep.subr.mxu0 0.0
        %1496 = vmatpush2.msra.mxu0 0.0
        %1497 = vmatprep.subr.mxu0 0.0
        %1498 = vmatpush2.msra.mxu0 0.0
        %1499 = vmatprep.subr.mxu0 0.0
        %1500 = vmatpush2.msra.mxu0 0.0
        %1501 = vmatprep.subr.mxu0 0.0
        %1502 = vmatpush2.msra.mxu0 0.0
        %1503 = vmatprep.subr.mxu0 0.0
        %1504 = vmatpush2.msra.mxu0 0.0
        %1505 = vmatprep.subr.mxu0 0.0
        %1506 = vmatpush2.msra.mxu0 0.0
        %1507 = vmatprep.subr.mxu0 0.0
        %1508 = vmatpush2.msra.mxu0 0.0
        %1509 = vmatprep.subr.mxu0 0.0
        %1510 = vmatpush2.msra.mxu0 0.0
        %1511 = vmatprep.subr.mxu0 0.0
        %1512 = vmatpush2.msra.mxu0 0.0
        %1513 = vmatprep.subr.mxu0 0.0
        %1514 = vmatpush2.msra.mxu0 0.0
        %1515 = vmatprep.subr.mxu0 0.0
        %1516 = vmatpush2.msra.mxu0 0.0
        %1517 = vmatprep.subr.mxu0 0.0
        %1518 = vmatpush2.msra.mxu0 0.0
        %1519 = vmatprep.subr.mxu0 0.0
        %1520 = vmatpush2.msra.mxu0 0.0
        %1521 = vmatprep.mubr.f32.mxu0 0.0
        %1522 = vmatmul.mubr.f32.gmra.mxu0 %v461
        %v1523 = vpop.f32.mrf.mxu0
        %v1524 = vadd.f32 0.0, %v1523
        %v1525 = vpop.f32.mrf.mxu0
        %1526 = vdwg.mxu0
        %1527 = vmatprep.subr.mxu0 0.0
        %1528 = vmatpush1.msra.mxu0 0.0
        %1529 = vmatprep.subr.mxu0 0.0
        %1530 = vmatpush1.msra.mxu0 0.0
        %1531 = vmatprep.subr.mxu0 0.0
        %1532 = vmatpush1.msra.mxu0 0.0
        %1533 = vmatprep.subr.mxu0 0.0
        %1534 = vmatpush1.msra.mxu0 0.0
        %1535 = vmatprep.subr.mxu0 0.0
        %1536 = vmatpush1.msra.mxu0 0.0
        %1537 = vmatprep.subr.mxu0 0.0
        %1538 = vmatpush1.msra.mxu0 0.0
        %1539 = vmatprep.subr.mxu0 0.0
        %1540 = vmatpush1.msra.mxu0 0.0
        %1541 = vmatprep.subr.mxu0 0.0
        %1542 = vmatpush1.msra.mxu0 0.0
        %1543 = vmatprep.subr.mxu0 0.0
        %1544 = vmatpush1.msra.mxu0 0.0
        %1545 = vmatprep.subr.mxu0 0.0
        %1546 = vmatpush1.msra.mxu0 0.0
        %1547 = vmatprep.subr.mxu0 0.0
        %1548 = vmatpush1.msra.mxu0 0.0
        %1549 = vmatprep.subr.mxu0 0.0
        %1550 = vmatpush1.msra.mxu0 0.0
        %1551 = vmatprep.subr.mxu0 0.0
        %1552 = vmatpush1.msra.mxu0 %v1386
        %1553 = vmatprep.subr.mxu0 0.0
        %1554 = vmatpush1.msra.mxu0 %v1385
        %1555 = vmatprep.subr.mxu0 0.0
        %1556 = vmatpush1.msra.mxu0 %v1384
        %1557 = vmatprep.subr.mxu0 0.0
        %1558 = vmatpush1.msra.mxu0 %v1383
        %1559 = vmatprep.subr.mxu0 0.0
        %1560 = vmatpush2.msra.mxu0 0.0
        %1561 = vmatprep.subr.mxu0 0.0
        %1562 = vmatpush2.msra.mxu0 0.0
        %1563 = vmatprep.subr.mxu0 0.0
        %1564 = vmatpush2.msra.mxu0 0.0
        %1565 = vmatprep.subr.mxu0 0.0
        %1566 = vmatpush2.msra.mxu0 0.0
        %1567 = vmatprep.subr.mxu0 0.0
        %1568 = vmatpush2.msra.mxu0 0.0
        %1569 = vmatprep.subr.mxu0 0.0
        %1570 = vmatpush2.msra.mxu0 0.0
        %1571 = vmatprep.subr.mxu0 0.0
        %1572 = vmatpush2.msra.mxu0 0.0
        %1573 = vmatprep.subr.mxu0 0.0
        %1574 = vmatpush2.msra.mxu0 0.0
        %1575 = vmatprep.subr.mxu0 0.0
        %1576 = vmatpush2.msra.mxu0 0.0
        %1577 = vmatprep.subr.mxu0 0.0
        %1578 = vmatpush2.msra.mxu0 0.0
        %1579 = vmatprep.subr.mxu0 0.0
        %1580 = vmatpush2.msra.mxu0 0.0
        %1581 = vmatprep.subr.mxu0 0.0
        %1582 = vmatpush2.msra.mxu0 0.0
        %1583 = vmatprep.subr.mxu0 0.0
        %1584 = vmatpush2.msra.mxu0 0.0
        %1585 = vmatprep.subr.mxu0 0.0
        %1586 = vmatpush2.msra.mxu0 0.0
        %1587 = vmatprep.subr.mxu0 0.0
        %1588 = vmatpush2.msra.mxu0 0.0
        %1589 = vmatprep.subr.mxu0 0.0
        %1590 = vmatpush2.msra.mxu0 0.0
        %1591 = vmatprep.mubr.f32.mxu0 0.0
        %1592 = vmatmul.mubr.f32.gmra.mxu0 %v461
        %v1593 = vpop.f32.mrf.mxu0
        %v1594 = vadd.f32 0.0, %v1593
        %v1595 = vpop.f32.mrf.mxu0
        %1596 = vdwg.mxu0
        %v1598 = vsel %vm673, %v1454, 0
        %v1601 = vsel %vm673, %v1524, 0
        %1603 = vmatprep.subr.mxu0 0.0
        %1604 = vmatpush1.xpose.msra.mxu0 0.0
        %1605 = vmatprep.subr.mxu0 0.0
        %1606 = vmatpush1.xpose.msra.mxu0 0.0
        %1607 = vmatprep.subr.mxu0 0.0
        %1608 = vmatpush1.xpose.msra.mxu0 0.0
        %1609 = vmatprep.subr.mxu0 0.0
        %1610 = vmatpush1.xpose.msra.mxu0 0.0
        %1611 = vmatprep.subr.mxu0 0.0
        %1612 = vmatpush1.xpose.msra.mxu0 0.0
        %1613 = vmatprep.subr.mxu0 0.0
        %1614 = vmatpush1.xpose.msra.mxu0 0.0
        %1615 = vmatprep.subr.mxu0 0.0
        %1616 = vmatpush1.xpose.msra.mxu0 0.0
        %1617 = vmatprep.subr.mxu0 0.0
        %1618 = vmatpush1.xpose.msra.mxu0 0.0
        %1619 = vmatprep.subr.mxu0 0.0
        %1620 = vmatpush1.xpose.msra.mxu0 0.0
        %1621 = vmatprep.subr.mxu0 0.0
        %1622 = vmatpush1.xpose.msra.mxu0 0.0
        %1623 = vmatprep.subr.mxu0 0.0
        %1624 = vmatpush1.xpose.msra.mxu0 0.0
        %1625 = vmatprep.subr.mxu0 0.0
        %1626 = vmatpush1.xpose.msra.mxu0 0.0
        %1627 = vmatprep.subr.mxu0 0.0
        %1628 = vmatpush1.xpose.msra.mxu0 0.0
        %1629 = vmatprep.subr.mxu0 0.0
        %1630 = vmatpush1.xpose.msra.mxu0 0.0
        %1631 = vmatprep.subr.mxu0 0.0
        %1632 = vmatpush1.xpose.msra.mxu0 0.0
        %1633 = vmatprep.subr.mxu0 0.0
        %1634 = vmatpush1.xpose.msra.mxu0 %v1601
        %1635 = vmatprep.subr.mxu0 0.0
        %1636 = vmatpush2.xpose.msra.mxu0 0.0
        %1637 = vmatprep.subr.mxu0 0.0
        %1638 = vmatpush2.xpose.msra.mxu0 0.0
        %1639 = vmatprep.subr.mxu0 0.0
        %1640 = vmatpush2.xpose.msra.mxu0 0.0
        %1641 = vmatprep.subr.mxu0 0.0
        %1642 = vmatpush2.xpose.msra.mxu0 0.0
        %1643 = vmatprep.subr.mxu0 0.0
        %1644 = vmatpush2.xpose.msra.mxu0 0.0
        %1645 = vmatprep.subr.mxu0 0.0
        %1646 = vmatpush2.xpose.msra.mxu0 0.0
        %1647 = vmatprep.subr.mxu0 0.0
        %1648 = vmatpush2.xpose.msra.mxu0 0.0
        %1649 = vmatprep.subr.mxu0 0.0
        %1650 = vmatpush2.xpose.msra.mxu0 0.0
        %1651 = vmatprep.subr.mxu0 0.0
        %1652 = vmatpush2.xpose.msra.mxu0 0.0
        %1653 = vmatprep.subr.mxu0 0.0
        %1654 = vmatpush2.xpose.msra.mxu0 0.0
        %1655 = vmatprep.subr.mxu0 0.0
        %1656 = vmatpush2.xpose.msra.mxu0 0.0
        %1657 = vmatprep.subr.mxu0 0.0
        %1658 = vmatpush2.xpose.msra.mxu0 0.0
        %1659 = vmatprep.subr.mxu0 0.0
        %1660 = vmatpush2.xpose.msra.mxu0 0.0
        %1661 = vmatprep.subr.mxu0 0.0
        %1662 = vmatpush2.xpose.msra.mxu0 0.0
        %1663 = vmatprep.subr.mxu0 0.0
        %1664 = vmatpush2.xpose.msra.mxu0 0.0
        %1665 = vmatprep.subr.mxu0 0.0
        %1666 = vmatpush2.xpose.msra.mxu0 0.0
        %1667 = vmatprep.mubr.f32.mxu0 0.0
        %1668 = vmatmul.mubr.f32.gmra.mxu0 %v1598
        %v1669 = vpop.f32.mrf.mxu0
        %v1670 = vadd.f32 0.0, %v1669
        %v1671 = vpop.f32.mrf.mxu0
        %1672 = vdwg.mxu0
        %v1673 = vmul.f32 %v1670, 0.35355338
        %v1674 = vsel %vm673, %v1673, -inf
        %1675 = vmax.xlane.f32.xlu0 %v1674
        %v1676 = vpop.xlane.xlu0 %1675
        %v1677 = vsub.f32 %v1673, %v1676
        %v1678 = vmul.f32 %v1677, 1.442695
        %v1679 = vpow.pop %v1678
        %v1680 = vsel %vm673, %v1679, 0.0
        %1681 = vadd.xlane.f32.xlu0 %v1680
        %v1682 = vpop.xlane.xlu0 %1681
        %v1683 = vrcp.pop %v1682
        %v1684 = vmul.f32 %v1679, %v1683
        %v1686 = vsel %vm673, %v1684, 0
        %1688 = vmatprep.subr.mxu0 0.0
        %1689 = vmatpush1.msra.mxu0 0.0
        %1690 = vmatprep.subr.mxu0 0.0
        %1691 = vmatpush1.msra.mxu0 0.0
        %1692 = vmatprep.subr.mxu0 0.0
        %1693 = vmatpush1.msra.mxu0 0.0
        %1694 = vmatprep.subr.mxu0 0.0
        %1695 = vmatpush1.msra.mxu0 0.0
        %1696 = vmatprep.subr.mxu0 0.0
        %1697 = vmatpush1.msra.mxu0 0.0
        %1698 = vmatprep.subr.mxu0 0.0
        %1699 = vmatpush1.msra.mxu0 0.0
        %1700 = vmatprep.subr.mxu0 0.0
        %1701 = vmatpush1.msra.mxu0 0.0
        %1702 = vmatprep.subr.mxu0 0.0
        %1703 = vmatpush1.msra.mxu0 0.0
        %1704 = vmatprep.subr.mxu0 0.0
        %1705 = vmatpush1.msra.mxu0 0.0
        %1706 = vmatprep.subr.mxu0 0.0
        %1707 = vmatpush1.msra.mxu0 0.0
        %1708 = vmatprep.subr.mxu0 0.0
        %1709 = vmatpush1.msra.mxu0 0.0
        %1710 = vmatprep.subr.mxu0 0.0
        %1711 = vmatpush1.msra.mxu0 0.0
        %1712 = vmatprep.subr.mxu0 0.0
        %1713 = vmatpush1.msra.mxu0 0.0
        %1714 = vmatprep.subr.mxu0 0.0
        %1715 = vmatpush1.msra.mxu0 0.0
        %1716 = vmatprep.subr.mxu0 0.0
        %1717 = vmatpush1.msra.mxu0 0.0
        %1718 = vmatprep.subr.mxu0 0.0
        %1719 = vmatpush1.msra.mxu0 %v1594
        %1720 = vmatprep.subr.mxu0 0.0
        %1721 = vmatpush2.msra.mxu0 0.0
        %1722 = vmatprep.subr.mxu0 0.0
        %1723 = vmatpush2.msra.mxu0 0.0
        %1724 = vmatprep.subr.mxu0 0.0
        %1725 = vmatpush2.msra.mxu0 0.0
        %1726 = vmatprep.subr.mxu0 0.0
        %1727 = vmatpush2.msra.mxu0 0.0
        %1728 = vmatprep.subr.mxu0 0.0
        %1729 = vmatpush2.msra.mxu0 0.0
        %1730 = vmatprep.subr.mxu0 0.0
        %1731 = vmatpush2.msra.mxu0 0.0
        %1732 = vmatprep.subr.mxu0 0.0
        %1733 = vmatpush2.msra.mxu0 0.0
        %1734 = vmatprep.subr.mxu0 0.0
        %1735 = vmatpush2.msra.mxu0 0.0
        %1736 = vmatprep.subr.mxu0 0.0
        %1737 = vmatpush2.msra.mxu0 0.0
        %1738 = vmatprep.subr.mxu0 0.0
        %1739 = vmatpush2.msra.mxu0 0.0
        %1740 = vmatprep.subr.mxu0 0.0
        %1741 = vmatpush2.msra.mxu0 0.0
        %1742 = vmatprep.subr.mxu0 0.0
        %1743 = vmatpush2.msra.mxu0 0.0
        %1744 = vmatprep.subr.mxu0 0.0
        %1745 = vmatpush2.msra.mxu0 0.0
        %1746 = vmatprep.subr.mxu0 0.0
        %1747 = vmatpush2.msra.mxu0 0.0
        %1748 = vmatprep.subr.mxu0 0.0
        %1749 = vmatpush2.msra.mxu0 0.0
        %1750 = vmatprep.subr.mxu0 0.0
        %1751 = vmatpush2.msra.mxu0 0.0
        %1752 = vmatprep.mubr.f32.mxu0 0.0
        %1753 = vmatmul.mubr.f32.gmra.mxu0 %v1686
        %v1754 = vpop.f32.mrf.mxu0
        %v1755 = vadd.f32 0.0, %v1754
        %v1756 = vpop.f32.mrf.mxu0
        %1757 = vdwg.mxu0
        %s1758 = scalar_lea.vmem %s3, 16
        %v1759 = vld [vmem:[%s1758] sm:$0xff]
        %v1761 = vsel %vm673, %v1755, 0
        %1763 = vmatprep.subr.mxu0 0.0
        %1764 = vmatpush1.msra.mxu0 0.0
        %1765 = vmatprep.subr.mxu0 0.0
        %1766 = vmatpush1.msra.mxu0 0.0
        %1767 = vmatprep.subr.mxu0 0.0
        %1768 = vmatpush1.msra.mxu0 0.0
        %1769 = vmatprep.subr.mxu0 0.0
        %1770 = vmatpush1.msra.mxu0 0.0
        %1771 = vmatprep.subr.mxu0 0.0
        %1772 = vmatpush1.msra.mxu0 0.0
        %1773 = vmatprep.subr.mxu0 0.0
        %1774 = vmatpush1.msra.mxu0 0.0
        %1775 = vmatprep.subr.mxu0 0.0
        %1776 = vmatpush1.msra.mxu0 0.0
        %1777 = vmatprep.subr.mxu0 0.0
        %1778 = vmatpush1.msra.mxu0 0.0
        %1779 = vmatprep.subr.mxu0 0.0
        %1780 = vmatpush1.msra.mxu0 0.0
        %1781 = vmatprep.subr.mxu0 0.0
        %1782 = vmatpush1.msra.mxu0 0.0
        %1783 = vmatprep.subr.mxu0 0.0
        %1784 = vmatpush1.msra.mxu0 0.0
        %1785 = vmatprep.subr.mxu0 0.0
        %1786 = vmatpush1.msra.mxu0 0.0
        %1787 = vmatprep.subr.mxu0 0.0
        %1788 = vmatpush1.msra.mxu0 0.0
        %1789 = vmatprep.subr.mxu0 0.0
        %1790 = vmatpush1.msra.mxu0 0.0
        %1791 = vmatprep.subr.mxu0 0.0
        %1792 = vmatpush1.msra.mxu0 0.0
        %1793 = vmatprep.subr.mxu0 0.0
        %1794 = vmatpush1.msra.mxu0 %v1759
        %1795 = vmatprep.subr.mxu0 0.0
        %1796 = vmatpush2.msra.mxu0 0.0
        %1797 = vmatprep.subr.mxu0 0.0
        %1798 = vmatpush2.msra.mxu0 0.0
        %1799 = vmatprep.subr.mxu0 0.0
        %1800 = vmatpush2.msra.mxu0 0.0
        %1801 = vmatprep.subr.mxu0 0.0
        %1802 = vmatpush2.msra.mxu0 0.0
        %1803 = vmatprep.subr.mxu0 0.0
        %1804 = vmatpush2.msra.mxu0 0.0
        %1805 = vmatprep.subr.mxu0 0.0
        %1806 = vmatpush2.msra.mxu0 0.0
        %1807 = vmatprep.subr.mxu0 0.0
        %1808 = vmatpush2.msra.mxu0 0.0
        %1809 = vmatprep.subr.mxu0 0.0
        %1810 = vmatpush2.msra.mxu0 0.0
        %1811 = vmatprep.subr.mxu0 0.0
        %1812 = vmatpush2.msra.mxu0 0.0
        %1813 = vmatprep.subr.mxu0 0.0
        %1814 = vmatpush2.msra.mxu0 0.0
        %1815 = vmatprep.subr.mxu0 0.0
        %1816 = vmatpush2.msra.mxu0 0.0
        %1817 = vmatprep.subr.mxu0 0.0
        %1818 = vmatpush2.msra.mxu0 0.0
        %1819 = vmatprep.subr.mxu0 0.0
        %1820 = vmatpush2.msra.mxu0 0.0
        %1821 = vmatprep.subr.mxu0 0.0
        %1822 = vmatpush2.msra.mxu0 0.0
        %1823 = vmatprep.subr.mxu0 0.0
        %1824 = vmatpush2.msra.mxu0 0.0
        %1825 = vmatprep.subr.mxu0 0.0
        %1826 = vmatpush2.msra.mxu0 0.0
        %1827 = vmatprep.mubr.f32.mxu0 0.0
        %1828 = vmatmul.mubr.f32.gmra.mxu0 %v1761
        %v1829 = vpop.f32.mrf.mxu0
        %v1830 = vadd.f32 0.0, %v1829
        %v1831 = vpop.f32.mrf.mxu0
        %1832 = vdwg.mxu0
        %v1833 = vadd.f32 %v1371, %v1830
        %s1834 = scalar_lea.vmem %s2, 96
        %v1835 = vld [vmem:[%s1834] sm:$0xff]
        %v1836 = vld [vmem:[%s1834 + $0x8] sm:$0xff]
        %v1837 = vld [vmem:[%s1834 + $0x10] sm:$0xff]
        %v1838 = vld [vmem:[%s1834 + $0x18] sm:$0xff]
        %s1839 = scalar_lea.vmem %s2, 224
        %v1840 = vld [vmem:[%s1839] sm:$0xff]
        %v1841 = vld [vmem:[%s1839 + $0x8] sm:$0xff]
        %v1842 = vld [vmem:[%s1839 + $0x10] sm:$0xff]
        %v1843 = vld [vmem:[%s1839 + $0x18] sm:$0xff]
        %s1844 = scalar_lea.vmem %s2, 352
        %v1845 = vld [vmem:[%s1844] sm:$0xff]
        %v1846 = vld [vmem:[%s1844 + $0x8] sm:$0xff]
        %v1847 = vld [vmem:[%s1844 + $0x10] sm:$0xff]
        %v1848 = vld [vmem:[%s1844 + $0x18] sm:$0xff]
        %1849 = vmatprep.subr.mxu0 0.0
        %1850 = vmatpush1.msra.mxu0 0.0
        %1851 = vmatprep.subr.mxu0 0.0
        %1852 = vmatpush1.msra.mxu0 0.0
        %1853 = vmatprep.subr.mxu0 0.0
        %1854 = vmatpush1.msra.mxu0 0.0
        %1855 = vmatprep.subr.mxu0 0.0
        %1856 = vmatpush1.msra.mxu0 0.0
        %1857 = vmatprep.subr.mxu0 0.0
        %1858 = vmatpush1.msra.mxu0 0.0
        %1859 = vmatprep.subr.mxu0 0.0
        %1860 = vmatpush1.msra.mxu0 0.0
        %1861 = vmatprep.subr.mxu0 0.0
        %1862 = vmatpush1.msra.mxu0 0.0
        %1863 = vmatprep.subr.mxu0 0.0
        %1864 = vmatpush1.msra.mxu0 0.0
        %1865 = vmatprep.subr.mxu0 0.0
        %1866 = vmatpush1.msra.mxu0 0.0
        %1867 = vmatprep.subr.mxu0 0.0
        %1868 = vmatpush1.msra.mxu0 0.0
        %1869 = vmatprep.subr.mxu0 0.0
        %1870 = vmatpush1.msra.mxu0 0.0
        %1871 = vmatprep.subr.mxu0 0.0
        %1872 = vmatpush1.msra.mxu0 0.0
        %1873 = vmatprep.subr.mxu0 0.0
        %1874 = vmatpush1.msra.mxu0 %v1838
        %1875 = vmatprep.subr.mxu0 0.0
        %1876 = vmatpush1.msra.mxu0 %v1837
        %1877 = vmatprep.subr.mxu0 0.0
        %1878 = vmatpush1.msra.mxu0 %v1836
        %1879 = vmatprep.subr.mxu0 0.0
        %1880 = vmatpush1.msra.mxu0 %v1835
        %1881 = vmatprep.subr.mxu0 0.0
        %1882 = vmatpush2.msra.mxu0 0.0
        %1883 = vmatprep.subr.mxu0 0.0
        %1884 = vmatpush2.msra.mxu0 0.0
        %1885 = vmatprep.subr.mxu0 0.0
        %1886 = vmatpush2.msra.mxu0 0.0
        %1887 = vmatprep.subr.mxu0 0.0
        %1888 = vmatpush2.msra.mxu0 0.0
        %1889 = vmatprep.subr.mxu0 0.0
        %1890 = vmatpush2.msra.mxu0 0.0
        %1891 = vmatprep.subr.mxu0 0.0
        %1892 = vmatpush2.msra.mxu0 0.0
        %1893 = vmatprep.subr.mxu0 0.0
        %1894 = vmatpush2.msra.mxu0 0.0
        %1895 = vmatprep.subr.mxu0 0.0
        %1896 = vmatpush2.msra.mxu0 0.0
        %1897 = vmatprep.subr.mxu0 0.0
        %1898 = vmatpush2.msra.mxu0 0.0
        %1899 = vmatprep.subr.mxu0 0.0
        %1900 = vmatpush2.msra.mxu0 0.0
        %1901 = vmatprep.subr.mxu0 0.0
        %1902 = vmatpush2.msra.mxu0 0.0
        %1903 = vmatprep.subr.mxu0 0.0
        %1904 = vmatpush2.msra.mxu0 0.0
        %1905 = vmatprep.subr.mxu0 0.0
        %1906 = vmatpush2.msra.mxu0 0.0
        %1907 = vmatprep.subr.mxu0 0.0
        %1908 = vmatpush2.msra.mxu0 0.0
        %1909 = vmatprep.subr.mxu0 0.0
        %1910 = vmatpush2.msra.mxu0 0.0
        %1911 = vmatprep.subr.mxu0 0.0
        %1912 = vmatpush2.msra.mxu0 0.0
        %1913 = vmatprep.mubr.f32.mxu0 0.0
        %1914 = vmatmul.mubr.f32.gmra.mxu0 %v461
        %v1915 = vpop.f32.mrf.mxu0
        %v1916 = vadd.f32 0.0, %v1915
        %v1917 = vpop.f32.mrf.mxu0
        %1918 = vdwg.mxu0
        %1919 = vmatprep.subr.mxu0 0.0
        %1920 = vmatpush1.msra.mxu0 0.0
        %1921 = vmatprep.subr.mxu0 0.0
        %1922 = vmatpush1.msra.mxu0 0.0
        %1923 = vmatprep.subr.mxu0 0.0
        %1924 = vmatpush1.msra.mxu0 0.0
        %1925 = vmatprep.subr.mxu0 0.0
        %1926 = vmatpush1.msra.mxu0 0.0
        %1927 = vmatprep.subr.mxu0 0.0
        %1928 = vmatpush1.msra.mxu0 0.0
        %1929 = vmatprep.subr.mxu0 0.0
        %1930 = vmatpush1.msra.mxu0 0.0
        %1931 = vmatprep.subr.mxu0 0.0
        %1932 = vmatpush1.msra.mxu0 0.0
        %1933 = vmatprep.subr.mxu0 0.0
        %1934 = vmatpush1.msra.mxu0 0.0
        %1935 = vmatprep.subr.mxu0 0.0
        %1936 = vmatpush1.msra.mxu0 0.0
        %1937 = vmatprep.subr.mxu0 0.0
        %1938 = vmatpush1.msra.mxu0 0.0
        %1939 = vmatprep.subr.mxu0 0.0
        %1940 = vmatpush1.msra.mxu0 0.0
        %1941 = vmatprep.subr.mxu0 0.0
        %1942 = vmatpush1.msra.mxu0 0.0
        %1943 = vmatprep.subr.mxu0 0.0
        %1944 = vmatpush1.msra.mxu0 %v1843
        %1945 = vmatprep.subr.mxu0 0.0
        %1946 = vmatpush1.msra.mxu0 %v1842
        %1947 = vmatprep.subr.mxu0 0.0
        %1948 = vmatpush1.msra.mxu0 %v1841
        %1949 = vmatprep.subr.mxu0 0.0
        %1950 = vmatpush1.msra.mxu0 %v1840
        %1951 = vmatprep.subr.mxu0 0.0
        %1952 = vmatpush2.msra.mxu0 0.0
        %1953 = vmatprep.subr.mxu0 0.0
        %1954 = vmatpush2.msra.mxu0 0.0
        %1955 = vmatprep.subr.mxu0 0.0
        %1956 = vmatpush2.msra.mxu0 0.0
        %1957 = vmatprep.subr.mxu0 0.0
        %1958 = vmatpush2.msra.mxu0 0.0
        %1959 = vmatprep.subr.mxu0 0.0
        %1960 = vmatpush2.msra.mxu0 0.0
        %1961 = vmatprep.subr.mxu0 0.0
        %1962 = vmatpush2.msra.mxu0 0.0
        %1963 = vmatprep.subr.mxu0 0.0
        %1964 = vmatpush2.msra.mxu0 0.0
        %1965 = vmatprep.subr.mxu0 0.0
        %1966 = vmatpush2.msra.mxu0 0.0
        %1967 = vmatprep.subr.mxu0 0.0
        %1968 = vmatpush2.msra.mxu0 0.0
        %1969 = vmatprep.subr.mxu0 0.0
        %1970 = vmatpush2.msra.mxu0 0.0
        %1971 = vmatprep.subr.mxu0 0.0
        %1972 = vmatpush2.msra.mxu0 0.0
        %1973 = vmatprep.subr.mxu0 0.0
        %1974 = vmatpush2.msra.mxu0 0.0
        %1975 = vmatprep.subr.mxu0 0.0
        %1976 = vmatpush2.msra.mxu0 0.0
        %1977 = vmatprep.subr.mxu0 0.0
        %1978 = vmatpush2.msra.mxu0 0.0
        %1979 = vmatprep.subr.mxu0 0.0
        %1980 = vmatpush2.msra.mxu0 0.0
        %1981 = vmatprep.subr.mxu0 0.0
        %1982 = vmatpush2.msra.mxu0 0.0
        %1983 = vmatprep.mubr.f32.mxu0 0.0
        %1984 = vmatmul.mubr.f32.gmra.mxu0 %v461
        %v1985 = vpop.f32.mrf.mxu0
        %v1986 = vadd.f32 0.0, %v1985
        %v1987 = vpop.f32.mrf.mxu0
        %1988 = vdwg.mxu0
        %1989 = vmatprep.subr.mxu0 0.0
        %1990 = vmatpush1.msra.mxu0 0.0
        %1991 = vmatprep.subr.mxu0 0.0
        %1992 = vmatpush1.msra.mxu0 0.0
        %1993 = vmatprep.subr.mxu0 0.0
        %1994 = vmatpush1.msra.mxu0 0.0
        %1995 = vmatprep.subr.mxu0 0.0
        %1996 = vmatpush1.msra.mxu0 0.0
        %1997 = vmatprep.subr.mxu0 0.0
        %1998 = vmatpush1.msra.mxu0 0.0
        %1999 = vmatprep.subr.mxu0 0.0
        %2000 = vmatpush1.msra.mxu0 0.0
        %2001 = vmatprep.subr.mxu0 0.0
        %2002 = vmatpush1.msra.mxu0 0.0
        %2003 = vmatprep.subr.mxu0 0.0
        %2004 = vmatpush1.msra.mxu0 0.0
        %2005 = vmatprep.subr.mxu0 0.0
        %2006 = vmatpush1.msra.mxu0 0.0
        %2007 = vmatprep.subr.mxu0 0.0
        %2008 = vmatpush1.msra.mxu0 0.0
        %2009 = vmatprep.subr.mxu0 0.0
        %2010 = vmatpush1.msra.mxu0 0.0
        %2011 = vmatprep.subr.mxu0 0.0
        %2012 = vmatpush1.msra.mxu0 0.0
        %2013 = vmatprep.subr.mxu0 0.0
        %2014 = vmatpush1.msra.mxu0 %v1848
        %2015 = vmatprep.subr.mxu0 0.0
        %2016 = vmatpush1.msra.mxu0 %v1847
        %2017 = vmatprep.subr.mxu0 0.0
        %2018 = vmatpush1.msra.mxu0 %v1846
        %2019 = vmatprep.subr.mxu0 0.0
        %2020 = vmatpush1.msra.mxu0 %v1845
        %2021 = vmatprep.subr.mxu0 0.0
        %2022 = vmatpush2.msra.mxu0 0.0
        %2023 = vmatprep.subr.mxu0 0.0
        %2024 = vmatpush2.msra.mxu0 0.0
        %2025 = vmatprep.subr.mxu0 0.0
        %2026 = vmatpush2.msra.mxu0 0.0
        %2027 = vmatprep.subr.mxu0 0.0
        %2028 = vmatpush2.msra.mxu0 0.0
        %2029 = vmatprep.subr.mxu0 0.0
        %2030 = vmatpush2.msra.mxu0 0.0
        %2031 = vmatprep.subr.mxu0 0.0
        %2032 = vmatpush2.msra.mxu0 0.0
        %2033 = vmatprep.subr.mxu0 0.0
        %2034 = vmatpush2.msra.mxu0 0.0
        %2035 = vmatprep.subr.mxu0 0.0
        %2036 = vmatpush2.msra.mxu0 0.0
        %2037 = vmatprep.subr.mxu0 0.0
        %2038 = vmatpush2.msra.mxu0 0.0
        %2039 = vmatprep.subr.mxu0 0.0
        %2040 = vmatpush2.msra.mxu0 0.0
        %2041 = vmatprep.subr.mxu0 0.0
        %2042 = vmatpush2.msra.mxu0 0.0
        %2043 = vmatprep.subr.mxu0 0.0
        %2044 = vmatpush2.msra.mxu0 0.0
        %2045 = vmatprep.subr.mxu0 0.0
        %2046 = vmatpush2.msra.mxu0 0.0
        %2047 = vmatprep.subr.mxu0 0.0
        %2048 = vmatpush2.msra.mxu0 0.0
        %2049 = vmatprep.subr.mxu0 0.0
        %2050 = vmatpush2.msra.mxu0 0.0
        %2051 = vmatprep.subr.mxu0 0.0
        %2052 = vmatpush2.msra.mxu0 0.0
        %2053 = vmatprep.mubr.f32.mxu0 0.0
        %2054 = vmatmul.mubr.f32.gmra.mxu0 %v461
        %v2055 = vpop.f32.mrf.mxu0
        %v2056 = vadd.f32 0.0, %v2055
        %v2057 = vpop.f32.mrf.mxu0
        %2058 = vdwg.mxu0
        %v2060 = vsel %vm673, %v1916, 0
        %v2063 = vsel %vm673, %v1986, 0
        %2065 = vmatprep.subr.mxu0 0.0
        %2066 = vmatpush1.xpose.msra.mxu0 0.0
        %2067 = vmatprep.subr.mxu0 0.0
        %2068 = vmatpush1.xpose.msra.mxu0 0.0
        %2069 = vmatprep.subr.mxu0 0.0
        %2070 = vmatpush1.xpose.msra.mxu0 0.0
        %2071 = vmatprep.subr.mxu0 0.0
        %2072 = vmatpush1.xpose.msra.mxu0 0.0
        %2073 = vmatprep.subr.mxu0 0.0
        %2074 = vmatpush1.xpose.msra.mxu0 0.0
        %2075 = vmatprep.subr.mxu0 0.0
        %2076 = vmatpush1.xpose.msra.mxu0 0.0
        %2077 = vmatprep.subr.mxu0 0.0
        %2078 = vmatpush1.xpose.msra.mxu0 0.0
        %2079 = vmatprep.subr.mxu0 0.0
        %2080 = vmatpush1.xpose.msra.mxu0 0.0
        %2081 = vmatprep.subr.mxu0 0.0
        %2082 = vmatpush1.xpose.msra.mxu0 0.0
        %2083 = vmatprep.subr.mxu0 0.0
        %2084 = vmatpush1.xpose.msra.mxu0 0.0
        %2085 = vmatprep.subr.mxu0 0.0
        %2086 = vmatpush1.xpose.msra.mxu0 0.0
        %2087 = vmatprep.subr.mxu0 0.0
        %2088 = vmatpush1.xpose.msra.mxu0 0.0
        %2089 = vmatprep.subr.mxu0 0.0
        %2090 = vmatpush1.xpose.msra.mxu0 0.0
        %2091 = vmatprep.subr.mxu0 0.0
        %2092 = vmatpush1.xpose.msra.mxu0 0.0
        %2093 = vmatprep.subr.mxu0 0.0
        %2094 = vmatpush1.xpose.msra.mxu0 0.0
        %2095 = vmatprep.subr.mxu0 0.0
        %2096 = vmatpush1.xpose.msra.mxu0 %v2063
        %2097 = vmatprep.subr.mxu0 0.0
        %2098 = vmatpush2.xpose.msra.mxu0 0.0
        %2099 = vmatprep.subr.mxu0 0.0
        %2100 = vmatpush2.xpose.msra.mxu0 0.0
        %2101 = vmatprep.subr.mxu0 0.0
        %2102 = vmatpush2.xpose.msra.mxu0 0.0
        %2103 = vmatprep.subr.mxu0 0.0
        %2104 = vmatpush2.xpose.msra.mxu0 0.0
        %2105 = vmatprep.subr.mxu0 0.0
        %2106 = vmatpush2.xpose.msra.mxu0 0.0
        %2107 = vmatprep.subr.mxu0 0.0
        %2108 = vmatpush2.xpose.msra.mxu0 0.0
        %2109 = vmatprep.subr.mxu0 0.0
        %2110 = vmatpush2.xpose.msra.mxu0 0.0
        %2111 = vmatprep.subr.mxu0 0.0
        %2112 = vmatpush2.xpose.msra.mxu0 0.0
        %2113 = vmatprep.subr.mxu0 0.0
        %2114 = vmatpush2.xpose.msra.mxu0 0.0
        %2115 = vmatprep.subr.mxu0 0.0
        %2116 = vmatpush2.xpose.msra.mxu0 0.0
        %2117 = vmatprep.subr.mxu0 0.0
        %2118 = vmatpush2.xpose.msra.mxu0 0.0
        %2119 = vmatprep.subr.mxu0 0.0
        %2120 = vmatpush2.xpose.msra.mxu0 0.0
        %2121 = vmatprep.subr.mxu0 0.0
        %2122 = vmatpush2.xpose.msra.mxu0 0.0
        %2123 = vmatprep.subr.mxu0 0.0
        %2124 = vmatpush2.xpose.msra.mxu0 0.0
        %2125 = vmatprep.subr.mxu0 0.0
        %2126 = vmatpush2.xpose.msra.mxu0 0.0
        %2127 = vmatprep.subr.mxu0 0.0
        %2128 = vmatpush2.xpose.msra.mxu0 0.0
        %2129 = vmatprep.mubr.f32.mxu0 0.0
        %2130 = vmatmul.mubr.f32.gmra.mxu0 %v2060
        %v2131 = vpop.f32.mrf.mxu0
        %v2132 = vadd.f32 0.0, %v2131
        %v2133 = vpop.f32.mrf.mxu0
        %2134 = vdwg.mxu0
        %v2135 = vmul.f32 %v2132, 0.35355338
        %v2136 = vsel %vm673, %v2135, -inf
        %2137 = vmax.xlane.f32.xlu0 %v2136
        %v2138 = vpop.xlane.xlu0 %2137
        %v2139 = vsub.f32 %v2135, %v2138
        %v2140 = vmul.f32 %v2139, 1.442695
        %v2141 = vpow.pop %v2140
        %v2142 = vsel %vm673, %v2141, 0.0
        %2143 = vadd.xlane.f32.xlu0 %v2142
        %v2144 = vpop.xlane.xlu0 %2143
        %v2145 = vrcp.pop %v2144
        %v2146 = vmul.f32 %v2141, %v2145
        %v2148 = vsel %vm673, %v2146, 0
        %2150 = vmatprep.subr.mxu0 0.0
        %2151 = vmatpush1.msra.mxu0 0.0
        %2152 = vmatprep.subr.mxu0 0.0
        %2153 = vmatpush1.msra.mxu0 0.0
        %2154 = vmatprep.subr.mxu0 0.0
        %2155 = vmatpush1.msra.mxu0 0.0
        %2156 = vmatprep.subr.mxu0 0.0
        %2157 = vmatpush1.msra.mxu0 0.0
        %2158 = vmatprep.subr.mxu0 0.0
        %2159 = vmatpush1.msra.mxu0 0.0
        %2160 = vmatprep.subr.mxu0 0.0
        %2161 = vmatpush1.msra.mxu0 0.0
        %2162 = vmatprep.subr.mxu0 0.0
        %2163 = vmatpush1.msra.mxu0 0.0
        %2164 = vmatprep.subr.mxu0 0.0
        %2165 = vmatpush1.msra.mxu0 0.0
        %2166 = vmatprep.subr.mxu0 0.0
        %2167 = vmatpush1.msra.mxu0 0.0
        %2168 = vmatprep.subr.mxu0 0.0
        %2169 = vmatpush1.msra.mxu0 0.0
        %2170 = vmatprep.subr.mxu0 0.0
        %2171 = vmatpush1.msra.mxu0 0.0
        %2172 = vmatprep.subr.mxu0 0.0
        %2173 = vmatpush1.msra.mxu0 0.0
        %2174 = vmatprep.subr.mxu0 0.0
        %2175 = vmatpush1.msra.mxu0 0.0
        %2176 = vmatprep.subr.mxu0 0.0
        %2177 = vmatpush1.msra.mxu0 0.0
        %2178 = vmatprep.subr.mxu0 0.0
        %2179 = vmatpush1.msra.mxu0 0.0
        %2180 = vmatprep.subr.mxu0 0.0
        %2181 = vmatpush1.msra.mxu0 %v2056
        %2182 = vmatprep.subr.mxu0 0.0
        %2183 = vmatpush2.msra.mxu0 0.0
        %2184 = vmatprep.subr.mxu0 0.0
        %2185 = vmatpush2.msra.mxu0 0.0
        %2186 = vmatprep.subr.mxu0 0.0
        %2187 = vmatpush2.msra.mxu0 0.0
        %2188 = vmatprep.subr.mxu0 0.0
        %2189 = vmatpush2.msra.mxu0 0.0
        %2190 = vmatprep.subr.mxu0 0.0
        %2191 = vmatpush2.msra.mxu0 0.0
        %2192 = vmatprep.subr.mxu0 0.0
        %2193 = vmatpush2.msra.mxu0 0.0
        %2194 = vmatprep.subr.mxu0 0.0
        %2195 = vmatpush2.msra.mxu0 0.0
        %2196 = vmatprep.subr.mxu0 0.0
        %2197 = vmatpush2.msra.mxu0 0.0
        %2198 = vmatprep.subr.mxu0 0.0
        %2199 = vmatpush2.msra.mxu0 0.0
        %2200 = vmatprep.subr.mxu0 0.0
        %2201 = vmatpush2.msra.mxu0 0.0
        %2202 = vmatprep.subr.mxu0 0.0
        %2203 = vmatpush2.msra.mxu0 0.0
        %2204 = vmatprep.subr.mxu0 0.0
        %2205 = vmatpush2.msra.mxu0 0.0
        %2206 = vmatprep.subr.mxu0 0.0
        %2207 = vmatpush2.msra.mxu0 0.0
        %2208 = vmatprep.subr.mxu0 0.0
        %2209 = vmatpush2.msra.mxu0 0.0
        %2210 = vmatprep.subr.mxu0 0.0
        %2211 = vmatpush2.msra.mxu0 0.0
        %2212 = vmatprep.subr.mxu0 0.0
        %2213 = vmatpush2.msra.mxu0 0.0
        %2214 = vmatprep.mubr.f32.mxu0 0.0
        %2215 = vmatmul.mubr.f32.gmra.mxu0 %v2148
        %v2216 = vpop.f32.mrf.mxu0
        %v2217 = vadd.f32 0.0, %v2216
        %v2218 = vpop.f32.mrf.mxu0
        %2219 = vdwg.mxu0
        %s2220 = scalar_lea.vmem %s3, 24
        %v2221 = vld [vmem:[%s2220] sm:$0xff]
        %v2223 = vsel %vm673, %v2217, 0
        %2225 = vmatprep.subr.mxu0 0.0
        %2226 = vmatpush1.msra.mxu0 0.0
        %2227 = vmatprep.subr.mxu0 0.0
        %2228 = vmatpush1.msra.mxu0 0.0
        %2229 = vmatprep.subr.mxu0 0.0
        %2230 = vmatpush1.msra.mxu0 0.0
        %2231 = vmatprep.subr.mxu0 0.0
        %2232 = vmatpush1.msra.mxu0 0.0
        %2233 = vmatprep.subr.mxu0 0.0
        %2234 = vmatpush1.msra.mxu0 0.0
        %2235 = vmatprep.subr.mxu0 0.0
        %2236 = vmatpush1.msra.mxu0 0.0
        %2237 = vmatprep.subr.mxu0 0.0
        %2238 = vmatpush1.msra.mxu0 0.0
        %2239 = vmatprep.subr.mxu0 0.0
        %2240 = vmatpush1.msra.mxu0 0.0
        %2241 = vmatprep.subr.mxu0 0.0
        %2242 = vmatpush1.msra.mxu0 0.0
        %2243 = vmatprep.subr.mxu0 0.0
        %2244 = vmatpush1.msra.mxu0 0.0
        %2245 = vmatprep.subr.mxu0 0.0
        %2246 = vmatpush1.msra.mxu0 0.0
        %2247 = vmatprep.subr.mxu0 0.0
        %2248 = vmatpush1.msra.mxu0 0.0
        %2249 = vmatprep.subr.mxu0 0.0
        %2250 = vmatpush1.msra.mxu0 0.0
        %2251 = vmatprep.subr.mxu0 0.0
        %2252 = vmatpush1.msra.mxu0 0.0
        %2253 = vmatprep.subr.mxu0 0.0
        %2254 = vmatpush1.msra.mxu0 0.0
        %2255 = vmatprep.subr.mxu0 0.0
        %2256 = vmatpush1.msra.mxu0 %v2221
        %2257 = vmatprep.subr.mxu0 0.0
        %2258 = vmatpush2.msra.mxu0 0.0
        %2259 = vmatprep.subr.mxu0 0.0
        %2260 = vmatpush2.msra.mxu0 0.0
        %2261 = vmatprep.subr.mxu0 0.0
        %2262 = vmatpush2.msra.mxu0 0.0
        %2263 = vmatprep.subr.mxu0 0.0
        %2264 = vmatpush2.msra.mxu0 0.0
        %2265 = vmatprep.subr.mxu0 0.0
        %2266 = vmatpush2.msra.mxu0 0.0
        %2267 = vmatprep.subr.mxu0 0.0
        %2268 = vmatpush2.msra.mxu0 0.0
        %2269 = vmatprep.subr.mxu0 0.0
        %2270 = vmatpush2.msra.mxu0 0.0
        %2271 = vmatprep.subr.mxu0 0.0
        %2272 = vmatpush2.msra.mxu0 0.0
        %2273 = vmatprep.subr.mxu0 0.0
        %2274 = vmatpush2.msra.mxu0 0.0
        %2275 = vmatprep.subr.mxu0 0.0
        %2276 = vmatpush2.msra.mxu0 0.0
        %2277 = vmatprep.subr.mxu0 0.0
        %2278 = vmatpush2.msra.mxu0 0.0
        %2279 = vmatprep.subr.mxu0 0.0
        %2280 = vmatpush2.msra.mxu0 0.0
        %2281 = vmatprep.subr.mxu0 0.0
        %2282 = vmatpush2.msra.mxu0 0.0
        %2283 = vmatprep.subr.mxu0 0.0
        %2284 = vmatpush2.msra.mxu0 0.0
        %2285 = vmatprep.subr.mxu0 0.0
        %2286 = vmatpush2.msra.mxu0 0.0
        %2287 = vmatprep.subr.mxu0 0.0
        %2288 = vmatpush2.msra.mxu0 0.0
        %2289 = vmatprep.mubr.f32.mxu0 0.0
        %2290 = vmatmul.mubr.f32.gmra.mxu0 %v2223
        %v2291 = vpop.f32.mrf.mxu0
        %v2292 = vadd.f32 0.0, %v2291
        %v2293 = vpop.f32.mrf.mxu0
        %2294 = vdwg.mxu0
        %v2295 = vadd.f32 %v1833, %v2292
        %v2296 = vld [vmem:[%s6] sm:$0xf]
        %s2297 = scalar_lea.vmem %s6, 4
        %v2298 = vld [vmem:[%s2297] sm:$0xf]
        %v2299 = vld [vmem:[%s4] sm:$0xff]
        %v2300 = vld [vmem:[%s4 + $0x8] sm:$0xff]
        %v2301 = vld [vmem:[%s4 + $0x10] sm:$0xff]
        %v2302 = vld [vmem:[%s4 + $0x18] sm:$0xff]
        %v2303 = vld [vmem:[%s4 + $0x20] sm:$0xff]
        %v2304 = vld [vmem:[%s4 + $0x28] sm:$0xff]
        %v2305 = vld [vmem:[%s4 + $0x30] sm:$0xff]
        %v2306 = vld [vmem:[%s4 + $0x38] sm:$0xff]
        %v2307 = vld [vmem:[%s4 + $0x40] sm:$0xff]
        %v2308 = vld [vmem:[%s4 + $0x48] sm:$0xff]
        %v2309 = vld [vmem:[%s4 + $0x50] sm:$0xff]
        %v2310 = vld [vmem:[%s4 + $0x58] sm:$0xff]
        %v2311 = vld [vmem:[%s4 + $0x60] sm:$0xff]
        %v2312 = vld [vmem:[%s4 + $0x68] sm:$0xff]
        %v2313 = vld [vmem:[%s4 + $0x70] sm:$0xff]
        %v2314 = vld [vmem:[%s4 + $0x78] sm:$0xff]
        %v2316 = vlaneseq
        %v2317 = vshrl.u32 %v2316, 7
        %v2318 = vsub.s32 0, %v2317
        %v2319 = vrot.slane %v2296, %v2318
        %v2320 = vlaneseq
        %v2321 = vshrl.u32 %v2320, 7
        %v2322 = vsub.s32 1, %v2321
        %v2323 = vrot.slane %v2296, %v2322
        %v2324 = vlaneseq
        %v2325 = vshrl.u32 %v2324, 7
        %v2326 = vsub.s32 2, %v2325
        %v2327 = vrot.slane %v2296, %v2326
        %v2328 = vlaneseq
        %v2329 = vshrl.u32 %v2328, 7
        %v2330 = vsub.s32 3, %v2329
        %v2331 = vrot.slane %v2296, %v2330
        %v2337 = vsel %vm459, %v2295, 0
        %2339 = vmatprep.subr.mxu0 0.0
        %2340 = vmatpush1.msra.mxu0 0.0
        %2341 = vmatprep.subr.mxu0 0.0
        %2342 = vmatpush1.msra.mxu0 0.0
        %2343 = vmatprep.subr.mxu0 0.0
        %2344 = vmatpush1.msra.mxu0 0.0
        %2345 = vmatprep.subr.mxu0 0.0
        %2346 = vmatpush1.msra.mxu0 0.0
        %2347 = vmatprep.subr.mxu0 0.0
        %2348 = vmatpush1.msra.mxu0 0.0
        %2349 = vmatprep.subr.mxu0 0.0
        %2350 = vmatpush1.msra.mxu0 0.0
        %2351 = vmatprep.subr.mxu0 0.0
        %2352 = vmatpush1.msra.mxu0 0.0
        %2353 = vmatprep.subr.mxu0 0.0
        %2354 = vmatpush1.msra.mxu0 0.0
        %2355 = vmatprep.subr.mxu0 0.0
        %2356 = vmatpush1.msra.mxu0 0.0
        %2357 = vmatprep.subr.mxu0 0.0
        %2358 = vmatpush1.msra.mxu0 0.0
        %2359 = vmatprep.subr.mxu0 0.0
        %2360 = vmatpush1.msra.mxu0 0.0
        %2361 = vmatprep.subr.mxu0 0.0
        %2362 = vmatpush1.msra.mxu0 0.0
        %2363 = vmatprep.subr.mxu0 %v2312
        %2364 = vmatpush1.msra.mxu0 %v2311
        %2365 = vmatprep.subr.mxu0 %v2308
        %2366 = vmatpush1.msra.mxu0 %v2307
        %2367 = vmatprep.subr.mxu0 %v2304
        %2368 = vmatpush1.msra.mxu0 %v2303
        %2369 = vmatprep.subr.mxu0 %v2300
        %2370 = vmatpush1.msra.mxu0 %v2299
        %2371 = vmatprep.subr.mxu0 0.0
        %2372 = vmatpush2.msra.mxu0 0.0
        %2373 = vmatprep.subr.mxu0 0.0
        %2374 = vmatpush2.msra.mxu0 0.0
        %2375 = vmatprep.subr.mxu0 0.0
        %2376 = vmatpush2.msra.mxu0 0.0
        %2377 = vmatprep.subr.mxu0 0.0
        %2378 = vmatpush2.msra.mxu0 0.0
        %2379 = vmatprep.subr.mxu0 0.0
        %2380 = vmatpush2.msra.mxu0 0.0
        %2381 = vmatprep.subr.mxu0 0.0
        %2382 = vmatpush2.msra.mxu0 0.0
        %2383 = vmatprep.subr.mxu0 0.0
        %2384 = vmatpush2.msra.mxu0 0.0
        %2385 = vmatprep.subr.mxu0 0.0
        %2386 = vmatpush2.msra.mxu0 0.0
        %2387 = vmatprep.subr.mxu0 0.0
        %2388 = vmatpush2.msra.mxu0 0.0
        %2389 = vmatprep.subr.mxu0 0.0
        %2390 = vmatpush2.msra.mxu0 0.0
        %2391 = vmatprep.subr.mxu0 0.0
        %2392 = vmatpush2.msra.mxu0 0.0
        %2393 = vmatprep.subr.mxu0 0.0
        %2394 = vmatpush2.msra.mxu0 0.0
        %2395 = vmatprep.subr.mxu0 0.0
        %2396 = vmatpush2.msra.mxu0 0.0
        %2397 = vmatprep.subr.mxu0 0.0
        %2398 = vmatpush2.msra.mxu0 0.0
        %2399 = vmatprep.subr.mxu0 0.0
        %2400 = vmatpush2.msra.mxu0 0.0
        %2401 = vmatprep.subr.mxu0 0.0
        %2402 = vmatpush2.msra.mxu0 0.0
        %2403 = vmatprep.mubr.f32.mxu0 0.0
        %2404 = vmatmul.mubr.f32.gmra.mxu0 %v2337
        %v2405 = vpop.f32.mrf.mxu0
        %v2406 = vadd.f32 %v2319, %v2405
        %v2407 = vpop.f32.mrf.mxu0
        %v2408 = vadd.f32 %v2323, %v2407
        %2409 = vdwg.mxu0
        %2410 = vmatprep.subr.mxu0 0.0
        %2411 = vmatpush1.msra.mxu0 0.0
        %2412 = vmatprep.subr.mxu0 0.0
        %2413 = vmatpush1.msra.mxu0 0.0
        %2414 = vmatprep.subr.mxu0 0.0
        %2415 = vmatpush1.msra.mxu0 0.0
        %2416 = vmatprep.subr.mxu0 0.0
        %2417 = vmatpush1.msra.mxu0 0.0
        %2418 = vmatprep.subr.mxu0 0.0
        %2419 = vmatpush1.msra.mxu0 0.0
        %2420 = vmatprep.subr.mxu0 0.0
        %2421 = vmatpush1.msra.mxu0 0.0
        %2422 = vmatprep.subr.mxu0 0.0
        %2423 = vmatpush1.msra.mxu0 0.0
        %2424 = vmatprep.subr.mxu0 0.0
        %2425 = vmatpush1.msra.mxu0 0.0
        %2426 = vmatprep.subr.mxu0 0.0
        %2427 = vmatpush1.msra.mxu0 0.0
        %2428 = vmatprep.subr.mxu0 0.0
        %2429 = vmatpush1.msra.mxu0 0.0
        %2430 = vmatprep.subr.mxu0 0.0
        %2431 = vmatpush1.msra.mxu0 0.0
        %2432 = vmatprep.subr.mxu0 0.0
        %2433 = vmatpush1.msra.mxu0 0.0
        %2434 = vmatprep.subr.mxu0 %v2314
        %2435 = vmatpush1.msra.mxu0 %v2313
        %2436 = vmatprep.subr.mxu0 %v2310
        %2437 = vmatpush1.msra.mxu0 %v2309
        %2438 = vmatprep.subr.mxu0 %v2306
        %2439 = vmatpush1.msra.mxu0 %v2305
        %2440 = vmatprep.subr.mxu0 %v2302
        %2441 = vmatpush1.msra.mxu0 %v2301
        %2442 = vmatprep.subr.mxu0 0.0
        %2443 = vmatpush2.msra.mxu0 0.0
        %2444 = vmatprep.subr.mxu0 0.0
        %2445 = vmatpush2.msra.mxu0 0.0
        %2446 = vmatprep.subr.mxu0 0.0
        %2447 = vmatpush2.msra.mxu0 0.0
        %2448 = vmatprep.subr.mxu0 0.0
        %2449 = vmatpush2.msra.mxu0 0.0
        %2450 = vmatprep.subr.mxu0 0.0
        %2451 = vmatpush2.msra.mxu0 0.0
        %2452 = vmatprep.subr.mxu0 0.0
        %2453 = vmatpush2.msra.mxu0 0.0
        %2454 = vmatprep.subr.mxu0 0.0
        %2455 = vmatpush2.msra.mxu0 0.0
        %2456 = vmatprep.subr.mxu0 0.0
        %2457 = vmatpush2.msra.mxu0 0.0
        %2458 = vmatprep.subr.mxu0 0.0
        %2459 = vmatpush2.msra.mxu0 0.0
        %2460 = vmatprep.subr.mxu0 0.0
        %2461 = vmatpush2.msra.mxu0 0.0
        %2462 = vmatprep.subr.mxu0 0.0
        %2463 = vmatpush2.msra.mxu0 0.0
        %2464 = vmatprep.subr.mxu0 0.0
        %2465 = vmatpush2.msra.mxu0 0.0
        %2466 = vmatprep.subr.mxu0 0.0
        %2467 = vmatpush2.msra.mxu0 0.0
        %2468 = vmatprep.subr.mxu0 0.0
        %2469 = vmatpush2.msra.mxu0 0.0
        %2470 = vmatprep.subr.mxu0 0.0
        %2471 = vmatpush2.msra.mxu0 0.0
        %2472 = vmatprep.subr.mxu0 0.0
        %2473 = vmatpush2.msra.mxu0 0.0
        %2474 = vmatprep.mubr.f32.mxu0 0.0
        %2475 = vmatmul.mubr.f32.gmra.mxu0 %v2337
        %v2476 = vpop.f32.mrf.mxu0
        %v2477 = vadd.f32 %v2327, %v2476
        %v2478 = vpop.f32.mrf.mxu0
        %v2479 = vadd.f32 %v2331, %v2478
        %2480 = vdwg.mxu0
        %v2481 = vmax.f32 %v2406, 0.0
        %v2482 = vmax.f32 %v2408, 0.0
        %v2483 = vmax.f32 %v2477, 0.0
        %v2484 = vmax.f32 %v2479, 0.0
        %v2485 = vld [vmem:[%s5] sm:$0xff]
        %v2486 = vld [vmem:[%s5 + $0x8] sm:$0xff]
        %v2487 = vld [vmem:[%s5 + $0x10] sm:$0xff]
        %v2488 = vld [vmem:[%s5 + $0x18] sm:$0xff]
        %v2489 = vld [vmem:[%s5 + $0x20] sm:$0xff]
        %v2490 = vld [vmem:[%s5 + $0x28] sm:$0xff]
        %v2491 = vld [vmem:[%s5 + $0x30] sm:$0xff]
        %v2492 = vld [vmem:[%s5 + $0x38] sm:$0xff]
        %v2493 = vld [vmem:[%s5 + $0x40] sm:$0xff]
        %v2494 = vld [vmem:[%s5 + $0x48] sm:$0xff]
        %v2495 = vld [vmem:[%s5 + $0x50] sm:$0xff]
        %v2496 = vld [vmem:[%s5 + $0x58] sm:$0xff]
        %v2497 = vld [vmem:[%s5 + $0x60] sm:$0xff]
        %v2498 = vld [vmem:[%s5 + $0x68] sm:$0xff]
        %v2499 = vld [vmem:[%s5 + $0x70] sm:$0xff]
        %v2500 = vld [vmem:[%s5 + $0x78] sm:$0xff]
        %v2501 = vld [vmem:[%s5 + $0x80] sm:$0xff]
        %v2502 = vld [vmem:[%s5 + $0x88] sm:$0xff]
        %v2503 = vld [vmem:[%s5 + $0x90] sm:$0xff]
        %v2504 = vld [vmem:[%s5 + $0x98] sm:$0xff]
        %v2505 = vld [vmem:[%s5 + $0xa0] sm:$0xff]
        %v2506 = vld [vmem:[%s5 + $0xa8] sm:$0xff]
        %v2507 = vld [vmem:[%s5 + $0xb0] sm:$0xff]
        %v2508 = vld [vmem:[%s5 + $0xb8] sm:$0xff]
        %v2509 = vld [vmem:[%s5 + $0xc0] sm:$0xff]
        %v2510 = vld [vmem:[%s5 + $0xc8] sm:$0xff]
        %v2511 = vld [vmem:[%s5 + $0xd0] sm:$0xff]
        %v2512 = vld [vmem:[%s5 + $0xd8] sm:$0xff]
        %v2513 = vld [vmem:[%s5 + $0xe0] sm:$0xff]
        %v2514 = vld [vmem:[%s5 + $0xe8] sm:$0xff]
        %v2515 = vld [vmem:[%s5 + $0xf0] sm:$0xff]
        %v2516 = vld [vmem:[%s5 + $0xf8] sm:$0xff]
        %v2517 = vld [vmem:[%s5 + $0x100] sm:$0xff]
        %v2518 = vld [vmem:[%s5 + $0x108] sm:$0xff]
        %v2519 = vld [vmem:[%s5 + $0x110] sm:$0xff]
        %v2520 = vld [vmem:[%s5 + $0x118] sm:$0xff]
        %v2521 = vld [vmem:[%s5 + $0x120] sm:$0xff]
        %v2522 = vld [vmem:[%s5 + $0x128] sm:$0xff]
        %v2523 = vld [vmem:[%s5 + $0x130] sm:$0xff]
        %v2524 = vld [vmem:[%s5 + $0x138] sm:$0xff]
        %v2525 = vld [vmem:[%s5 + $0x140] sm:$0xff]
        %v2526 = vld [vmem:[%s5 + $0x148] sm:$0xff]
        %v2527 = vld [vmem:[%s5 + $0x150] sm:$0xff]
        %v2528 = vld [vmem:[%s5 + $0x158] sm:$0xff]
        %v2529 = vld [vmem:[%s5 + $0x160] sm:$0xff]
        %v2530 = vld [vmem:[%s5 + $0x168] sm:$0xff]
        %v2531 = vld [vmem:[%s5 + $0x170] sm:$0xff]
        %v2532 = vld [vmem:[%s5 + $0x178] sm:$0xff]
        %v2533 = vld [vmem:[%s5 + $0x180] sm:$0xff]
        %v2534 = vld [vmem:[%s5 + $0x188] sm:$0xff]
        %v2535 = vld [vmem:[%s5 + $0x190] sm:$0xff]
        %v2536 = vld [vmem:[%s5 + $0x198] sm:$0xff]
        %v2537 = vld [vmem:[%s5 + $0x1a0] sm:$0xff]
        %v2538 = vld [vmem:[%s5 + $0x1a8] sm:$0xff]
        %v2539 = vld [vmem:[%s5 + $0x1b0] sm:$0xff]
        %v2540 = vld [vmem:[%s5 + $0x1b8] sm:$0xff]
        %v2541 = vld [vmem:[%s5 + $0x1c0] sm:$0xff]
        %v2542 = vld [vmem:[%s5 + $0x1c8] sm:$0xff]
        %v2543 = vld [vmem:[%s5 + $0x1d0] sm:$0xff]
        %v2544 = vld [vmem:[%s5 + $0x1d8] sm:$0xff]
        %v2545 = vld [vmem:[%s5 + $0x1e0] sm:$0xff]
        %v2546 = vld [vmem:[%s5 + $0x1e8] sm:$0xff]
        %v2547 = vld [vmem:[%s5 + $0x1f0] sm:$0xff]
        %v2548 = vld [vmem:[%s5 + $0x1f8] sm:$0xff]
        %2549 = vmatprep.subr.mxu0 0.0
        %2550 = vmatpush1.msra.mxu0 %v2500
        %2551 = vmatprep.subr.mxu0 0.0
        %2552 = vmatpush1.msra.mxu0 %v2499
        %2553 = vmatprep.subr.mxu0 0.0
        %2554 = vmatpush1.msra.mxu0 %v2498
        %2555 = vmatprep.subr.mxu0 0.0
        %2556 = vmatpush1.msra.mxu0 %v2497
        %2557 = vmatprep.subr.mxu0 0.0
        %2558 = vmatpush1.msra.mxu0 %v2496
        %2559 = vmatprep.subr.mxu0 0.0
        %2560 = vmatpush1.msra.mxu0 %v2495
        %2561 = vmatprep.subr.mxu0 0.0
        %2562 = vmatpush1.msra.mxu0 %v2494
        %2563 = vmatprep.subr.mxu0 0.0
        %2564 = vmatpush1.msra.mxu0 %v2493
        %2565 = vmatprep.subr.mxu0 0.0
        %2566 = vmatpush1.msra.mxu0 %v2492
        %2567 = vmatprep.subr.mxu0 0.0
        %2568 = vmatpush1.msra.mxu0 %v2491
        %2569 = vmatprep.subr.mxu0 0.0
        %2570 = vmatpush1.msra.mxu0 %v2490
        %2571 = vmatprep.subr.mxu0 0.0
        %2572 = vmatpush1.msra.mxu0 %v2489
        %2573 = vmatprep.subr.mxu0 0.0
        %2574 = vmatpush1.msra.mxu0 %v2488
        %2575 = vmatprep.subr.mxu0 0.0
        %2576 = vmatpush1.msra.mxu0 %v2487
        %2577 = vmatprep.subr.mxu0 0.0
        %2578 = vmatpush1.msra.mxu0 %v2486
        %2579 = vmatprep.subr.mxu0 0.0
        %2580 = vmatpush1.msra.mxu0 %v2485
        %2581 = vmatprep.subr.mxu0 0.0
        %2582 = vmatpush2.msra.mxu0 %v2516
        %2583 = vmatprep.subr.mxu0 0.0
        %2584 = vmatpush2.msra.mxu0 %v2515
        %2585 = vmatprep.subr.mxu0 0.0
        %2586 = vmatpush2.msra.mxu0 %v2514
        %2587 = vmatprep.subr.mxu0 0.0
        %2588 = vmatpush2.msra.mxu0 %v2513
        %2589 = vmatprep.subr.mxu0 0.0
        %2590 = vmatpush2.msra.mxu0 %v2512
        %2591 = vmatprep.subr.mxu0 0.0
        %2592 = vmatpush2.msra.mxu0 %v2511
        %2593 = vmatprep.subr.mxu0 0.0
        %2594 = vmatpush2.msra.mxu0 %v2510
        %2595 = vmatprep.subr.mxu0 0.0
        %2596 = vmatpush2.msra.mxu0 %v2509
        %2597 = vmatprep.subr.mxu0 0.0
        %2598 = vmatpush2.msra.mxu0 %v2508
        %2599 = vmatprep.subr.mxu0 0.0
        %2600 = vmatpush2.msra.mxu0 %v2507
        %2601 = vmatprep.subr.mxu0 0.0
        %2602 = vmatpush2.msra.mxu0 %v2506
        %2603 = vmatprep.subr.mxu0 0.0
        %2604 = vmatpush2.msra.mxu0 %v2505
        %2605 = vmatprep.subr.mxu0 0.0
        %2606 = vmatpush2.msra.mxu0 %v2504
        %2607 = vmatprep.subr.mxu0 0.0
        %2608 = vmatpush2.msra.mxu0 %v2503
        %2609 = vmatprep.subr.mxu0 0.0
        %2610 = vmatpush2.msra.mxu0 %v2502
        %2611 = vmatprep.subr.mxu0 0.0
        %2612 = vmatpush2.msra.mxu0 %v2501
        %2613 = vmatprep.mubr.f32.mxu0 %v2482
        %2614 = vmatmul.mubr.f32.gmra.mxu0 %v2481
        %v2615 = vpop.f32.mrf.mxu0
        %v2616 = vadd.f32 0.0, %v2615
        %v2617 = vpop.f32.mrf.mxu0
        %2618 = vdwg.mxu0
        %2619 = vmatprep.subr.mxu0 0.0
        %2620 = vmatpush1.msra.mxu0 %v2532
        %2621 = vmatprep.subr.mxu0 0.0
        %2622 = vmatpush1.msra.mxu0 %v2531
        %2623 = vmatprep.subr.mxu0 0.0
        %2624 = vmatpush1.msra.mxu0 %v2530
        %2625 = vmatprep.subr.mxu0 0.0
        %2626 = vmatpush1.msra.mxu0 %v2529
        %2627 = vmatprep.subr.mxu0 0.0
        %2628 = vmatpush1.msra.mxu0 %v2528
        %2629 = vmatprep.subr.mxu0 0.0
        %2630 = vmatpush1.msra.mxu0 %v2527
        %2631 = vmatprep.subr.mxu0 0.0
        %2632 = vmatpush1.msra.mxu0 %v2526
        %2633 = vmatprep.subr.mxu0 0.0
        %2634 = vmatpush1.msra.mxu0 %v2525
        %2635 = vmatprep.subr.mxu0 0.0
        %2636 = vmatpush1.msra.mxu0 %v2524
        %2637 = vmatprep.subr.mxu0 0.0
        %2638 = vmatpush1.msra.mxu0 %v2523
        %2639 = vmatprep.subr.mxu0 0.0
        %2640 = vmatpush1.msra.mxu0 %v2522
        %2641 = vmatprep.subr.mxu0 0.0
        %2642 = vmatpush1.msra.mxu0 %v2521
        %2643 = vmatprep.subr.mxu0 0.0
        %2644 = vmatpush1.msra.mxu0 %v2520
        %2645 = vmatprep.subr.mxu0 0.0
        %2646 = vmatpush1.msra.mxu0 %v2519
        %2647 = vmatprep.subr.mxu0 0.0
        %2648 = vmatpush1.msra.mxu0 %v2518
        %2649 = vmatprep.subr.mxu0 0.0
        %2650 = vmatpush1.msra.mxu0 %v2517
        %2651 = vmatprep.subr.mxu0 0.0
        %2652 = vmatpush2.msra.mxu0 %v2548
        %2653 = vmatprep.subr.mxu0 0.0
        %2654 = vmatpush2.msra.mxu0 %v2547
        %2655 = vmatprep.subr.mxu0 0.0
        %2656 = vmatpush2.msra.mxu0 %v2546
        %2657 = vmatprep.subr.mxu0 0.0
        %2658 = vmatpush2.msra.mxu0 %v2545
        %2659 = vmatprep.subr.mxu0 0.0
        %2660 = vmatpush2.msra.mxu0 %v2544
        %2661 = vmatprep.subr.mxu0 0.0
        %2662 = vmatpush2.msra.mxu0 %v2543
        %2663 = vmatprep.subr.mxu0 0.0
        %2664 = vmatpush2.msra.mxu0 %v2542
        %2665 = vmatprep.subr.mxu0 0.0
        %2666 = vmatpush2.msra.mxu0 %v2541
        %2667 = vmatprep.subr.mxu0 0.0
        %2668 = vmatpush2.msra.mxu0 %v2540
        %2669 = vmatprep.subr.mxu0 0.0
        %2670 = vmatpush2.msra.mxu0 %v2539
        %2671 = vmatprep.subr.mxu0 0.0
        %2672 = vmatpush2.msra.mxu0 %v2538
        %2673 = vmatprep.subr.mxu0 0.0
        %2674 = vmatpush2.msra.mxu0 %v2537
        %2675 = vmatprep.subr.mxu0 0.0
        %2676 = vmatpush2.msra.mxu0 %v2536
        %2677 = vmatprep.subr.mxu0 0.0
        %2678 = vmatpush2.msra.mxu0 %v2535
        %2679 = vmatprep.subr.mxu0 0.0
        %2680 = vmatpush2.msra.mxu0 %v2534
        %2681 = vmatprep.subr.mxu0 0.0
        %2682 = vmatpush2.msra.mxu0 %v2533
        %2683 = vmatprep.mubr.f32.mxu0 %v2484
        %2684 = vmatmul.mubr.f32.gmra.mxu0 %v2483
        %v2685 = vpop.f32.mrf.mxu0
        %v2686 = vadd.f32 %v2616, %v2685
        %v2687 = vpop.f32.mrf.mxu0
        %2688 = vdwg.mxu0
        %v2689 = vadd.f32 %v2295, %v2686
        %v2691 = vlaneseq
        %v2692 = vshrl.u32 %v2691, 7
        %v2693 = vsub.s32 0, %v2692
        %v2694 = vrot.slane %v2298, %v2693
        %v2696 = vadd.f32 %v2689, %v2694
        %s2697 = scalar_lea.vmem %s2, 384
        %v2698 = vld [vmem:[%s2697] sm:$0xff]
        %v2699 = vld [vmem:[%s2697 + $0x8] sm:$0xff]
        %v2700 = vld [vmem:[%s2697 + $0x10] sm:$0xff]
        %v2701 = vld [vmem:[%s2697 + $0x18] sm:$0xff]
        %s2702 = scalar_lea.vmem %s2, 512
        %v2703 = vld [vmem:[%s2702] sm:$0xff]
        %v2704 = vld [vmem:[%s2702 + $0x8] sm:$0xff]
        %v2705 = vld [vmem:[%s2702 + $0x10] sm:$0xff]
        %v2706 = vld [vmem:[%s2702 + $0x18] sm:$0xff]
        %s2707 = scalar_lea.vmem %s2, 640
        %v2708 = vld [vmem:[%s2707] sm:$0xff]
        %v2709 = vld [vmem:[%s2707 + $0x8] sm:$0xff]
        %v2710 = vld [vmem:[%s2707 + $0x10] sm:$0xff]
        %v2711 = vld [vmem:[%s2707 + $0x18] sm:$0xff]
        %v2713 = vsel %vm459, %v2696, 0
        %2715 = vmatprep.subr.mxu0 0.0
        %2716 = vmatpush1.msra.mxu0 0.0
        %2717 = vmatprep.subr.mxu0 0.0
        %2718 = vmatpush1.msra.mxu0 0.0
        %2719 = vmatprep.subr.mxu0 0.0
        %2720 = vmatpush1.msra.mxu0 0.0
        %2721 = vmatprep.subr.mxu0 0.0
        %2722 = vmatpush1.msra.mxu0 0.0
        %2723 = vmatprep.subr.mxu0 0.0
        %2724 = vmatpush1.msra.mxu0 0.0
        %2725 = vmatprep.subr.mxu0 0.0
        %2726 = vmatpush1.msra.mxu0 0.0
        %2727 = vmatprep.subr.mxu0 0.0
        %2728 = vmatpush1.msra.mxu0 0.0
        %2729 = vmatprep.subr.mxu0 0.0
        %2730 = vmatpush1.msra.mxu0 0.0
        %2731 = vmatprep.subr.mxu0 0.0
        %2732 = vmatpush1.msra.mxu0 0.0
        %2733 = vmatprep.subr.mxu0 0.0
        %2734 = vmatpush1.msra.mxu0 0.0
        %2735 = vmatprep.subr.mxu0 0.0
        %2736 = vmatpush1.msra.mxu0 0.0
        %2737 = vmatprep.subr.mxu0 0.0
        %2738 = vmatpush1.msra.mxu0 0.0
        %2739 = vmatprep.subr.mxu0 0.0
        %2740 = vmatpush1.msra.mxu0 %v2701
        %2741 = vmatprep.subr.mxu0 0.0
        %2742 = vmatpush1.msra.mxu0 %v2700
        %2743 = vmatprep.subr.mxu0 0.0
        %2744 = vmatpush1.msra.mxu0 %v2699
        %2745 = vmatprep.subr.mxu0 0.0
        %2746 = vmatpush1.msra.mxu0 %v2698
        %2747 = vmatprep.subr.mxu0 0.0
        %2748 = vmatpush2.msra.mxu0 0.0
        %2749 = vmatprep.subr.mxu0 0.0
        %2750 = vmatpush2.msra.mxu0 0.0
        %2751 = vmatprep.subr.mxu0 0.0
        %2752 = vmatpush2.msra.mxu0 0.0
        %2753 = vmatprep.subr.mxu0 0.0
        %2754 = vmatpush2.msra.mxu0 0.0
        %2755 = vmatprep.subr.mxu0 0.0
        %2756 = vmatpush2.msra.mxu0 0.0
        %2757 = vmatprep.subr.mxu0 0.0
        %2758 = vmatpush2.msra.mxu0 0.0
        %2759 = vmatprep.subr.mxu0 0.0
        %2760 = vmatpush2.msra.mxu0 0.0
        %2761 = vmatprep.subr.mxu0 0.0
        %2762 = vmatpush2.msra.mxu0 0.0
        %2763 = vmatprep.subr.mxu0 0.0
        %2764 = vmatpush2.msra.mxu0 0.0
        %2765 = vmatprep.subr.mxu0 0.0
        %2766 = vmatpush2.msra.mxu0 0.0
        %2767 = vmatprep.subr.mxu0 0.0
        %2768 = vmatpush2.msra.mxu0 0.0
        %2769 = vmatprep.subr.mxu0 0.0
        %2770 = vmatpush2.msra.mxu0 0.0
        %2771 = vmatprep.subr.mxu0 0.0
        %2772 = vmatpush2.msra.mxu0 0.0
        %2773 = vmatprep.subr.mxu0 0.0
        %2774 = vmatpush2.msra.mxu0 0.0
        %2775 = vmatprep.subr.mxu0 0.0
        %2776 = vmatpush2.msra.mxu0 0.0
        %2777 = vmatprep.subr.mxu0 0.0
        %2778 = vmatpush2.msra.mxu0 0.0
        %2779 = vmatprep.mubr.f32.mxu0 0.0
        %2780 = vmatmul.mubr.f32.gmra.mxu0 %v2713
        %v2781 = vpop.f32.mrf.mxu0
        %v2782 = vadd.f32 0.0, %v2781
        %v2783 = vpop.f32.mrf.mxu0
        %2784 = vdwg.mxu0
        %2785 = vmatprep.subr.mxu0 0.0
        %2786 = vmatpush1.msra.mxu0 0.0
        %2787 = vmatprep.subr.mxu0 0.0
        %2788 = vmatpush1.msra.mxu0 0.0
        %2789 = vmatprep.subr.mxu0 0.0
        %2790 = vmatpush1.msra.mxu0 0.0
        %2791 = vmatprep.subr.mxu0 0.0
        %2792 = vmatpush1.msra.mxu0 0.0
        %2793 = vmatprep.subr.mxu0 0.0
        %2794 = vmatpush1.msra.mxu0 0.0
        %2795 = vmatprep.subr.mxu0 0.0
        %2796 = vmatpush1.msra.mxu0 0.0
        %2797 = vmatprep.subr.mxu0 0.0
        %2798 = vmatpush1.msra.mxu0 0.0
        %2799 = vmatprep.subr.mxu0 0.0
        %2800 = vmatpush1.msra.mxu0 0.0
        %2801 = vmatprep.subr.mxu0 0.0
        %2802 = vmatpush1.msra.mxu0 0.0
        %2803 = vmatprep.subr.mxu0 0.0
        %2804 = vmatpush1.msra.mxu0 0.0
        %2805 = vmatprep.subr.mxu0 0.0
        %2806 = vmatpush1.msra.mxu0 0.0
        %2807 = vmatprep.subr.mxu0 0.0
        %2808 = vmatpush1.msra.mxu0 0.0
        %2809 = vmatprep.subr.mxu0 0.0
        %2810 = vmatpush1.msra.mxu0 %v2706
        %2811 = vmatprep.subr.mxu0 0.0
        %2812 = vmatpush1.msra.mxu0 %v2705
        %2813 = vmatprep.subr.mxu0 0.0
        %2814 = vmatpush1.msra.mxu0 %v2704
        %2815 = vmatprep.subr.mxu0 0.0
        %2816 = vmatpush1.msra.mxu0 %v2703
        %2817 = vmatprep.subr.mxu0 0.0
        %2818 = vmatpush2.msra.mxu0 0.0
        %2819 = vmatprep.subr.mxu0 0.0
        %2820 = vmatpush2.msra.mxu0 0.0
        %2821 = vmatprep.subr.mxu0 0.0
        %2822 = vmatpush2.msra.mxu0 0.0
        %2823 = vmatprep.subr.mxu0 0.0
        %2824 = vmatpush2.msra.mxu0 0.0
        %2825 = vmatprep.subr.mxu0 0.0
        %2826 = vmatpush2.msra.mxu0 0.0
        %2827 = vmatprep.subr.mxu0 0.0
        %2828 = vmatpush2.msra.mxu0 0.0
        %2829 = vmatprep.subr.mxu0 0.0
        %2830 = vmatpush2.msra.mxu0 0.0
        %2831 = vmatprep.subr.mxu0 0.0
        %2832 = vmatpush2.msra.mxu0 0.0
        %2833 = vmatprep.subr.mxu0 0.0
        %2834 = vmatpush2.msra.mxu0 0.0
        %2835 = vmatprep.subr.mxu0 0.0
        %2836 = vmatpush2.msra.mxu0 0.0
        %2837 = vmatprep.subr.mxu0 0.0
        %2838 = vmatpush2.msra.mxu0 0.0
        %2839 = vmatprep.subr.mxu0 0.0
        %2840 = vmatpush2.msra.mxu0 0.0
        %2841 = vmatprep.subr.mxu0 0.0
        %2842 = vmatpush2.msra.mxu0 0.0
        %2843 = vmatprep.subr.mxu0 0.0
        %2844 = vmatpush2.msra.mxu0 0.0
        %2845 = vmatprep.subr.mxu0 0.0
        %2846 = vmatpush2.msra.mxu0 0.0
        %2847 = vmatprep.subr.mxu0 0.0
        %2848 = vmatpush2.msra.mxu0 0.0
        %2849 = vmatprep.mubr.f32.mxu0 0.0
        %2850 = vmatmul.mubr.f32.gmra.mxu0 %v2713
        %v2851 = vpop.f32.mrf.mxu0
        %v2852 = vadd.f32 0.0, %v2851
        %v2853 = vpop.f32.mrf.mxu0
        %2854 = vdwg.mxu0
        %2855 = vmatprep.subr.mxu0 0.0
        %2856 = vmatpush1.msra.mxu0 0.0
        %2857 = vmatprep.subr.mxu0 0.0
        %2858 = vmatpush1.msra.mxu0 0.0
        %2859 = vmatprep.subr.mxu0 0.0
        %2860 = vmatpush1.msra.mxu0 0.0
        %2861 = vmatprep.subr.mxu0 0.0
        %2862 = vmatpush1.msra.mxu0 0.0
        %2863 = vmatprep.subr.mxu0 0.0
        %2864 = vmatpush1.msra.mxu0 0.0
        %2865 = vmatprep.subr.mxu0 0.0
        %2866 = vmatpush1.msra.mxu0 0.0
        %2867 = vmatprep.subr.mxu0 0.0
        %2868 = vmatpush1.msra.mxu0 0.0
        %2869 = vmatprep.subr.mxu0 0.0
        %2870 = vmatpush1.msra.mxu0 0.0
        %2871 = vmatprep.subr.mxu0 0.0
        %2872 = vmatpush1.msra.mxu0 0.0
        %2873 = vmatprep.subr.mxu0 0.0
        %2874 = vmatpush1.msra.mxu0 0.0
        %2875 = vmatprep.subr.mxu0 0.0
        %2876 = vmatpush1.msra.mxu0 0.0
        %2877 = vmatprep.subr.mxu0 0.0
        %2878 = vmatpush1.msra.mxu0 0.0
        %2879 = vmatprep.subr.mxu0 0.0
        %2880 = vmatpush1.msra.mxu0 %v2711
        %2881 = vmatprep.subr.mxu0 0.0
        %2882 = vmatpush1.msra.mxu0 %v2710
        %2883 = vmatprep.subr.mxu0 0.0
        %2884 = vmatpush1.msra.mxu0 %v2709
        %2885 = vmatprep.subr.mxu0 0.0
        %2886 = vmatpush1.msra.mxu0 %v2708
        %2887 = vmatprep.subr.mxu0 0.0
        %2888 = vmatpush2.msra.mxu0 0.0
        %2889 = vmatprep.subr.mxu0 0.0
        %2890 = vmatpush2.msra.mxu0 0.0
        %2891 = vmatprep.subr.mxu0 0.0
        %2892 = vmatpush2.msra.mxu0 0.0
        %2893 = vmatprep.subr.mxu0 0.0
        %2894 = vmatpush2.msra.mxu0 0.0
        %2895 = vmatprep.subr.mxu0 0.0
        %2896 = vmatpush2.msra.mxu0 0.0
        %2897 = vmatprep.subr.mxu0 0.0
        %2898 = vmatpush2.msra.mxu0 0.0
        %2899 = vmatprep.subr.mxu0 0.0
        %2900 = vmatpush2.msra.mxu0 0.0
        %2901 = vmatprep.subr.mxu0 0.0
        %2902 = vmatpush2.msra.mxu0 0.0
        %2903 = vmatprep.subr.mxu0 0.0
        %2904 = vmatpush2.msra.mxu0 0.0
        %2905 = vmatprep.subr.mxu0 0.0
        %2906 = vmatpush2.msra.mxu0 0.0
        %2907 = vmatprep.subr.mxu0 0.0
        %2908 = vmatpush2.msra.mxu0 0.0
        %2909 = vmatprep.subr.mxu0 0.0
        %2910 = vmatpush2.msra.mxu0 0.0
        %2911 = vmatprep.subr.mxu0 0.0
        %2912 = vmatpush2.msra.mxu0 0.0
        %2913 = vmatprep.subr.mxu0 0.0
        %2914 = vmatpush2.msra.mxu0 0.0
        %2915 = vmatprep.subr.mxu0 0.0
        %2916 = vmatpush2.msra.mxu0 0.0
        %2917 = vmatprep.subr.mxu0 0.0
        %2918 = vmatpush2.msra.mxu0 0.0
        %2919 = vmatprep.mubr.f32.mxu0 0.0
        %2920 = vmatmul.mubr.f32.gmra.mxu0 %v2713
        %v2921 = vpop.f32.mrf.mxu0
        %v2922 = vadd.f32 0.0, %v2921
        %v2923 = vpop.f32.mrf.mxu0
        %2924 = vdwg.mxu0
        %v2926 = vsel %vm673, %v2782, 0
        %v2929 = vsel %vm673, %v2852, 0
        %2931 = vmatprep.subr.mxu0 0.0
        %2932 = vmatpush1.xpose.msra.mxu0 0.0
        %2933 = vmatprep.subr.mxu0 0.0
        %2934 = vmatpush1.xpose.msra.mxu0 0.0
        %2935 = vmatprep.subr.mxu0 0.0
        %2936 = vmatpush1.xpose.msra.mxu0 0.0
        %2937 = vmatprep.subr.mxu0 0.0
        %2938 = vmatpush1.xpose.msra.mxu0 0.0
        %2939 = vmatprep.subr.mxu0 0.0
        %2940 = vmatpush1.xpose.msra.mxu0 0.0
        %2941 = vmatprep.subr.mxu0 0.0
        %2942 = vmatpush1.xpose.msra.mxu0 0.0
        %2943 = vmatprep.subr.mxu0 0.0
        %2944 = vmatpush1.xpose.msra.mxu0 0.0
        %2945 = vmatprep.subr.mxu0 0.0
        %2946 = vmatpush1.xpose.msra.mxu0 0.0
        %2947 = vmatprep.subr.mxu0 0.0
        %2948 = vmatpush1.xpose.msra.mxu0 0.0
        %2949 = vmatprep.subr.mxu0 0.0
        %2950 = vmatpush1.xpose.msra.mxu0 0.0
        %2951 = vmatprep.subr.mxu0 0.0
        %2952 = vmatpush1.xpose.msra.mxu0 0.0
        %2953 = vmatprep.subr.mxu0 0.0
        %2954 = vmatpush1.xpose.msra.mxu0 0.0
        %2955 = vmatprep.subr.mxu0 0.0
        %2956 = vmatpush1.xpose.msra.mxu0 0.0
        %2957 = vmatprep.subr.mxu0 0.0
        %2958 = vmatpush1.xpose.msra.mxu0 0.0
        %2959 = vmatprep.subr.mxu0 0.0
        %2960 = vmatpush1.xpose.msra.mxu0 0.0
        %2961 = vmatprep.subr.mxu0 0.0
        %2962 = vmatpush1.xpose.msra.mxu0 %v2929
        %2963 = vmatprep.subr.mxu0 0.0
        %2964 = vmatpush2.xpose.msra.mxu0 0.0
        %2965 = vmatprep.subr.mxu0 0.0
        %2966 = vmatpush2.xpose.msra.mxu0 0.0
        %2967 = vmatprep.subr.mxu0 0.0
        %2968 = vmatpush2.xpose.msra.mxu0 0.0
        %2969 = vmatprep.subr.mxu0 0.0
        %2970 = vmatpush2.xpose.msra.mxu0 0.0
        %2971 = vmatprep.subr.mxu0 0.0
        %2972 = vmatpush2.xpose.msra.mxu0 0.0
        %2973 = vmatprep.subr.mxu0 0.0
        %2974 = vmatpush2.xpose.msra.mxu0 0.0
        %2975 = vmatprep.subr.mxu0 0.0
        %2976 = vmatpush2.xpose.msra.mxu0 0.0
        %2977 = vmatprep.subr.mxu0 0.0
        %2978 = vmatpush2.xpose.msra.mxu0 0.0
        %2979 = vmatprep.subr.mxu0 0.0
        %2980 = vmatpush2.xpose.msra.mxu0 0.0
        %2981 = vmatprep.subr.mxu0 0.0
        %2982 = vmatpush2.xpose.msra.mxu0 0.0
        %2983 = vmatprep.subr.mxu0 0.0
        %2984 = vmatpush2.xpose.msra.mxu0 0.0
        %2985 = vmatprep.subr.mxu0 0.0
        %2986 = vmatpush2.xpose.msra.mxu0 0.0
        %2987 = vmatprep.subr.mxu0 0.0
        %2988 = vmatpush2.xpose.msra.mxu0 0.0
        %2989 = vmatprep.subr.mxu0 0.0
        %2990 = vmatpush2.xpose.msra.mxu0 0.0
        %2991 = vmatprep.subr.mxu0 0.0
        %2992 = vmatpush2.xpose.msra.mxu0 0.0
        %2993 = vmatprep.subr.mxu0 0.0
        %2994 = vmatpush2.xpose.msra.mxu0 0.0
        %2995 = vmatprep.mubr.f32.mxu0 0.0
        %2996 = vmatmul.mubr.f32.gmra.mxu0 %v2926
        %v2997 = vpop.f32.mrf.mxu0
        %v2998 = vadd.f32 0.0, %v2997
        %v2999 = vpop.f32.mrf.mxu0
        %3000 = vdwg.mxu0
        %v3001 = vmul.f32 %v2998, 0.35355338
        %v3002 = vsel %vm673, %v3001, -inf
        %3003 = vmax.xlane.f32.xlu0 %v3002
        %v3004 = vpop.xlane.xlu0 %3003
        %v3005 = vsub.f32 %v3001, %v3004
        %v3006 = vmul.f32 %v3005, 1.442695
        %v3007 = vpow.pop %v3006
        %v3008 = vsel %vm673, %v3007, 0.0
        %3009 = vadd.xlane.f32.xlu0 %v3008
        %v3010 = vpop.xlane.xlu0 %3009
        %v3011 = vrcp.pop %v3010
        %v3012 = vmul.f32 %v3007, %v3011
        %v3014 = vsel %vm673, %v3012, 0
        %3016 = vmatprep.subr.mxu0 0.0
        %3017 = vmatpush1.msra.mxu0 0.0
        %3018 = vmatprep.subr.mxu0 0.0
        %3019 = vmatpush1.msra.mxu0 0.0
        %3020 = vmatprep.subr.mxu0 0.0
        %3021 = vmatpush1.msra.mxu0 0.0
        %3022 = vmatprep.subr.mxu0 0.0
        %3023 = vmatpush1.msra.mxu0 0.0
        %3024 = vmatprep.subr.mxu0 0.0
        %3025 = vmatpush1.msra.mxu0 0.0
        %3026 = vmatprep.subr.mxu0 0.0
        %3027 = vmatpush1.msra.mxu0 0.0
        %3028 = vmatprep.subr.mxu0 0.0
        %3029 = vmatpush1.msra.mxu0 0.0
        %3030 = vmatprep.subr.mxu0 0.0
        %3031 = vmatpush1.msra.mxu0 0.0
        %3032 = vmatprep.subr.mxu0 0.0
        %3033 = vmatpush1.msra.mxu0 0.0
        %3034 = vmatprep.subr.mxu0 0.0
        %3035 = vmatpush1.msra.mxu0 0.0
        %3036 = vmatprep.subr.mxu0 0.0
        %3037 = vmatpush1.msra.mxu0 0.0
        %3038 = vmatprep.subr.mxu0 0.0
        %3039 = vmatpush1.msra.mxu0 0.0
        %3040 = vmatprep.subr.mxu0 0.0
        %3041 = vmatpush1.msra.mxu0 0.0
        %3042 = vmatprep.subr.mxu0 0.0
        %3043 = vmatpush1.msra.mxu0 0.0
        %3044 = vmatprep.subr.mxu0 0.0
        %3045 = vmatpush1.msra.mxu0 0.0
        %3046 = vmatprep.subr.mxu0 0.0
        %3047 = vmatpush1.msra.mxu0 %v2922
        %3048 = vmatprep.subr.mxu0 0.0
        %3049 = vmatpush2.msra.mxu0 0.0
        %3050 = vmatprep.subr.mxu0 0.0
        %3051 = vmatpush2.msra.mxu0 0.0
        %3052 = vmatprep.subr.mxu0 0.0
        %3053 = vmatpush2.msra.mxu0 0.0
        %3054 = vmatprep.subr.mxu0 0.0
        %3055 = vmatpush2.msra.mxu0 0.0
        %3056 = vmatprep.subr.mxu0 0.0
        %3057 = vmatpush2.msra.mxu0 0.0
        %3058 = vmatprep.subr.mxu0 0.0
        %3059 = vmatpush2.msra.mxu0 0.0
        %3060 = vmatprep.subr.mxu0 0.0
        %3061 = vmatpush2.msra.mxu0 0.0
        %3062 = vmatprep.subr.mxu0 0.0
        %3063 = vmatpush2.msra.mxu0 0.0
        %3064 = vmatprep.subr.mxu0 0.0
        %3065 = vmatpush2.msra.mxu0 0.0
        %3066 = vmatprep.subr.mxu0 0.0
        %3067 = vmatpush2.msra.mxu0 0.0
        %3068 = vmatprep.subr.mxu0 0.0
        %3069 = vmatpush2.msra.mxu0 0.0
        %3070 = vmatprep.subr.mxu0 0.0
        %3071 = vmatpush2.msra.mxu0 0.0
        %3072 = vmatprep.subr.mxu0 0.0
        %3073 = vmatpush2.msra.mxu0 0.0
        %3074 = vmatprep.subr.mxu0 0.0
        %3075 = vmatpush2.msra.mxu0 0.0
        %3076 = vmatprep.subr.mxu0 0.0
        %3077 = vmatpush2.msra.mxu0 0.0
        %3078 = vmatprep.subr.mxu0 0.0
        %3079 = vmatpush2.msra.mxu0 0.0
        %3080 = vmatprep.mubr.f32.mxu0 0.0
        %3081 = vmatmul.mubr.f32.gmra.mxu0 %v3014
        %v3082 = vpop.f32.mrf.mxu0
        %v3083 = vadd.f32 0.0, %v3082
        %v3084 = vpop.f32.mrf.mxu0
        %3085 = vdwg.mxu0
        %s3086 = scalar_lea.vmem %s3, 32
        %v3087 = vld [vmem:[%s3086] sm:$0xff]
        %v3089 = vsel %vm673, %v3083, 0
        %3091 = vmatprep.subr.mxu0 0.0
        %3092 = vmatpush1.msra.mxu0 0.0
        %3093 = vmatprep.subr.mxu0 0.0
        %3094 = vmatpush1.msra.mxu0 0.0
        %3095 = vmatprep.subr.mxu0 0.0
        %3096 = vmatpush1.msra.mxu0 0.0
        %3097 = vmatprep.subr.mxu0 0.0
        %3098 = vmatpush1.msra.mxu0 0.0
        %3099 = vmatprep.subr.mxu0 0.0
        %3100 = vmatpush1.msra.mxu0 0.0
        %3101 = vmatprep.subr.mxu0 0.0
        %3102 = vmatpush1.msra.mxu0 0.0
        %3103 = vmatprep.subr.mxu0 0.0
        %3104 = vmatpush1.msra.mxu0 0.0
        %3105 = vmatprep.subr.mxu0 0.0
        %3106 = vmatpush1.msra.mxu0 0.0
        %3107 = vmatprep.subr.mxu0 0.0
        %3108 = vmatpush1.msra.mxu0 0.0
        %3109 = vmatprep.subr.mxu0 0.0
        %3110 = vmatpush1.msra.mxu0 0.0
        %3111 = vmatprep.subr.mxu0 0.0
        %3112 = vmatpush1.msra.mxu0 0.0
        %3113 = vmatprep.subr.mxu0 0.0
        %3114 = vmatpush1.msra.mxu0 0.0
        %3115 = vmatprep.subr.mxu0 0.0
        %3116 = vmatpush1.msra.mxu0 0.0
        %3117 = vmatprep.subr.mxu0 0.0
        %3118 = vmatpush1.msra.mxu0 0.0
        %3119 = vmatprep.subr.mxu0 0.0
        %3120 = vmatpush1.msra.mxu0 0.0
        %3121 = vmatprep.subr.mxu0 0.0
        %3122 = vmatpush1.msra.mxu0 %v3087
        %3123 = vmatprep.subr.mxu0 0.0
        %3124 = vmatpush2.msra.mxu0 0.0
        %3125 = vmatprep.subr.mxu0 0.0
        %3126 = vmatpush2.msra.mxu0 0.0
        %3127 = vmatprep.subr.mxu0 0.0
        %3128 = vmatpush2.msra.mxu0 0.0
        %3129 = vmatprep.subr.mxu0 0.0
        %3130 = vmatpush2.msra.mxu0 0.0
        %3131 = vmatprep.subr.mxu0 0.0
        %3132 = vmatpush2.msra.mxu0 0.0
        %3133 = vmatprep.subr.mxu0 0.0
        %3134 = vmatpush2.msra.mxu0 0.0
        %3135 = vmatprep.subr.mxu0 0.0
        %3136 = vmatpush2.msra.mxu0 0.0
        %3137 = vmatprep.subr.mxu0 0.0
        %3138 = vmatpush2.msra.mxu0 0.0
        %3139 = vmatprep.subr.mxu0 0.0
        %3140 = vmatpush2.msra.mxu0 0.0
        %3141 = vmatprep.subr.mxu0 0.0
        %3142 = vmatpush2.msra.mxu0 0.0
        %3143 = vmatprep.subr.mxu0 0.0
        %3144 = vmatpush2.msra.mxu0 0.0
        %3145 = vmatprep.subr.mxu0 0.0
        %3146 = vmatpush2.msra.mxu0 0.0
        %3147 = vmatprep.subr.mxu0 0.0
        %3148 = vmatpush2.msra.mxu0 0.0
        %3149 = vmatprep.subr.mxu0 0.0
        %3150 = vmatpush2.msra.mxu0 0.0
        %3151 = vmatprep.subr.mxu0 0.0
        %3152 = vmatpush2.msra.mxu0 0.0
        %3153 = vmatprep.subr.mxu0 0.0
        %3154 = vmatpush2.msra.mxu0 0.0
        %3155 = vmatprep.mubr.f32.mxu0 0.0
        %3156 = vmatmul.mubr.f32.gmra.mxu0 %v3089
        %v3157 = vpop.f32.mrf.mxu0
        %v3158 = vadd.f32 0.0, %v3157
        %v3159 = vpop.f32.mrf.mxu0
        %3160 = vdwg.mxu0
        %v3161 = vadd.f32 %v2696, %v3158
        %s3162 = scalar_lea.vmem %s2, 416
        %v3163 = vld [vmem:[%s3162] sm:$0xff]
        %v3164 = vld [vmem:[%s3162 + $0x8] sm:$0xff]
        %v3165 = vld [vmem:[%s3162 + $0x10] sm:$0xff]
        %v3166 = vld [vmem:[%s3162 + $0x18] sm:$0xff]
        %s3167 = scalar_lea.vmem %s2, 544
        %v3168 = vld [vmem:[%s3167] sm:$0xff]
        %v3169 = vld [vmem:[%s3167 + $0x8] sm:$0xff]
        %v3170 = vld [vmem:[%s3167 + $0x10] sm:$0xff]
        %v3171 = vld [vmem:[%s3167 + $0x18] sm:$0xff]
        %s3172 = scalar_lea.vmem %s2, 672
        %v3173 = vld [vmem:[%s3172] sm:$0xff]
        %v3174 = vld [vmem:[%s3172 + $0x8] sm:$0xff]
        %v3175 = vld [vmem:[%s3172 + $0x10] sm:$0xff]
        %v3176 = vld [vmem:[%s3172 + $0x18] sm:$0xff]
        %3177 = vmatprep.subr.mxu0 0.0
        %3178 = vmatpush1.msra.mxu0 0.0
        %3179 = vmatprep.subr.mxu0 0.0
        %3180 = vmatpush1.msra.mxu0 0.0
        %3181 = vmatprep.subr.mxu0 0.0
        %3182 = vmatpush1.msra.mxu0 0.0
        %3183 = vmatprep.subr.mxu0 0.0
        %3184 = vmatpush1.msra.mxu0 0.0
        %3185 = vmatprep.subr.mxu0 0.0
        %3186 = vmatpush1.msra.mxu0 0.0
        %3187 = vmatprep.subr.mxu0 0.0
        %3188 = vmatpush1.msra.mxu0 0.0
        %3189 = vmatprep.subr.mxu0 0.0
        %3190 = vmatpush1.msra.mxu0 0.0
        %3191 = vmatprep.subr.mxu0 0.0
        %3192 = vmatpush1.msra.mxu0 0.0
        %3193 = vmatprep.subr.mxu0 0.0
        %3194 = vmatpush1.msra.mxu0 0.0
        %3195 = vmatprep.subr.mxu0 0.0
        %3196 = vmatpush1.msra.mxu0 0.0
        %3197 = vmatprep.subr.mxu0 0.0
        %3198 = vmatpush1.msra.mxu0 0.0
        %3199 = vmatprep.subr.mxu0 0.0
        %3200 = vmatpush1.msra.mxu0 0.0
        %3201 = vmatprep.subr.mxu0 0.0
        %3202 = vmatpush1.msra.mxu0 %v3166
        %3203 = vmatprep.subr.mxu0 0.0
        %3204 = vmatpush1.msra.mxu0 %v3165
        %3205 = vmatprep.subr.mxu0 0.0
        %3206 = vmatpush1.msra.mxu0 %v3164
        %3207 = vmatprep.subr.mxu0 0.0
        %3208 = vmatpush1.msra.mxu0 %v3163
        %3209 = vmatprep.subr.mxu0 0.0
        %3210 = vmatpush2.msra.mxu0 0.0
        %3211 = vmatprep.subr.mxu0 0.0
        %3212 = vmatpush2.msra.mxu0 0.0
        %3213 = vmatprep.subr.mxu0 0.0
        %3214 = vmatpush2.msra.mxu0 0.0
        %3215 = vmatprep.subr.mxu0 0.0
        %3216 = vmatpush2.msra.mxu0 0.0
        %3217 = vmatprep.subr.mxu0 0.0
        %3218 = vmatpush2.msra.mxu0 0.0
        %3219 = vmatprep.subr.mxu0 0.0
        %3220 = vmatpush2.msra.mxu0 0.0
        %3221 = vmatprep.subr.mxu0 0.0
        %3222 = vmatpush2.msra.mxu0 0.0
        %3223 = vmatprep.subr.mxu0 0.0
        %3224 = vmatpush2.msra.mxu0 0.0
        %3225 = vmatprep.subr.mxu0 0.0
        %3226 = vmatpush2.msra.mxu0 0.0
        %3227 = vmatprep.subr.mxu0 0.0
        %3228 = vmatpush2.msra.mxu0 0.0
        %3229 = vmatprep.subr.mxu0 0.0
        %3230 = vmatpush2.msra.mxu0 0.0
        %3231 = vmatprep.subr.mxu0 0.0
        %3232 = vmatpush2.msra.mxu0 0.0
        %3233 = vmatprep.subr.mxu0 0.0
        %3234 = vmatpush2.msra.mxu0 0.0
        %3235 = vmatprep.subr.mxu0 0.0
        %3236 = vmatpush2.msra.mxu0 0.0
        %3237 = vmatprep.subr.mxu0 0.0
        %3238 = vmatpush2.msra.mxu0 0.0
        %3239 = vmatprep.subr.mxu0 0.0
        %3240 = vmatpush2.msra.mxu0 0.0
        %3241 = vmatprep.mubr.f32.mxu0 0.0
        %3242 = vmatmul.mubr.f32.gmra.mxu0 %v2713
        %v3243 = vpop.f32.mrf.mxu0
        %v3244 = vadd.f32 0.0, %v3243
        %v3245 = vpop.f32.mrf.mxu0
        %3246 = vdwg.mxu0
        %3247 = vmatprep.subr.mxu0 0.0
        %3248 = vmatpush1.msra.mxu0 0.0
        %3249 = vmatprep.subr.mxu0 0.0
        %3250 = vmatpush1.msra.mxu0 0.0
        %3251 = vmatprep.subr.mxu0 0.0
        %3252 = vmatpush1.msra.mxu0 0.0
        %3253 = vmatprep.subr.mxu0 0.0
        %3254 = vmatpush1.msra.mxu0 0.0
        %3255 = vmatprep.subr.mxu0 0.0
        %3256 = vmatpush1.msra.mxu0 0.0
        %3257 = vmatprep.subr.mxu0 0.0
        %3258 = vmatpush1.msra.mxu0 0.0
        %3259 = vmatprep.subr.mxu0 0.0
        %3260 = vmatpush1.msra.mxu0 0.0
        %3261 = vmatprep.subr.mxu0 0.0
        %3262 = vmatpush1.msra.mxu0 0.0
        %3263 = vmatprep.subr.mxu0 0.0
        %3264 = vmatpush1.msra.mxu0 0.0
        %3265 = vmatprep.subr.mxu0 0.0
        %3266 = vmatpush1.msra.mxu0 0.0
        %3267 = vmatprep.subr.mxu0 0.0
        %3268 = vmatpush1.msra.mxu0 0.0
        %3269 = vmatprep.subr.mxu0 0.0
        %3270 = vmatpush1.msra.mxu0 0.0
        %3271 = vmatprep.subr.mxu0 0.0
        %3272 = vmatpush1.msra.mxu0 %v3171
        %3273 = vmatprep.subr.mxu0 0.0
        %3274 = vmatpush1.msra.mxu0 %v3170
        %3275 = vmatprep.subr.mxu0 0.0
        %3276 = vmatpush1.msra.mxu0 %v3169
        %3277 = vmatprep.subr.mxu0 0.0
        %3278 = vmatpush1.msra.mxu0 %v3168
        %3279 = vmatprep.subr.mxu0 0.0
        %3280 = vmatpush2.msra.mxu0 0.0
        %3281 = vmatprep.subr.mxu0 0.0
        %3282 = vmatpush2.msra.mxu0 0.0
        %3283 = vmatprep.subr.mxu0 0.0
        %3284 = vmatpush2.msra.mxu0 0.0
        %3285 = vmatprep.subr.mxu0 0.0
        %3286 = vmatpush2.msra.mxu0 0.0
        %3287 = vmatprep.subr.mxu0 0.0
        %3288 = vmatpush2.msra.mxu0 0.0
        %3289 = vmatprep.subr.mxu0 0.0
        %3290 = vmatpush2.msra.mxu0 0.0
        %3291 = vmatprep.subr.mxu0 0.0
        %3292 = vmatpush2.msra.mxu0 0.0
        %3293 = vmatprep.subr.mxu0 0.0
        %3294 = vmatpush2.msra.mxu0 0.0
        %3295 = vmatprep.subr.mxu0 0.0
        %3296 = vmatpush2.msra.mxu0 0.0
        %3297 = vmatprep.subr.mxu0 0.0
        %3298 = vmatpush2.msra.mxu0 0.0
        %3299 = vmatprep.subr.mxu0 0.0
        %3300 = vmatpush2.msra.mxu0 0.0
        %3301 = vmatprep.subr.mxu0 0.0
        %3302 = vmatpush2.msra.mxu0 0.0
        %3303 = vmatprep.subr.mxu0 0.0
        %3304 = vmatpush2.msra.mxu0 0.0
        %3305 = vmatprep.subr.mxu0 0.0
        %3306 = vmatpush2.msra.mxu0 0.0
        %3307 = vmatprep.subr.mxu0 0.0
        %3308 = vmatpush2.msra.mxu0 0.0
        %3309 = vmatprep.subr.mxu0 0.0
        %3310 = vmatpush2.msra.mxu0 0.0
        %3311 = vmatprep.mubr.f32.mxu0 0.0
        %3312 = vmatmul.mubr.f32.gmra.mxu0 %v2713
        %v3313 = vpop.f32.mrf.mxu0
        %v3314 = vadd.f32 0.0, %v3313
        %v3315 = vpop.f32.mrf.mxu0
        %3316 = vdwg.mxu0
        %3317 = vmatprep.subr.mxu0 0.0
        %3318 = vmatpush1.msra.mxu0 0.0
        %3319 = vmatprep.subr.mxu0 0.0
        %3320 = vmatpush1.msra.mxu0 0.0
        %3321 = vmatprep.subr.mxu0 0.0
        %3322 = vmatpush1.msra.mxu0 0.0
        %3323 = vmatprep.subr.mxu0 0.0
        %3324 = vmatpush1.msra.mxu0 0.0
        %3325 = vmatprep.subr.mxu0 0.0
        %3326 = vmatpush1.msra.mxu0 0.0
        %3327 = vmatprep.subr.mxu0 0.0
        %3328 = vmatpush1.msra.mxu0 0.0
        %3329 = vmatprep.subr.mxu0 0.0
        %3330 = vmatpush1.msra.mxu0 0.0
        %3331 = vmatprep.subr.mxu0 0.0
        %3332 = vmatpush1.msra.mxu0 0.0
        %3333 = vmatprep.subr.mxu0 0.0
        %3334 = vmatpush1.msra.mxu0 0.0
        %3335 = vmatprep.subr.mxu0 0.0
        %3336 = vmatpush1.msra.mxu0 0.0
        %3337 = vmatprep.subr.mxu0 0.0
        %3338 = vmatpush1.msra.mxu0 0.0
        %3339 = vmatprep.subr.mxu0 0.0
        %3340 = vmatpush1.msra.mxu0 0.0
        %3341 = vmatprep.subr.mxu0 0.0
        %3342 = vmatpush1.msra.mxu0 %v3176
        %3343 = vmatprep.subr.mxu0 0.0
        %3344 = vmatpush1.msra.mxu0 %v3175
        %3345 = vmatprep.subr.mxu0 0.0
        %3346 = vmatpush1.msra.mxu0 %v3174
        %3347 = vmatprep.subr.mxu0 0.0
        %3348 = vmatpush1.msra.mxu0 %v3173
        %3349 = vmatprep.subr.mxu0 0.0
        %3350 = vmatpush2.msra.mxu0 0.0
        %3351 = vmatprep.subr.mxu0 0.0
        %3352 = vmatpush2.msra.mxu0 0.0
        %3353 = vmatprep.subr.mxu0 0.0
        %3354 = vmatpush2.msra.mxu0 0.0
        %3355 = vmatprep.subr.mxu0 0.0
        %3356 = vmatpush2.msra.mxu0 0.0
        %3357 = vmatprep.subr.mxu0 0.0
        %3358 = vmatpush2.msra.mxu0 0.0
        %3359 = vmatprep.subr.mxu0 0.0
        %3360 = vmatpush2.msra.mxu0 0.0
        %3361 = vmatprep.subr.mxu0 0.0
        %3362 = vmatpush2.msra.mxu0 0.0
        %3363 = vmatprep.subr.mxu0 0.0
        %3364 = vmatpush2.msra.mxu0 0.0
        %3365 = vmatprep.subr.mxu0 0.0
        %3366 = vmatpush2.msra.mxu0 0.0
        %3367 = vmatprep.subr.mxu0 0.0
        %3368 = vmatpush2.msra.mxu0 0.0
        %3369 = vmatprep.subr.mxu0 0.0
        %3370 = vmatpush2.msra.mxu0 0.0
        %3371 = vmatprep.subr.mxu0 0.0
        %3372 = vmatpush2.msra.mxu0 0.0
        %3373 = vmatprep.subr.mxu0 0.0
        %3374 = vmatpush2.msra.mxu0 0.0
        %3375 = vmatprep.subr.mxu0 0.0
        %3376 = vmatpush2.msra.mxu0 0.0
        %3377 = vmatprep.subr.mxu0 0.0
        %3378 = vmatpush2.msra.mxu0 0.0
        %3379 = vmatprep.subr.mxu0 0.0
        %3380 = vmatpush2.msra.mxu0 0.0
        %3381 = vmatprep.mubr.f32.mxu0 0.0
        %3382 = vmatmul.mubr.f32.gmra.mxu0 %v2713
        %v3383 = vpop.f32.mrf.mxu0
        %v3384 = vadd.f32 0.0, %v3383
        %v3385 = vpop.f32.mrf.mxu0
        %3386 = vdwg.mxu0
        %v3388 = vsel %vm673, %v3244, 0
        %v3391 = vsel %vm673, %v3314, 0
        %3393 = vmatprep.subr.mxu0 0.0
        %3394 = vmatpush1.xpose.msra.mxu0 0.0
        %3395 = vmatprep.subr.mxu0 0.0
        %3396 = vmatpush1.xpose.msra.mxu0 0.0
        %3397 = vmatprep.subr.mxu0 0.0
        %3398 = vmatpush1.xpose.msra.mxu0 0.0
        %3399 = vmatprep.subr.mxu0 0.0
        %3400 = vmatpush1.xpose.msra.mxu0 0.0
        %3401 = vmatprep.subr.mxu0 0.0
        %3402 = vmatpush1.xpose.msra.mxu0 0.0
        %3403 = vmatprep.subr.mxu0 0.0
        %3404 = vmatpush1.xpose.msra.mxu0 0.0
        %3405 = vmatprep.subr.mxu0 0.0
        %3406 = vmatpush1.xpose.msra.mxu0 0.0
        %3407 = vmatprep.subr.mxu0 0.0
        %3408 = vmatpush1.xpose.msra.mxu0 0.0
        %3409 = vmatprep.subr.mxu0 0.0
        %3410 = vmatpush1.xpose.msra.mxu0 0.0
        %3411 = vmatprep.subr.mxu0 0.0
        %3412 = vmatpush1.xpose.msra.mxu0 0.0
        %3413 = vmatprep.subr.mxu0 0.0
        %3414 = vmatpush1.xpose.msra.mxu0 0.0
        %3415 = vmatprep.subr.mxu0 0.0
        %3416 = vmatpush1.xpose.msra.mxu0 0.0
        %3417 = vmatprep.subr.mxu0 0.0
        %3418 = vmatpush1.xpose.msra.mxu0 0.0
        %3419 = vmatprep.subr.mxu0 0.0
        %3420 = vmatpush1.xpose.msra.mxu0 0.0
        %3421 = vmatprep.subr.mxu0 0.0
        %3422 = vmatpush1.xpose.msra.mxu0 0.0
        %3423 = vmatprep.subr.mxu0 0.0
        %3424 = vmatpush1.xpose.msra.mxu0 %v3391
        %3425 = vmatprep.subr.mxu0 0.0
        %3426 = vmatpush2.xpose.msra.mxu0 0.0
        %3427 = vmatprep.subr.mxu0 0.0
        %3428 = vmatpush2.xpose.msra.mxu0 0.0
        %3429 = vmatprep.subr.mxu0 0.0
        %3430 = vmatpush2.xpose.msra.mxu0 0.0
        %3431 = vmatprep.subr.mxu0 0.0
        %3432 = vmatpush2.xpose.msra.mxu0 0.0
        %3433 = vmatprep.subr.mxu0 0.0
        %3434 = vmatpush2.xpose.msra.mxu0 0.0
        %3435 = vmatprep.subr.mxu0 0.0
        %3436 = vmatpush2.xpose.msra.mxu0 0.0
        %3437 = vmatprep.subr.mxu0 0.0
        %3438 = vmatpush2.xpose.msra.mxu0 0.0
        %3439 = vmatprep.subr.mxu0 0.0
        %3440 = vmatpush2.xpose.msra.mxu0 0.0
        %3441 = vmatprep.subr.mxu0 0.0
        %3442 = vmatpush2.xpose.msra.mxu0 0.0
        %3443 = vmatprep.subr.mxu0 0.0
        %3444 = vmatpush2.xpose.msra.mxu0 0.0
        %3445 = vmatprep.subr.mxu0 0.0
        %3446 = vmatpush2.xpose.msra.mxu0 0.0
        %3447 = vmatprep.subr.mxu0 0.0
        %3448 = vmatpush2.xpose.msra.mxu0 0.0
        %3449 = vmatprep.subr.mxu0 0.0
        %3450 = vmatpush2.xpose.msra.mxu0 0.0
        %3451 = vmatprep.subr.mxu0 0.0
        %3452 = vmatpush2.xpose.msra.mxu0 0.0
        %3453 = vmatprep.subr.mxu0 0.0
        %3454 = vmatpush2.xpose.msra.mxu0 0.0
        %3455 = vmatprep.subr.mxu0 0.0
        %3456 = vmatpush2.xpose.msra.mxu0 0.0
        %3457 = vmatprep.mubr.f32.mxu0 0.0
        %3458 = vmatmul.mubr.f32.gmra.mxu0 %v3388
        %v3459 = vpop.f32.mrf.mxu0
        %v3460 = vadd.f32 0.0, %v3459
        %v3461 = vpop.f32.mrf.mxu0
        %3462 = vdwg.mxu0
        %v3463 = vmul.f32 %v3460, 0.35355338
        %v3464 = vsel %vm673, %v3463, -inf
        %3465 = vmax.xlane.f32.xlu0 %v3464
        %v3466 = vpop.xlane.xlu0 %3465
        %v3467 = vsub.f32 %v3463, %v3466
        %v3468 = vmul.f32 %v3467, 1.442695
        %v3469 = vpow.pop %v3468
        %v3470 = vsel %vm673, %v3469, 0.0
        %3471 = vadd.xlane.f32.xlu0 %v3470
        %v3472 = vpop.xlane.xlu0 %3471
        %v3473 = vrcp.pop %v3472
        %v3474 = vmul.f32 %v3469, %v3473
        %v3476 = vsel %vm673, %v3474, 0
        %3478 = vmatprep.subr.mxu0 0.0
        %3479 = vmatpush1.msra.mxu0 0.0
        %3480 = vmatprep.subr.mxu0 0.0
        %3481 = vmatpush1.msra.mxu0 0.0
        %3482 = vmatprep.subr.mxu0 0.0
        %3483 = vmatpush1.msra.mxu0 0.0
        %3484 = vmatprep.subr.mxu0 0.0
        %3485 = vmatpush1.msra.mxu0 0.0
        %3486 = vmatprep.subr.mxu0 0.0
        %3487 = vmatpush1.msra.mxu0 0.0
        %3488 = vmatprep.subr.mxu0 0.0
        %3489 = vmatpush1.msra.mxu0 0.0
        %3490 = vmatprep.subr.mxu0 0.0
        %3491 = vmatpush1.msra.mxu0 0.0
        %3492 = vmatprep.subr.mxu0 0.0
        %3493 = vmatpush1.msra.mxu0 0.0
        %3494 = vmatprep.subr.mxu0 0.0
        %3495 = vmatpush1.msra.mxu0 0.0
        %3496 = vmatprep.subr.mxu0 0.0
        %3497 = vmatpush1.msra.mxu0 0.0
        %3498 = vmatprep.subr.mxu0 0.0
        %3499 = vmatpush1.msra.mxu0 0.0
        %3500 = vmatprep.subr.mxu0 0.0
        %3501 = vmatpush1.msra.mxu0 0.0
        %3502 = vmatprep.subr.mxu0 0.0
        %3503 = vmatpush1.msra.mxu0 0.0
        %3504 = vmatprep.subr.mxu0 0.0
        %3505 = vmatpush1.msra.mxu0 0.0
        %3506 = vmatprep.subr.mxu0 0.0
        %3507 = vmatpush1.msra.mxu0 0.0
        %3508 = vmatprep.subr.mxu0 0.0
        %3509 = vmatpush1.msra.mxu0 %v3384
        %3510 = vmatprep.subr.mxu0 0.0
        %3511 = vmatpush2.msra.mxu0 0.0
        %3512 = vmatprep.subr.mxu0 0.0
        %3513 = vmatpush2.msra.mxu0 0.0
        %3514 = vmatprep.subr.mxu0 0.0
        %3515 = vmatpush2.msra.mxu0 0.0
        %3516 = vmatprep.subr.mxu0 0.0
        %3517 = vmatpush2.msra.mxu0 0.0
        %3518 = vmatprep.subr.mxu0 0.0
        %3519 = vmatpush2.msra.mxu0 0.0
        %3520 = vmatprep.subr.mxu0 0.0
        %3521 = vmatpush2.msra.mxu0 0.0
        %3522 = vmatprep.subr.mxu0 0.0
        %3523 = vmatpush2.msra.mxu0 0.0
        %3524 = vmatprep.subr.mxu0 0.0
        %3525 = vmatpush2.msra.mxu0 0.0
        %3526 = vmatprep.subr.mxu0 0.0
        %3527 = vmatpush2.msra.mxu0 0.0
        %3528 = vmatprep.subr.mxu0 0.0
        %3529 = vmatpush2.msra.mxu0 0.0
        %3530 = vmatprep.subr.mxu0 0.0
        %3531 = vmatpush2.msra.mxu0 0.0
        %3532 = vmatprep.subr.mxu0 0.0
        %3533 = vmatpush2.msra.mxu0 0.0
        %3534 = vmatprep.subr.mxu0 0.0
        %3535 = vmatpush2.msra.mxu0 0.0
        %3536 = vmatprep.subr.mxu0 0.0
        %3537 = vmatpush2.msra.mxu0 0.0
        %3538 = vmatprep.subr.mxu0 0.0
        %3539 = vmatpush2.msra.mxu0 0.0
        %3540 = vmatprep.subr.mxu0 0.0
        %3541 = vmatpush2.msra.mxu0 0.0
        %3542 = vmatprep.mubr.f32.mxu0 0.0
        %3543 = vmatmul.mubr.f32.gmra.mxu0 %v3476
        %v3544 = vpop.f32.mrf.mxu0
        %v3545 = vadd.f32 0.0, %v3544
        %v3546 = vpop.f32.mrf.mxu0
        %3547 = vdwg.mxu0
        %s3548 = scalar_lea.vmem %s3, 40
        %v3549 = vld [vmem:[%s3548] sm:$0xff]
        %v3551 = vsel %vm673, %v3545, 0
        %3553 = vmatprep.subr.mxu0 0.0
        %3554 = vmatpush1.msra.mxu0 0.0
        %3555 = vmatprep.subr.mxu0 0.0
        %3556 = vmatpush1.msra.mxu0 0.0
        %3557 = vmatprep.subr.mxu0 0.0
        %3558 = vmatpush1.msra.mxu0 0.0
        %3559 = vmatprep.subr.mxu0 0.0
        %3560 = vmatpush1.msra.mxu0 0.0
        %3561 = vmatprep.subr.mxu0 0.0
        %3562 = vmatpush1.msra.mxu0 0.0
        %3563 = vmatprep.subr.mxu0 0.0
        %3564 = vmatpush1.msra.mxu0 0.0
        %3565 = vmatprep.subr.mxu0 0.0
        %3566 = vmatpush1.msra.mxu0 0.0
        %3567 = vmatprep.subr.mxu0 0.0
        %3568 = vmatpush1.msra.mxu0 0.0
        %3569 = vmatprep.subr.mxu0 0.0
        %3570 = vmatpush1.msra.mxu0 0.0
        %3571 = vmatprep.subr.mxu0 0.0
        %3572 = vmatpush1.msra.mxu0 0.0
        %3573 = vmatprep.subr.mxu0 0.0
        %3574 = vmatpush1.msra.mxu0 0.0
        %3575 = vmatprep.subr.mxu0 0.0
        %3576 = vmatpush1.msra.mxu0 0.0
        %3577 = vmatprep.subr.mxu0 0.0
        %3578 = vmatpush1.msra.mxu0 0.0
        %3579 = vmatprep.subr.mxu0 0.0
        %3580 = vmatpush1.msra.mxu0 0.0
        %3581 = vmatprep.subr.mxu0 0.0
        %3582 = vmatpush1.msra.mxu0 0.0
        %3583 = vmatprep.subr.mxu0 0.0
        %3584 = vmatpush1.msra.mxu0 %v3549
        %3585 = vmatprep.subr.mxu0 0.0
        %3586 = vmatpush2.msra.mxu0 0.0
        %3587 = vmatprep.subr.mxu0 0.0
        %3588 = vmatpush2.msra.mxu0 0.0
        %3589 = vmatprep.subr.mxu0 0.0
        %3590 = vmatpush2.msra.mxu0 0.0
        %3591 = vmatprep.subr.mxu0 0.0
        %3592 = vmatpush2.msra.mxu0 0.0
        %3593 = vmatprep.subr.mxu0 0.0
        %3594 = vmatpush2.msra.mxu0 0.0
        %3595 = vmatprep.subr.mxu0 0.0
        %3596 = vmatpush2.msra.mxu0 0.0
        %3597 = vmatprep.subr.mxu0 0.0
        %3598 = vmatpush2.msra.mxu0 0.0
        %3599 = vmatprep.subr.mxu0 0.0
        %3600 = vmatpush2.msra.mxu0 0.0
        %3601 = vmatprep.subr.mxu0 0.0
        %3602 = vmatpush2.msra.mxu0 0.0
        %3603 = vmatprep.subr.mxu0 0.0
        %3604 = vmatpush2.msra.mxu0 0.0
        %3605 = vmatprep.subr.mxu0 0.0
        %3606 = vmatpush2.msra.mxu0 0.0
        %3607 = vmatprep.subr.mxu0 0.0
        %3608 = vmatpush2.msra.mxu0 0.0
        %3609 = vmatprep.subr.mxu0 0.0
        %3610 = vmatpush2.msra.mxu0 0.0
        %3611 = vmatprep.subr.mxu0 0.0
        %3612 = vmatpush2.msra.mxu0 0.0
        %3613 = vmatprep.subr.mxu0 0.0
        %3614 = vmatpush2.msra.mxu0 0.0
        %3615 = vmatprep.subr.mxu0 0.0
        %3616 = vmatpush2.msra.mxu0 0.0
        %3617 = vmatprep.mubr.f32.mxu0 0.0
        %3618 = vmatmul.mubr.f32.gmra.mxu0 %v3551
        %v3619 = vpop.f32.mrf.mxu0
        %v3620 = vadd.f32 0.0, %v3619
        %v3621 = vpop.f32.mrf.mxu0
        %3622 = vdwg.mxu0
        %v3623 = vadd.f32 %v3161, %v3620
        %s3624 = scalar_lea.vmem %s2, 448
        %v3625 = vld [vmem:[%s3624] sm:$0xff]
        %v3626 = vld [vmem:[%s3624 + $0x8] sm:$0xff]
        %v3627 = vld [vmem:[%s3624 + $0x10] sm:$0xff]
        %v3628 = vld [vmem:[%s3624 + $0x18] sm:$0xff]
        %s3629 = scalar_lea.vmem %s2, 576
        %v3630 = vld [vmem:[%s3629] sm:$0xff]
        %v3631 = vld [vmem:[%s3629 + $0x8] sm:$0xff]
        %v3632 = vld [vmem:[%s3629 + $0x10] sm:$0xff]
        %v3633 = vld [vmem:[%s3629 + $0x18] sm:$0xff]
        %s3634 = scalar_lea.vmem %s2, 704
        %v3635 = vld [vmem:[%s3634] sm:$0xff]
        %v3636 = vld [vmem:[%s3634 + $0x8] sm:$0xff]
        %v3637 = vld [vmem:[%s3634 + $0x10] sm:$0xff]
        %v3638 = vld [vmem:[%s3634 + $0x18] sm:$0xff]
        %3639 = vmatprep.subr.mxu0 0.0
        %3640 = vmatpush1.msra.mxu0 0.0
        %3641 = vmatprep.subr.mxu0 0.0
        %3642 = vmatpush1.msra.mxu0 0.0
        %3643 = vmatprep.subr.mxu0 0.0
        %3644 = vmatpush1.msra.mxu0 0.0
        %3645 = vmatprep.subr.mxu0 0.0
        %3646 = vmatpush1.msra.mxu0 0.0
        %3647 = vmatprep.subr.mxu0 0.0
        %3648 = vmatpush1.msra.mxu0 0.0
        %3649 = vmatprep.subr.mxu0 0.0
        %3650 = vmatpush1.msra.mxu0 0.0
        %3651 = vmatprep.subr.mxu0 0.0
        %3652 = vmatpush1.msra.mxu0 0.0
        %3653 = vmatprep.subr.mxu0 0.0
        %3654 = vmatpush1.msra.mxu0 0.0
        %3655 = vmatprep.subr.mxu0 0.0
        %3656 = vmatpush1.msra.mxu0 0.0
        %3657 = vmatprep.subr.mxu0 0.0
        %3658 = vmatpush1.msra.mxu0 0.0
        %3659 = vmatprep.subr.mxu0 0.0
        %3660 = vmatpush1.msra.mxu0 0.0
        %3661 = vmatprep.subr.mxu0 0.0
        %3662 = vmatpush1.msra.mxu0 0.0
        %3663 = vmatprep.subr.mxu0 0.0
        %3664 = vmatpush1.msra.mxu0 %v3628
        %3665 = vmatprep.subr.mxu0 0.0
        %3666 = vmatpush1.msra.mxu0 %v3627
        %3667 = vmatprep.subr.mxu0 0.0
        %3668 = vmatpush1.msra.mxu0 %v3626
        %3669 = vmatprep.subr.mxu0 0.0
        %3670 = vmatpush1.msra.mxu0 %v3625
        %3671 = vmatprep.subr.mxu0 0.0
        %3672 = vmatpush2.msra.mxu0 0.0
        %3673 = vmatprep.subr.mxu0 0.0
        %3674 = vmatpush2.msra.mxu0 0.0
        %3675 = vmatprep.subr.mxu0 0.0
        %3676 = vmatpush2.msra.mxu0 0.0
        %3677 = vmatprep.subr.mxu0 0.0
        %3678 = vmatpush2.msra.mxu0 0.0
        %3679 = vmatprep.subr.mxu0 0.0
        %3680 = vmatpush2.msra.mxu0 0.0
        %3681 = vmatprep.subr.mxu0 0.0
        %3682 = vmatpush2.msra.mxu0 0.0
        %3683 = vmatprep.subr.mxu0 0.0
        %3684 = vmatpush2.msra.mxu0 0.0
        %3685 = vmatprep.subr.mxu0 0.0
        %3686 = vmatpush2.msra.mxu0 0.0
        %3687 = vmatprep.subr.mxu0 0.0
        %3688 = vmatpush2.msra.mxu0 0.0
        %3689 = vmatprep.subr.mxu0 0.0
        %3690 = vmatpush2.msra.mxu0 0.0
        %3691 = vmatprep.subr.mxu0 0.0
        %3692 = vmatpush2.msra.mxu0 0.0
        %3693 = vmatprep.subr.mxu0 0.0
        %3694 = vmatpush2.msra.mxu0 0.0
        %3695 = vmatprep.subr.mxu0 0.0
        %3696 = vmatpush2.msra.mxu0 0.0
        %3697 = vmatprep.subr.mxu0 0.0
        %3698 = vmatpush2.msra.mxu0 0.0
        %3699 = vmatprep.subr.mxu0 0.0
        %3700 = vmatpush2.msra.mxu0 0.0
        %3701 = vmatprep.subr.mxu0 0.0
        %3702 = vmatpush2.msra.mxu0 0.0
        %3703 = vmatprep.mubr.f32.mxu0 0.0
        %3704 = vmatmul.mubr.f32.gmra.mxu0 %v2713
        %v3705 = vpop.f32.mrf.mxu0
        %v3706 = vadd.f32 0.0, %v3705
        %v3707 = vpop.f32.mrf.mxu0
        %3708 = vdwg.mxu0
        %3709 = vmatprep.subr.mxu0 0.0
        %3710 = vmatpush1.msra.mxu0 0.0
        %3711 = vmatprep.subr.mxu0 0.0
        %3712 = vmatpush1.msra.mxu0 0.0
        %3713 = vmatprep.subr.mxu0 0.0
        %3714 = vmatpush1.msra.mxu0 0.0
        %3715 = vmatprep.subr.mxu0 0.0
        %3716 = vmatpush1.msra.mxu0 0.0
        %3717 = vmatprep.subr.mxu0 0.0
        %3718 = vmatpush1.msra.mxu0 0.0
        %3719 = vmatprep.subr.mxu0 0.0
        %3720 = vmatpush1.msra.mxu0 0.0
        %3721 = vmatprep.subr.mxu0 0.0
        %3722 = vmatpush1.msra.mxu0 0.0
        %3723 = vmatprep.subr.mxu0 0.0
        %3724 = vmatpush1.msra.mxu0 0.0
        %3725 = vmatprep.subr.mxu0 0.0
        %3726 = vmatpush1.msra.mxu0 0.0
        %3727 = vmatprep.subr.mxu0 0.0
        %3728 = vmatpush1.msra.mxu0 0.0
        %3729 = vmatprep.subr.mxu0 0.0
        %3730 = vmatpush1.msra.mxu0 0.0
        %3731 = vmatprep.subr.mxu0 0.0
        %3732 = vmatpush1.msra.mxu0 0.0
        %3733 = vmatprep.subr.mxu0 0.0
        %3734 = vmatpush1.msra.mxu0 %v3633
        %3735 = vmatprep.subr.mxu0 0.0
        %3736 = vmatpush1.msra.mxu0 %v3632
        %3737 = vmatprep.subr.mxu0 0.0
        %3738 = vmatpush1.msra.mxu0 %v3631
        %3739 = vmatprep.subr.mxu0 0.0
        %3740 = vmatpush1.msra.mxu0 %v3630
        %3741 = vmatprep.subr.mxu0 0.0
        %3742 = vmatpush2.msra.mxu0 0.0
        %3743 = vmatprep.subr.mxu0 0.0
        %3744 = vmatpush2.msra.mxu0 0.0
        %3745 = vmatprep.subr.mxu0 0.0
        %3746 = vmatpush2.msra.mxu0 0.0
        %3747 = vmatprep.subr.mxu0 0.0
        %3748 = vmatpush2.msra.mxu0 0.0
        %3749 = vmatprep.subr.mxu0 0.0
        %3750 = vmatpush2.msra.mxu0 0.0
        %3751 = vmatprep.subr.mxu0 0.0
        %3752 = vmatpush2.msra.mxu0 0.0
        %3753 = vmatprep.subr.mxu0 0.0
        %3754 = vmatpush2.msra.mxu0 0.0
        %3755 = vmatprep.subr.mxu0 0.0
        %3756 = vmatpush2.msra.mxu0 0.0
        %3757 = vmatprep.subr.mxu0 0.0
        %3758 = vmatpush2.msra.mxu0 0.0
        %3759 = vmatprep.subr.mxu0 0.0
        %3760 = vmatpush2.msra.mxu0 0.0
        %3761 = vmatprep.subr.mxu0 0.0
        %3762 = vmatpush2.msra.mxu0 0.0
        %3763 = vmatprep.subr.mxu0 0.0
        %3764 = vmatpush2.msra.mxu0 0.0
        %3765 = vmatprep.subr.mxu0 0.0
        %3766 = vmatpush2.msra.mxu0 0.0
        %3767 = vmatprep.subr.mxu0 0.0
        %3768 = vmatpush2.msra.mxu0 0.0
        %3769 = vmatprep.subr.mxu0 0.0
        %3770 = vmatpush2.msra.mxu0 0.0
        %3771 = vmatprep.subr.mxu0 0.0
        %3772 = vmatpush2.msra.mxu0 0.0
        %3773 = vmatprep.mubr.f32.mxu0 0.0
        %3774 = vmatmul.mubr.f32.gmra.mxu0 %v2713
        %v3775 = vpop.f32.mrf.mxu0
        %v3776 = vadd.f32 0.0, %v3775
        %v3777 = vpop.f32.mrf.mxu0
        %3778 = vdwg.mxu0
        %3779 = vmatprep.subr.mxu0 0.0
        %3780 = vmatpush1.msra.mxu0 0.0
        %3781 = vmatprep.subr.mxu0 0.0
        %3782 = vmatpush1.msra.mxu0 0.0
        %3783 = vmatprep.subr.mxu0 0.0
        %3784 = vmatpush1.msra.mxu0 0.0
        %3785 = vmatprep.subr.mxu0 0.0
        %3786 = vmatpush1.msra.mxu0 0.0
        %3787 = vmatprep.subr.mxu0 0.0
        %3788 = vmatpush1.msra.mxu0 0.0
        %3789 = vmatprep.subr.mxu0 0.0
        %3790 = vmatpush1.msra.mxu0 0.0
        %3791 = vmatprep.subr.mxu0 0.0
        %3792 = vmatpush1.msra.mxu0 0.0
        %3793 = vmatprep.subr.mxu0 0.0
        %3794 = vmatpush1.msra.mxu0 0.0
        %3795 = vmatprep.subr.mxu0 0.0
        %3796 = vmatpush1.msra.mxu0 0.0
        %3797 = vmatprep.subr.mxu0 0.0
        %3798 = vmatpush1.msra.mxu0 0.0
        %3799 = vmatprep.subr.mxu0 0.0
        %3800 = vmatpush1.msra.mxu0 0.0
        %3801 = vmatprep.subr.mxu0 0.0
        %3802 = vmatpush1.msra.mxu0 0.0
        %3803 = vmatprep.subr.mxu0 0.0
        %3804 = vmatpush1.msra.mxu0 %v3638
        %3805 = vmatprep.subr.mxu0 0.0
        %3806 = vmatpush1.msra.mxu0 %v3637
        %3807 = vmatprep.subr.mxu0 0.0
        %3808 = vmatpush1.msra.mxu0 %v3636
        %3809 = vmatprep.subr.mxu0 0.0
        %3810 = vmatpush1.msra.mxu0 %v3635
        %3811 = vmatprep.subr.mxu0 0.0
        %3812 = vmatpush2.msra.mxu0 0.0
        %3813 = vmatprep.subr.mxu0 0.0
        %3814 = vmatpush2.msra.mxu0 0.0
        %3815 = vmatprep.subr.mxu0 0.0
        %3816 = vmatpush2.msra.mxu0 0.0
        %3817 = vmatprep.subr.mxu0 0.0
        %3818 = vmatpush2.msra.mxu0 0.0
        %3819 = vmatprep.subr.mxu0 0.0
        %3820 = vmatpush2.msra.mxu0 0.0
        %3821 = vmatprep.subr.mxu0 0.0
        %3822 = vmatpush2.msra.mxu0 0.0
        %3823 = vmatprep.subr.mxu0 0.0
        %3824 = vmatpush2.msra.mxu0 0.0
        %3825 = vmatprep.subr.mxu0 0.0
        %3826 = vmatpush2.msra.mxu0 0.0
        %3827 = vmatprep.subr.mxu0 0.0
        %3828 = vmatpush2.msra.mxu0 0.0
        %3829 = vmatprep.subr.mxu0 0.0
        %3830 = vmatpush2.msra.mxu0 0.0
        %3831 = vmatprep.subr.mxu0 0.0
        %3832 = vmatpush2.msra.mxu0 0.0
        %3833 = vmatprep.subr.mxu0 0.0
        %3834 = vmatpush2.msra.mxu0 0.0
        %3835 = vmatprep.subr.mxu0 0.0
        %3836 = vmatpush2.msra.mxu0 0.0
        %3837 = vmatprep.subr.mxu0 0.0
        %3838 = vmatpush2.msra.mxu0 0.0
        %3839 = vmatprep.subr.mxu0 0.0
        %3840 = vmatpush2.msra.mxu0 0.0
        %3841 = vmatprep.subr.mxu0 0.0
        %3842 = vmatpush2.msra.mxu0 0.0
        %3843 = vmatprep.mubr.f32.mxu0 0.0
        %3844 = vmatmul.mubr.f32.gmra.mxu0 %v2713
        %v3845 = vpop.f32.mrf.mxu0
        %v3846 = vadd.f32 0.0, %v3845
        %v3847 = vpop.f32.mrf.mxu0
        %3848 = vdwg.mxu0
        %v3850 = vsel %vm673, %v3706, 0
        %v3853 = vsel %vm673, %v3776, 0
        %3855 = vmatprep.subr.mxu0 0.0
        %3856 = vmatpush1.xpose.msra.mxu0 0.0
        %3857 = vmatprep.subr.mxu0 0.0
        %3858 = vmatpush1.xpose.msra.mxu0 0.0
        %3859 = vmatprep.subr.mxu0 0.0
        %3860 = vmatpush1.xpose.msra.mxu0 0.0
        %3861 = vmatprep.subr.mxu0 0.0
        %3862 = vmatpush1.xpose.msra.mxu0 0.0
        %3863 = vmatprep.subr.mxu0 0.0
        %3864 = vmatpush1.xpose.msra.mxu0 0.0
        %3865 = vmatprep.subr.mxu0 0.0
        %3866 = vmatpush1.xpose.msra.mxu0 0.0
        %3867 = vmatprep.subr.mxu0 0.0
        %3868 = vmatpush1.xpose.msra.mxu0 0.0
        %3869 = vmatprep.subr.mxu0 0.0
        %3870 = vmatpush1.xpose.msra.mxu0 0.0
        %3871 = vmatprep.subr.mxu0 0.0
        %3872 = vmatpush1.xpose.msra.mxu0 0.0
        %3873 = vmatprep.subr.mxu0 0.0
        %3874 = vmatpush1.xpose.msra.mxu0 0.0
        %3875 = vmatprep.subr.mxu0 0.0
        %3876 = vmatpush1.xpose.msra.mxu0 0.0
        %3877 = vmatprep.subr.mxu0 0.0
        %3878 = vmatpush1.xpose.msra.mxu0 0.0
        %3879 = vmatprep.subr.mxu0 0.0
        %3880 = vmatpush1.xpose.msra.mxu0 0.0
        %3881 = vmatprep.subr.mxu0 0.0
        %3882 = vmatpush1.xpose.msra.mxu0 0.0
        %3883 = vmatprep.subr.mxu0 0.0
        %3884 = vmatpush1.xpose.msra.mxu0 0.0
        %3885 = vmatprep.subr.mxu0 0.0
        %3886 = vmatpush1.xpose.msra.mxu0 %v3853
        %3887 = vmatprep.subr.mxu0 0.0
        %3888 = vmatpush2.xpose.msra.mxu0 0.0
        %3889 = vmatprep.subr.mxu0 0.0
        %3890 = vmatpush2.xpose.msra.mxu0 0.0
        %3891 = vmatprep.subr.mxu0 0.0
        %3892 = vmatpush2.xpose.msra.mxu0 0.0
        %3893 = vmatprep.subr.mxu0 0.0
        %3894 = vmatpush2.xpose.msra.mxu0 0.0
        %3895 = vmatprep.subr.mxu0 0.0
        %3896 = vmatpush2.xpose.msra.mxu0 0.0
        %3897 = vmatprep.subr.mxu0 0.0
        %3898 = vmatpush2.xpose.msra.mxu0 0.0
        %3899 = vmatprep.subr.mxu0 0.0
        %3900 = vmatpush2.xpose.msra.mxu0 0.0
        %3901 = vmatprep.subr.mxu0 0.0
        %3902 = vmatpush2.xpose.msra.mxu0 0.0
        %3903 = vmatprep.subr.mxu0 0.0
        %3904 = vmatpush2.xpose.msra.mxu0 0.0
        %3905 = vmatprep.subr.mxu0 0.0
        %3906 = vmatpush2.xpose.msra.mxu0 0.0
        %3907 = vmatprep.subr.mxu0 0.0
        %3908 = vmatpush2.xpose.msra.mxu0 0.0
        %3909 = vmatprep.subr.mxu0 0.0
        %3910 = vmatpush2.xpose.msra.mxu0 0.0
        %3911 = vmatprep.subr.mxu0 0.0
        %3912 = vmatpush2.xpose.msra.mxu0 0.0
        %3913 = vmatprep.subr.mxu0 0.0
        %3914 = vmatpush2.xpose.msra.mxu0 0.0
        %3915 = vmatprep.subr.mxu0 0.0
        %3916 = vmatpush2.xpose.msra.mxu0 0.0
        %3917 = vmatprep.subr.mxu0 0.0
        %3918 = vmatpush2.xpose.msra.mxu0 0.0
        %3919 = vmatprep.mubr.f32.mxu0 0.0
        %3920 = vmatmul.mubr.f32.gmra.mxu0 %v3850
        %v3921 = vpop.f32.mrf.mxu0
        %v3922 = vadd.f32 0.0, %v3921
        %v3923 = vpop.f32.mrf.mxu0
        %3924 = vdwg.mxu0
        %v3925 = vmul.f32 %v3922, 0.35355338
        %v3926 = vsel %vm673, %v3925, -inf
        %3927 = vmax.xlane.f32.xlu0 %v3926
        %v3928 = vpop.xlane.xlu0 %3927
        %v3929 = vsub.f32 %v3925, %v3928
        %v3930 = vmul.f32 %v3929, 1.442695
        %v3931 = vpow.pop %v3930
        %v3932 = vsel %vm673, %v3931, 0.0
        %3933 = vadd.xlane.f32.xlu0 %v3932
        %v3934 = vpop.xlane.xlu0 %3933
        %v3935 = vrcp.pop %v3934
        %v3936 = vmul.f32 %v3931, %v3935
        %v3938 = vsel %vm673, %v3936, 0
        %3940 = vmatprep.subr.mxu0 0.0
        %3941 = vmatpush1.msra.mxu0 0.0
        %3942 = vmatprep.subr.mxu0 0.0
        %3943 = vmatpush1.msra.mxu0 0.0
        %3944 = vmatprep.subr.mxu0 0.0
        %3945 = vmatpush1.msra.mxu0 0.0
        %3946 = vmatprep.subr.mxu0 0.0
        %3947 = vmatpush1.msra.mxu0 0.0
        %3948 = vmatprep.subr.mxu0 0.0
        %3949 = vmatpush1.msra.mxu0 0.0
        %3950 = vmatprep.subr.mxu0 0.0
        %3951 = vmatpush1.msra.mxu0 0.0
        %3952 = vmatprep.subr.mxu0 0.0
        %3953 = vmatpush1.msra.mxu0 0.0
        %3954 = vmatprep.subr.mxu0 0.0
        %3955 = vmatpush1.msra.mxu0 0.0
        %3956 = vmatprep.subr.mxu0 0.0
        %3957 = vmatpush1.msra.mxu0 0.0
        %3958 = vmatprep.subr.mxu0 0.0
        %3959 = vmatpush1.msra.mxu0 0.0
        %3960 = vmatprep.subr.mxu0 0.0
        %3961 = vmatpush1.msra.mxu0 0.0
        %3962 = vmatprep.subr.mxu0 0.0
        %3963 = vmatpush1.msra.mxu0 0.0
        %3964 = vmatprep.subr.mxu0 0.0
        %3965 = vmatpush1.msra.mxu0 0.0
        %3966 = vmatprep.subr.mxu0 0.0
        %3967 = vmatpush1.msra.mxu0 0.0
        %3968 = vmatprep.subr.mxu0 0.0
        %3969 = vmatpush1.msra.mxu0 0.0
        %3970 = vmatprep.subr.mxu0 0.0
        %3971 = vmatpush1.msra.mxu0 %v3846
        %3972 = vmatprep.subr.mxu0 0.0
        %3973 = vmatpush2.msra.mxu0 0.0
        %3974 = vmatprep.subr.mxu0 0.0
        %3975 = vmatpush2.msra.mxu0 0.0
        %3976 = vmatprep.subr.mxu0 0.0
        %3977 = vmatpush2.msra.mxu0 0.0
        %3978 = vmatprep.subr.mxu0 0.0
        %3979 = vmatpush2.msra.mxu0 0.0
        %3980 = vmatprep.subr.mxu0 0.0
        %3981 = vmatpush2.msra.mxu0 0.0
        %3982 = vmatprep.subr.mxu0 0.0
        %3983 = vmatpush2.msra.mxu0 0.0
        %3984 = vmatprep.subr.mxu0 0.0
        %3985 = vmatpush2.msra.mxu0 0.0
        %3986 = vmatprep.subr.mxu0 0.0
        %3987 = vmatpush2.msra.mxu0 0.0
        %3988 = vmatprep.subr.mxu0 0.0
        %3989 = vmatpush2.msra.mxu0 0.0
        %3990 = vmatprep.subr.mxu0 0.0
        %3991 = vmatpush2.msra.mxu0 0.0
        %3992 = vmatprep.subr.mxu0 0.0
        %3993 = vmatpush2.msra.mxu0 0.0
        %3994 = vmatprep.subr.mxu0 0.0
        %3995 = vmatpush2.msra.mxu0 0.0
        %3996 = vmatprep.subr.mxu0 0.0
        %3997 = vmatpush2.msra.mxu0 0.0
        %3998 = vmatprep.subr.mxu0 0.0
        %3999 = vmatpush2.msra.mxu0 0.0
        %4000 = vmatprep.subr.mxu0 0.0
        %4001 = vmatpush2.msra.mxu0 0.0
        %4002 = vmatprep.subr.mxu0 0.0
        %4003 = vmatpush2.msra.mxu0 0.0
        %4004 = vmatprep.mubr.f32.mxu0 0.0
        %4005 = vmatmul.mubr.f32.gmra.mxu0 %v3938
        %v4006 = vpop.f32.mrf.mxu0
        %v4007 = vadd.f32 0.0, %v4006
        %v4008 = vpop.f32.mrf.mxu0
        %4009 = vdwg.mxu0
        %s4010 = scalar_lea.vmem %s3, 48
        %v4011 = vld [vmem:[%s4010] sm:$0xff]
        %v4013 = vsel %vm673, %v4007, 0
        %4015 = vmatprep.subr.mxu0 0.0
        %4016 = vmatpush1.msra.mxu0 0.0
        %4017 = vmatprep.subr.mxu0 0.0
        %4018 = vmatpush1.msra.mxu0 0.0
        %4019 = vmatprep.subr.mxu0 0.0
        %4020 = vmatpush1.msra.mxu0 0.0
        %4021 = vmatprep.subr.mxu0 0.0
        %4022 = vmatpush1.msra.mxu0 0.0
        %4023 = vmatprep.subr.mxu0 0.0
        %4024 = vmatpush1.msra.mxu0 0.0
        %4025 = vmatprep.subr.mxu0 0.0
        %4026 = vmatpush1.msra.mxu0 0.0
        %4027 = vmatprep.subr.mxu0 0.0
        %4028 = vmatpush1.msra.mxu0 0.0
        %4029 = vmatprep.subr.mxu0 0.0
        %4030 = vmatpush1.msra.mxu0 0.0
        %4031 = vmatprep.subr.mxu0 0.0
        %4032 = vmatpush1.msra.mxu0 0.0
        %4033 = vmatprep.subr.mxu0 0.0
        %4034 = vmatpush1.msra.mxu0 0.0
        %4035 = vmatprep.subr.mxu0 0.0
        %4036 = vmatpush1.msra.mxu0 0.0
        %4037 = vmatprep.subr.mxu0 0.0
        %4038 = vmatpush1.msra.mxu0 0.0
        %4039 = vmatprep.subr.mxu0 0.0
        %4040 = vmatpush1.msra.mxu0 0.0
        %4041 = vmatprep.subr.mxu0 0.0
        %4042 = vmatpush1.msra.mxu0 0.0
        %4043 = vmatprep.subr.mxu0 0.0
        %4044 = vmatpush1.msra.mxu0 0.0
        %4045 = vmatprep.subr.mxu0 0.0
        %4046 = vmatpush1.msra.mxu0 %v4011
        %4047 = vmatprep.subr.mxu0 0.0
        %4048 = vmatpush2.msra.mxu0 0.0
        %4049 = vmatprep.subr.mxu0 0.0
        %4050 = vmatpush2.msra.mxu0 0.0
        %4051 = vmatprep.subr.mxu0 0.0
        %4052 = vmatpush2.msra.mxu0 0.0
        %4053 = vmatprep.subr.mxu0 0.0
        %4054 = vmatpush2.msra.mxu0 0.0
        %4055 = vmatprep.subr.mxu0 0.0
        %4056 = vmatpush2.msra.mxu0 0.0
        %4057 = vmatprep.subr.mxu0 0.0
        %4058 = vmatpush2.msra.mxu0 0.0
        %4059 = vmatprep.subr.mxu0 0.0
        %4060 = vmatpush2.msra.mxu0 0.0
        %4061 = vmatprep.subr.mxu0 0.0
        %4062 = vmatpush2.msra.mxu0 0.0
        %4063 = vmatprep.subr.mxu0 0.0
        %4064 = vmatpush2.msra.mxu0 0.0
        %4065 = vmatprep.subr.mxu0 0.0
        %4066 = vmatpush2.msra.mxu0 0.0
        %4067 = vmatprep.subr.mxu0 0.0
        %4068 = vmatpush2.msra.mxu0 0.0
        %4069 = vmatprep.subr.mxu0 0.0
        %4070 = vmatpush2.msra.mxu0 0.0
        %4071 = vmatprep.subr.mxu0 0.0
        %4072 = vmatpush2.msra.mxu0 0.0
        %4073 = vmatprep.subr.mxu0 0.0
        %4074 = vmatpush2.msra.mxu0 0.0
        %4075 = vmatprep.subr.mxu0 0.0
        %4076 = vmatpush2.msra.mxu0 0.0
        %4077 = vmatprep.subr.mxu0 0.0
        %4078 = vmatpush2.msra.mxu0 0.0
        %4079 = vmatprep.mubr.f32.mxu0 0.0
        %4080 = vmatmul.mubr.f32.gmra.mxu0 %v4013
        %v4081 = vpop.f32.mrf.mxu0
        %v4082 = vadd.f32 0.0, %v4081
        %v4083 = vpop.f32.mrf.mxu0
        %4084 = vdwg.mxu0
        %v4085 = vadd.f32 %v3623, %v4082
        %s4086 = scalar_lea.vmem %s2, 480
        %v4087 = vld [vmem:[%s4086] sm:$0xff]
        %v4088 = vld [vmem:[%s4086 + $0x8] sm:$0xff]
        %v4089 = vld [vmem:[%s4086 + $0x10] sm:$0xff]
        %v4090 = vld [vmem:[%s4086 + $0x18] sm:$0xff]
        %s4091 = scalar_lea.vmem %s2, 608
        %v4092 = vld [vmem:[%s4091] sm:$0xff]
        %v4093 = vld [vmem:[%s4091 + $0x8] sm:$0xff]
        %v4094 = vld [vmem:[%s4091 + $0x10] sm:$0xff]
        %v4095 = vld [vmem:[%s4091 + $0x18] sm:$0xff]
        %s4096 = scalar_lea.vmem %s2, 736
        %v4097 = vld [vmem:[%s4096] sm:$0xff]
        %v4098 = vld [vmem:[%s4096 + $0x8] sm:$0xff]
        %v4099 = vld [vmem:[%s4096 + $0x10] sm:$0xff]
        %v4100 = vld [vmem:[%s4096 + $0x18] sm:$0xff]
        %4101 = vmatprep.subr.mxu0 0.0
        %4102 = vmatpush1.msra.mxu0 0.0
        %4103 = vmatprep.subr.mxu0 0.0
        %4104 = vmatpush1.msra.mxu0 0.0
        %4105 = vmatprep.subr.mxu0 0.0
        %4106 = vmatpush1.msra.mxu0 0.0
        %4107 = vmatprep.subr.mxu0 0.0
        %4108 = vmatpush1.msra.mxu0 0.0
        %4109 = vmatprep.subr.mxu0 0.0
        %4110 = vmatpush1.msra.mxu0 0.0
        %4111 = vmatprep.subr.mxu0 0.0
        %4112 = vmatpush1.msra.mxu0 0.0
        %4113 = vmatprep.subr.mxu0 0.0
        %4114 = vmatpush1.msra.mxu0 0.0
        %4115 = vmatprep.subr.mxu0 0.0
        %4116 = vmatpush1.msra.mxu0 0.0
        %4117 = vmatprep.subr.mxu0 0.0
        %4118 = vmatpush1.msra.mxu0 0.0
        %4119 = vmatprep.subr.mxu0 0.0
        %4120 = vmatpush1.msra.mxu0 0.0
        %4121 = vmatprep.subr.mxu0 0.0
        %4122 = vmatpush1.msra.mxu0 0.0
        %4123 = vmatprep.subr.mxu0 0.0
        %4124 = vmatpush1.msra.mxu0 0.0
        %4125 = vmatprep.subr.mxu0 0.0
        %4126 = vmatpush1.msra.mxu0 %v4090
        %4127 = vmatprep.subr.mxu0 0.0
        %4128 = vmatpush1.msra.mxu0 %v4089
        %4129 = vmatprep.subr.mxu0 0.0
        %4130 = vmatpush1.msra.mxu0 %v4088
        %4131 = vmatprep.subr.mxu0 0.0
        %4132 = vmatpush1.msra.mxu0 %v4087
        %4133 = vmatprep.subr.mxu0 0.0
        %4134 = vmatpush2.msra.mxu0 0.0
        %4135 = vmatprep.subr.mxu0 0.0
        %4136 = vmatpush2.msra.mxu0 0.0
        %4137 = vmatprep.subr.mxu0 0.0
        %4138 = vmatpush2.msra.mxu0 0.0
        %4139 = vmatprep.subr.mxu0 0.0
        %4140 = vmatpush2.msra.mxu0 0.0
        %4141 = vmatprep.subr.mxu0 0.0
        %4142 = vmatpush2.msra.mxu0 0.0
        %4143 = vmatprep.subr.mxu0 0.0
        %4144 = vmatpush2.msra.mxu0 0.0
        %4145 = vmatprep.subr.mxu0 0.0
        %4146 = vmatpush2.msra.mxu0 0.0
        %4147 = vmatprep.subr.mxu0 0.0
        %4148 = vmatpush2.msra.mxu0 0.0
        %4149 = vmatprep.subr.mxu0 0.0
        %4150 = vmatpush2.msra.mxu0 0.0
        %4151 = vmatprep.subr.mxu0 0.0
        %4152 = vmatpush2.msra.mxu0 0.0
        %4153 = vmatprep.subr.mxu0 0.0
        %4154 = vmatpush2.msra.mxu0 0.0
        %4155 = vmatprep.subr.mxu0 0.0
        %4156 = vmatpush2.msra.mxu0 0.0
        %4157 = vmatprep.subr.mxu0 0.0
        %4158 = vmatpush2.msra.mxu0 0.0
        %4159 = vmatprep.subr.mxu0 0.0
        %4160 = vmatpush2.msra.mxu0 0.0
        %4161 = vmatprep.subr.mxu0 0.0
        %4162 = vmatpush2.msra.mxu0 0.0
        %4163 = vmatprep.subr.mxu0 0.0
        %4164 = vmatpush2.msra.mxu0 0.0
        %4165 = vmatprep.mubr.f32.mxu0 0.0
        %4166 = vmatmul.mubr.f32.gmra.mxu0 %v2713
        %v4167 = vpop.f32.mrf.mxu0
        %v4168 = vadd.f32 0.0, %v4167
        %v4169 = vpop.f32.mrf.mxu0
        %4170 = vdwg.mxu0
        %4171 = vmatprep.subr.mxu0 0.0
        %4172 = vmatpush1.msra.mxu0 0.0
        %4173 = vmatprep.subr.mxu0 0.0
        %4174 = vmatpush1.msra.mxu0 0.0
        %4175 = vmatprep.subr.mxu0 0.0
        %4176 = vmatpush1.msra.mxu0 0.0
        %4177 = vmatprep.subr.mxu0 0.0
        %4178 = vmatpush1.msra.mxu0 0.0
        %4179 = vmatprep.subr.mxu0 0.0
        %4180 = vmatpush1.msra.mxu0 0.0
        %4181 = vmatprep.subr.mxu0 0.0
        %4182 = vmatpush1.msra.mxu0 0.0
        %4183 = vmatprep.subr.mxu0 0.0
        %4184 = vmatpush1.msra.mxu0 0.0
        %4185 = vmatprep.subr.mxu0 0.0
        %4186 = vmatpush1.msra.mxu0 0.0
        %4187 = vmatprep.subr.mxu0 0.0
        %4188 = vmatpush1.msra.mxu0 0.0
        %4189 = vmatprep.subr.mxu0 0.0
        %4190 = vmatpush1.msra.mxu0 0.0
        %4191 = vmatprep.subr.mxu0 0.0
        %4192 = vmatpush1.msra.mxu0 0.0
        %4193 = vmatprep.subr.mxu0 0.0
        %4194 = vmatpush1.msra.mxu0 0.0
        %4195 = vmatprep.subr.mxu0 0.0
        %4196 = vmatpush1.msra.mxu0 %v4095
        %4197 = vmatprep.subr.mxu0 0.0
        %4198 = vmatpush1.msra.mxu0 %v4094
        %4199 = vmatprep.subr.mxu0 0.0
        %4200 = vmatpush1.msra.mxu0 %v4093
        %4201 = vmatprep.subr.mxu0 0.0
        %4202 = vmatpush1.msra.mxu0 %v4092
        %4203 = vmatprep.subr.mxu0 0.0
        %4204 = vmatpush2.msra.mxu0 0.0
        %4205 = vmatprep.subr.mxu0 0.0
        %4206 = vmatpush2.msra.mxu0 0.0
        %4207 = vmatprep.subr.mxu0 0.0
        %4208 = vmatpush2.msra.mxu0 0.0
        %4209 = vmatprep.subr.mxu0 0.0
        %4210 = vmatpush2.msra.mxu0 0.0
        %4211 = vmatprep.subr.mxu0 0.0
        %4212 = vmatpush2.msra.mxu0 0.0
        %4213 = vmatprep.subr.mxu0 0.0
        %4214 = vmatpush2.msra.mxu0 0.0
        %4215 = vmatprep.subr.mxu0 0.0
        %4216 = vmatpush2.msra.mxu0 0.0
        %4217 = vmatprep.subr.mxu0 0.0
        %4218 = vmatpush2.msra.mxu0 0.0
        %4219 = vmatprep.subr.mxu0 0.0
        %4220 = vmatpush2.msra.mxu0 0.0
        %4221 = vmatprep.subr.mxu0 0.0
        %4222 = vmatpush2.msra.mxu0 0.0
        %4223 = vmatprep.subr.mxu0 0.0
        %4224 = vmatpush2.msra.mxu0 0.0
        %4225 = vmatprep.subr.mxu0 0.0
        %4226 = vmatpush2.msra.mxu0 0.0
        %4227 = vmatprep.subr.mxu0 0.0
        %4228 = vmatpush2.msra.mxu0 0.0
        %4229 = vmatprep.subr.mxu0 0.0
        %4230 = vmatpush2.msra.mxu0 0.0
        %4231 = vmatprep.subr.mxu0 0.0
        %4232 = vmatpush2.msra.mxu0 0.0
        %4233 = vmatprep.subr.mxu0 0.0
        %4234 = vmatpush2.msra.mxu0 0.0
        %4235 = vmatprep.mubr.f32.mxu0 0.0
        %4236 = vmatmul.mubr.f32.gmra.mxu0 %v2713
        %v4237 = vpop.f32.mrf.mxu0
        %v4238 = vadd.f32 0.0, %v4237
        %v4239 = vpop.f32.mrf.mxu0
        %4240 = vdwg.mxu0
        %4241 = vmatprep.subr.mxu0 0.0
        %4242 = vmatpush1.msra.mxu0 0.0
        %4243 = vmatprep.subr.mxu0 0.0
        %4244 = vmatpush1.msra.mxu0 0.0
        %4245 = vmatprep.subr.mxu0 0.0
        %4246 = vmatpush1.msra.mxu0 0.0
        %4247 = vmatprep.subr.mxu0 0.0
        %4248 = vmatpush1.msra.mxu0 0.0
        %4249 = vmatprep.subr.mxu0 0.0
        %4250 = vmatpush1.msra.mxu0 0.0
        %4251 = vmatprep.subr.mxu0 0.0
        %4252 = vmatpush1.msra.mxu0 0.0
        %4253 = vmatprep.subr.mxu0 0.0
        %4254 = vmatpush1.msra.mxu0 0.0
        %4255 = vmatprep.subr.mxu0 0.0
        %4256 = vmatpush1.msra.mxu0 0.0
        %4257 = vmatprep.subr.mxu0 0.0
        %4258 = vmatpush1.msra.mxu0 0.0
        %4259 = vmatprep.subr.mxu0 0.0
        %4260 = vmatpush1.msra.mxu0 0.0
        %4261 = vmatprep.subr.mxu0 0.0
        %4262 = vmatpush1.msra.mxu0 0.0
        %4263 = vmatprep.subr.mxu0 0.0
        %4264 = vmatpush1.msra.mxu0 0.0
        %4265 = vmatprep.subr.mxu0 0.0
        %4266 = vmatpush1.msra.mxu0 %v4100
        %4267 = vmatprep.subr.mxu0 0.0
        %4268 = vmatpush1.msra.mxu0 %v4099
        %4269 = vmatprep.subr.mxu0 0.0
        %4270 = vmatpush1.msra.mxu0 %v4098
        %4271 = vmatprep.subr.mxu0 0.0
        %4272 = vmatpush1.msra.mxu0 %v4097
        %4273 = vmatprep.subr.mxu0 0.0
        %4274 = vmatpush2.msra.mxu0 0.0
        %4275 = vmatprep.subr.mxu0 0.0
        %4276 = vmatpush2.msra.mxu0 0.0
        %4277 = vmatprep.subr.mxu0 0.0
        %4278 = vmatpush2.msra.mxu0 0.0
        %4279 = vmatprep.subr.mxu0 0.0
        %4280 = vmatpush2.msra.mxu0 0.0
        %4281 = vmatprep.subr.mxu0 0.0
        %4282 = vmatpush2.msra.mxu0 0.0
        %4283 = vmatprep.subr.mxu0 0.0
        %4284 = vmatpush2.msra.mxu0 0.0
        %4285 = vmatprep.subr.mxu0 0.0
        %4286 = vmatpush2.msra.mxu0 0.0
        %4287 = vmatprep.subr.mxu0 0.0
        %4288 = vmatpush2.msra.mxu0 0.0
        %4289 = vmatprep.subr.mxu0 0.0
        %4290 = vmatpush2.msra.mxu0 0.0
        %4291 = vmatprep.subr.mxu0 0.0
        %4292 = vmatpush2.msra.mxu0 0.0
        %4293 = vmatprep.subr.mxu0 0.0
        %4294 = vmatpush2.msra.mxu0 0.0
        %4295 = vmatprep.subr.mxu0 0.0
        %4296 = vmatpush2.msra.mxu0 0.0
        %4297 = vmatprep.subr.mxu0 0.0
        %4298 = vmatpush2.msra.mxu0 0.0
        %4299 = vmatprep.subr.mxu0 0.0
        %4300 = vmatpush2.msra.mxu0 0.0
        %4301 = vmatprep.subr.mxu0 0.0
        %4302 = vmatpush2.msra.mxu0 0.0
        %4303 = vmatprep.subr.mxu0 0.0
        %4304 = vmatpush2.msra.mxu0 0.0
        %4305 = vmatprep.mubr.f32.mxu0 0.0
        %4306 = vmatmul.mubr.f32.gmra.mxu0 %v2713
        %v4307 = vpop.f32.mrf.mxu0
        %v4308 = vadd.f32 0.0, %v4307
        %v4309 = vpop.f32.mrf.mxu0
        %4310 = vdwg.mxu0
        %v4312 = vsel %vm673, %v4168, 0
        %v4315 = vsel %vm673, %v4238, 0
        %4317 = vmatprep.subr.mxu0 0.0
        %4318 = vmatpush1.xpose.msra.mxu0 0.0
        %4319 = vmatprep.subr.mxu0 0.0
        %4320 = vmatpush1.xpose.msra.mxu0 0.0
        %4321 = vmatprep.subr.mxu0 0.0
        %4322 = vmatpush1.xpose.msra.mxu0 0.0
        %4323 = vmatprep.subr.mxu0 0.0
        %4324 = vmatpush1.xpose.msra.mxu0 0.0
        %4325 = vmatprep.subr.mxu0 0.0
        %4326 = vmatpush1.xpose.msra.mxu0 0.0
        %4327 = vmatprep.subr.mxu0 0.0
        %4328 = vmatpush1.xpose.msra.mxu0 0.0
        %4329 = vmatprep.subr.mxu0 0.0
        %4330 = vmatpush1.xpose.msra.mxu0 0.0
        %4331 = vmatprep.subr.mxu0 0.0
        %4332 = vmatpush1.xpose.msra.mxu0 0.0
        %4333 = vmatprep.subr.mxu0 0.0
        %4334 = vmatpush1.xpose.msra.mxu0 0.0
        %4335 = vmatprep.subr.mxu0 0.0
        %4336 = vmatpush1.xpose.msra.mxu0 0.0
        %4337 = vmatprep.subr.mxu0 0.0
        %4338 = vmatpush1.xpose.msra.mxu0 0.0
        %4339 = vmatprep.subr.mxu0 0.0
        %4340 = vmatpush1.xpose.msra.mxu0 0.0
        %4341 = vmatprep.subr.mxu0 0.0
        %4342 = vmatpush1.xpose.msra.mxu0 0.0
        %4343 = vmatprep.subr.mxu0 0.0
        %4344 = vmatpush1.xpose.msra.mxu0 0.0
        %4345 = vmatprep.subr.mxu0 0.0
        %4346 = vmatpush1.xpose.msra.mxu0 0.0
        %4347 = vmatprep.subr.mxu0 0.0
        %4348 = vmatpush1.xpose.msra.mxu0 %v4315
        %4349 = vmatprep.subr.mxu0 0.0
        %4350 = vmatpush2.xpose.msra.mxu0 0.0
        %4351 = vmatprep.subr.mxu0 0.0
        %4352 = vmatpush2.xpose.msra.mxu0 0.0
        %4353 = vmatprep.subr.mxu0 0.0
        %4354 = vmatpush2.xpose.msra.mxu0 0.0
        %4355 = vmatprep.subr.mxu0 0.0
        %4356 = vmatpush2.xpose.msra.mxu0 0.0
        %4357 = vmatprep.subr.mxu0 0.0
        %4358 = vmatpush2.xpose.msra.mxu0 0.0
        %4359 = vmatprep.subr.mxu0 0.0
        %4360 = vmatpush2.xpose.msra.mxu0 0.0
        %4361 = vmatprep.subr.mxu0 0.0
        %4362 = vmatpush2.xpose.msra.mxu0 0.0
        %4363 = vmatprep.subr.mxu0 0.0
        %4364 = vmatpush2.xpose.msra.mxu0 0.0
        %4365 = vmatprep.subr.mxu0 0.0
        %4366 = vmatpush2.xpose.msra.mxu0 0.0
        %4367 = vmatprep.subr.mxu0 0.0
        %4368 = vmatpush2.xpose.msra.mxu0 0.0
        %4369 = vmatprep.subr.mxu0 0.0
        %4370 = vmatpush2.xpose.msra.mxu0 0.0
        %4371 = vmatprep.subr.mxu0 0.0
        %4372 = vmatpush2.xpose.msra.mxu0 0.0
        %4373 = vmatprep.subr.mxu0 0.0
        %4374 = vmatpush2.xpose.msra.mxu0 0.0
        %4375 = vmatprep.subr.mxu0 0.0
        %4376 = vmatpush2.xpose.msra.mxu0 0.0
        %4377 = vmatprep.subr.mxu0 0.0
        %4378 = vmatpush2.xpose.msra.mxu0 0.0
        %4379 = vmatprep.subr.mxu0 0.0
        %4380 = vmatpush2.xpose.msra.mxu0 0.0
        %4381 = vmatprep.mubr.f32.mxu0 0.0
        %4382 = vmatmul.mubr.f32.gmra.mxu0 %v4312
        %v4383 = vpop.f32.mrf.mxu0
        %v4384 = vadd.f32 0.0, %v4383
        %v4385 = vpop.f32.mrf.mxu0
        %4386 = vdwg.mxu0
        %v4387 = vmul.f32 %v4384, 0.35355338
        %v4388 = vsel %vm673, %v4387, -inf
        %4389 = vmax.xlane.f32.xlu0 %v4388
        %v4390 = vpop.xlane.xlu0 %4389
        %v4391 = vsub.f32 %v4387, %v4390
        %v4392 = vmul.f32 %v4391, 1.442695
        %v4393 = vpow.pop %v4392
        %v4394 = vsel %vm673, %v4393, 0.0
        %4395 = vadd.xlane.f32.xlu0 %v4394
        %v4396 = vpop.xlane.xlu0 %4395
        %v4397 = vrcp.pop %v4396
        %v4398 = vmul.f32 %v4393, %v4397
        %v4400 = vsel %vm673, %v4398, 0
        %4402 = vmatprep.subr.mxu0 0.0
        %4403 = vmatpush1.msra.mxu0 0.0
        %4404 = vmatprep.subr.mxu0 0.0
        %4405 = vmatpush1.msra.mxu0 0.0
        %4406 = vmatprep.subr.mxu0 0.0
        %4407 = vmatpush1.msra.mxu0 0.0
        %4408 = vmatprep.subr.mxu0 0.0
        %4409 = vmatpush1.msra.mxu0 0.0
        %4410 = vmatprep.subr.mxu0 0.0
        %4411 = vmatpush1.msra.mxu0 0.0
        %4412 = vmatprep.subr.mxu0 0.0
        %4413 = vmatpush1.msra.mxu0 0.0
        %4414 = vmatprep.subr.mxu0 0.0
        %4415 = vmatpush1.msra.mxu0 0.0
        %4416 = vmatprep.subr.mxu0 0.0
        %4417 = vmatpush1.msra.mxu0 0.0
        %4418 = vmatprep.subr.mxu0 0.0
        %4419 = vmatpush1.msra.mxu0 0.0
        %4420 = vmatprep.subr.mxu0 0.0
        %4421 = vmatpush1.msra.mxu0 0.0
        %4422 = vmatprep.subr.mxu0 0.0
        %4423 = vmatpush1.msra.mxu0 0.0
        %4424 = vmatprep.subr.mxu0 0.0
        %4425 = vmatpush1.msra.mxu0 0.0
        %4426 = vmatprep.subr.mxu0 0.0
        %4427 = vmatpush1.msra.mxu0 0.0
        %4428 = vmatprep.subr.mxu0 0.0
        %4429 = vmatpush1.msra.mxu0 0.0
        %4430 = vmatprep.subr.mxu0 0.0
        %4431 = vmatpush1.msra.mxu0 0.0
        %4432 = vmatprep.subr.mxu0 0.0
        %4433 = vmatpush1.msra.mxu0 %v4308
        %4434 = vmatprep.subr.mxu0 0.0
        %4435 = vmatpush2.msra.mxu0 0.0
        %4436 = vmatprep.subr.mxu0 0.0
        %4437 = vmatpush2.msra.mxu0 0.0
        %4438 = vmatprep.subr.mxu0 0.0
        %4439 = vmatpush2.msra.mxu0 0.0
        %4440 = vmatprep.subr.mxu0 0.0
        %4441 = vmatpush2.msra.mxu0 0.0
        %4442 = vmatprep.subr.mxu0 0.0
        %4443 = vmatpush2.msra.mxu0 0.0
        %4444 = vmatprep.subr.mxu0 0.0
        %4445 = vmatpush2.msra.mxu0 0.0
        %4446 = vmatprep.subr.mxu0 0.0
        %4447 = vmatpush2.msra.mxu0 0.0
        %4448 = vmatprep.subr.mxu0 0.0
        %4449 = vmatpush2.msra.mxu0 0.0
        %4450 = vmatprep.subr.mxu0 0.0
        %4451 = vmatpush2.msra.mxu0 0.0
        %4452 = vmatprep.subr.mxu0 0.0
        %4453 = vmatpush2.msra.mxu0 0.0
        %4454 = vmatprep.subr.mxu0 0.0
        %4455 = vmatpush2.msra.mxu0 0.0
        %4456 = vmatprep.subr.mxu0 0.0
        %4457 = vmatpush2.msra.mxu0 0.0
        %4458 = vmatprep.subr.mxu0 0.0
        %4459 = vmatpush2.msra.mxu0 0.0
        %4460 = vmatprep.subr.mxu0 0.0
        %4461 = vmatpush2.msra.mxu0 0.0
        %4462 = vmatprep.subr.mxu0 0.0
        %4463 = vmatpush2.msra.mxu0 0.0
        %4464 = vmatprep.subr.mxu0 0.0
        %4465 = vmatpush2.msra.mxu0 0.0
        %4466 = vmatprep.mubr.f32.mxu0 0.0
        %4467 = vmatmul.mubr.f32.gmra.mxu0 %v4400
        %v4468 = vpop.f32.mrf.mxu0
        %v4469 = vadd.f32 0.0, %v4468
        %v4470 = vpop.f32.mrf.mxu0
        %4471 = vdwg.mxu0
        %s4472 = scalar_lea.vmem %s3, 56
        %v4473 = vld [vmem:[%s4472] sm:$0xff]
        %v4475 = vsel %vm673, %v4469, 0
        %4477 = vmatprep.subr.mxu0 0.0
        %4478 = vmatpush1.msra.mxu0 0.0
        %4479 = vmatprep.subr.mxu0 0.0
        %4480 = vmatpush1.msra.mxu0 0.0
        %4481 = vmatprep.subr.mxu0 0.0
        %4482 = vmatpush1.msra.mxu0 0.0
        %4483 = vmatprep.subr.mxu0 0.0
        %4484 = vmatpush1.msra.mxu0 0.0
        %4485 = vmatprep.subr.mxu0 0.0
        %4486 = vmatpush1.msra.mxu0 0.0
        %4487 = vmatprep.subr.mxu0 0.0
        %4488 = vmatpush1.msra.mxu0 0.0
        %4489 = vmatprep.subr.mxu0 0.0
        %4490 = vmatpush1.msra.mxu0 0.0
        %4491 = vmatprep.subr.mxu0 0.0
        %4492 = vmatpush1.msra.mxu0 0.0
        %4493 = vmatprep.subr.mxu0 0.0
        %4494 = vmatpush1.msra.mxu0 0.0
        %4495 = vmatprep.subr.mxu0 0.0
        %4496 = vmatpush1.msra.mxu0 0.0
        %4497 = vmatprep.subr.mxu0 0.0
        %4498 = vmatpush1.msra.mxu0 0.0
        %4499 = vmatprep.subr.mxu0 0.0
        %4500 = vmatpush1.msra.mxu0 0.0
        %4501 = vmatprep.subr.mxu0 0.0
        %4502 = vmatpush1.msra.mxu0 0.0
        %4503 = vmatprep.subr.mxu0 0.0
        %4504 = vmatpush1.msra.mxu0 0.0
        %4505 = vmatprep.subr.mxu0 0.0
        %4506 = vmatpush1.msra.mxu0 0.0
        %4507 = vmatprep.subr.mxu0 0.0
        %4508 = vmatpush1.msra.mxu0 %v4473
        %4509 = vmatprep.subr.mxu0 0.0
        %4510 = vmatpush2.msra.mxu0 0.0
        %4511 = vmatprep.subr.mxu0 0.0
        %4512 = vmatpush2.msra.mxu0 0.0
        %4513 = vmatprep.subr.mxu0 0.0
        %4514 = vmatpush2.msra.mxu0 0.0
        %4515 = vmatprep.subr.mxu0 0.0
        %4516 = vmatpush2.msra.mxu0 0.0
        %4517 = vmatprep.subr.mxu0 0.0
        %4518 = vmatpush2.msra.mxu0 0.0
        %4519 = vmatprep.subr.mxu0 0.0
        %4520 = vmatpush2.msra.mxu0 0.0
        %4521 = vmatprep.subr.mxu0 0.0
        %4522 = vmatpush2.msra.mxu0 0.0
        %4523 = vmatprep.subr.mxu0 0.0
        %4524 = vmatpush2.msra.mxu0 0.0
        %4525 = vmatprep.subr.mxu0 0.0
        %4526 = vmatpush2.msra.mxu0 0.0
        %4527 = vmatprep.subr.mxu0 0.0
        %4528 = vmatpush2.msra.mxu0 0.0
        %4529 = vmatprep.subr.mxu0 0.0
        %4530 = vmatpush2.msra.mxu0 0.0
        %4531 = vmatprep.subr.mxu0 0.0
        %4532 = vmatpush2.msra.mxu0 0.0
        %4533 = vmatprep.subr.mxu0 0.0
        %4534 = vmatpush2.msra.mxu0 0.0
        %4535 = vmatprep.subr.mxu0 0.0
        %4536 = vmatpush2.msra.mxu0 0.0
        %4537 = vmatprep.subr.mxu0 0.0
        %4538 = vmatpush2.msra.mxu0 0.0
        %4539 = vmatprep.subr.mxu0 0.0
        %4540 = vmatpush2.msra.mxu0 0.0
        %4541 = vmatprep.mubr.f32.mxu0 0.0
        %4542 = vmatmul.mubr.f32.gmra.mxu0 %v4475
        %v4543 = vpop.f32.mrf.mxu0
        %v4544 = vadd.f32 0.0, %v4543
        %v4545 = vpop.f32.mrf.mxu0
        %4546 = vdwg.mxu0
        %v4547 = vadd.f32 %v4085, %v4544
        %s4548 = scalar_lea.vmem %s6, 8
        %v4549 = vld [vmem:[%s4548] sm:$0xf]
        %s4550 = scalar_lea.vmem %s6, 12
        %v4551 = vld [vmem:[%s4550] sm:$0xf]
        %s4552 = scalar_lea.vmem %s4, 128
        %v4553 = vld [vmem:[%s4552] sm:$0xff]
        %v4554 = vld [vmem:[%s4552 + $0x8] sm:$0xff]
        %v4555 = vld [vmem:[%s4552 + $0x10] sm:$0xff]
        %v4556 = vld [vmem:[%s4552 + $0x18] sm:$0xff]
        %v4557 = vld [vmem:[%s4552 + $0x20] sm:$0xff]
        %v4558 = vld [vmem:[%s4552 + $0x28] sm:$0xff]
        %v4559 = vld [vmem:[%s4552 + $0x30] sm:$0xff]
        %v4560 = vld [vmem:[%s4552 + $0x38] sm:$0xff]
        %v4561 = vld [vmem:[%s4552 + $0x40] sm:$0xff]
        %v4562 = vld [vmem:[%s4552 + $0x48] sm:$0xff]
        %v4563 = vld [vmem:[%s4552 + $0x50] sm:$0xff]
        %v4564 = vld [vmem:[%s4552 + $0x58] sm:$0xff]
        %v4565 = vld [vmem:[%s4552 + $0x60] sm:$0xff]
        %v4566 = vld [vmem:[%s4552 + $0x68] sm:$0xff]
        %v4567 = vld [vmem:[%s4552 + $0x70] sm:$0xff]
        %v4568 = vld [vmem:[%s4552 + $0x78] sm:$0xff]
        %v4570 = vlaneseq
        %v4571 = vshrl.u32 %v4570, 7
        %v4572 = vsub.s32 0, %v4571
        %v4573 = vrot.slane %v4549, %v4572
        %v4574 = vlaneseq
        %v4575 = vshrl.u32 %v4574, 7
        %v4576 = vsub.s32 1, %v4575
        %v4577 = vrot.slane %v4549, %v4576
        %v4578 = vlaneseq
        %v4579 = vshrl.u32 %v4578, 7
        %v4580 = vsub.s32 2, %v4579
        %v4581 = vrot.slane %v4549, %v4580
        %v4582 = vlaneseq
        %v4583 = vshrl.u32 %v4582, 7
        %v4584 = vsub.s32 3, %v4583
        %v4585 = vrot.slane %v4549, %v4584
        %v4591 = vsel %vm459, %v4547, 0
        %4593 = vmatprep.subr.mxu0 0.0
        %4594 = vmatpush1.msra.mxu0 0.0
        %4595 = vmatprep.subr.mxu0 0.0
        %4596 = vmatpush1.msra.mxu0 0.0
        %4597 = vmatprep.subr.mxu0 0.0
        %4598 = vmatpush1.msra.mxu0 0.0
        %4599 = vmatprep.subr.mxu0 0.0
        %4600 = vmatpush1.msra.mxu0 0.0
        %4601 = vmatprep.subr.mxu0 0.0
        %4602 = vmatpush1.msra.mxu0 0.0
        %4603 = vmatprep.subr.mxu0 0.0
        %4604 = vmatpush1.msra.mxu0 0.0
        %4605 = vmatprep.subr.mxu0 0.0
        %4606 = vmatpush1.msra.mxu0 0.0
        %4607 = vmatprep.subr.mxu0 0.0
        %4608 = vmatpush1.msra.mxu0 0.0
        %4609 = vmatprep.subr.mxu0 0.0
        %4610 = vmatpush1.msra.mxu0 0.0
        %4611 = vmatprep.subr.mxu0 0.0
        %4612 = vmatpush1.msra.mxu0 0.0
        %4613 = vmatprep.subr.mxu0 0.0
        %4614 = vmatpush1.msra.mxu0 0.0
        %4615 = vmatprep.subr.mxu0 0.0
        %4616 = vmatpush1.msra.mxu0 0.0
        %4617 = vmatprep.subr.mxu0 %v4566
        %4618 = vmatpush1.msra.mxu0 %v4565
        %4619 = vmatprep.subr.mxu0 %v4562
        %4620 = vmatpush1.msra.mxu0 %v4561
        %4621 = vmatprep.subr.mxu0 %v4558
        %4622 = vmatpush1.msra.mxu0 %v4557
        %4623 = vmatprep.subr.mxu0 %v4554
        %4624 = vmatpush1.msra.mxu0 %v4553
        %4625 = vmatprep.subr.mxu0 0.0
        %4626 = vmatpush2.msra.mxu0 0.0
        %4627 = vmatprep.subr.mxu0 0.0
        %4628 = vmatpush2.msra.mxu0 0.0
        %4629 = vmatprep.subr.mxu0 0.0
        %4630 = vmatpush2.msra.mxu0 0.0
        %4631 = vmatprep.subr.mxu0 0.0
        %4632 = vmatpush2.msra.mxu0 0.0
        %4633 = vmatprep.subr.mxu0 0.0
        %4634 = vmatpush2.msra.mxu0 0.0
        %4635 = vmatprep.subr.mxu0 0.0
        %4636 = vmatpush2.msra.mxu0 0.0
        %4637 = vmatprep.subr.mxu0 0.0
        %4638 = vmatpush2.msra.mxu0 0.0
        %4639 = vmatprep.subr.mxu0 0.0
        %4640 = vmatpush2.msra.mxu0 0.0
        %4641 = vmatprep.subr.mxu0 0.0
        %4642 = vmatpush2.msra.mxu0 0.0
        %4643 = vmatprep.subr.mxu0 0.0
        %4644 = vmatpush2.msra.mxu0 0.0
        %4645 = vmatprep.subr.mxu0 0.0
        %4646 = vmatpush2.msra.mxu0 0.0
        %4647 = vmatprep.subr.mxu0 0.0
        %4648 = vmatpush2.msra.mxu0 0.0
        %4649 = vmatprep.subr.mxu0 0.0
        %4650 = vmatpush2.msra.mxu0 0.0
        %4651 = vmatprep.subr.mxu0 0.0
        %4652 = vmatpush2.msra.mxu0 0.0
        %4653 = vmatprep.subr.mxu0 0.0
        %4654 = vmatpush2.msra.mxu0 0.0
        %4655 = vmatprep.subr.mxu0 0.0
        %4656 = vmatpush2.msra.mxu0 0.0
        %4657 = vmatprep.mubr.f32.mxu0 0.0
        %4658 = vmatmul.mubr.f32.gmra.mxu0 %v4591
        %v4659 = vpop.f32.mrf.mxu0
        %v4660 = vadd.f32 %v4573, %v4659
        %v4661 = vpop.f32.mrf.mxu0
        %v4662 = vadd.f32 %v4577, %v4661
        %4663 = vdwg.mxu0
        %4664 = vmatprep.subr.mxu0 0.0
        %4665 = vmatpush1.msra.mxu0 0.0
        %4666 = vmatprep.subr.mxu0 0.0
        %4667 = vmatpush1.msra.mxu0 0.0
        %4668 = vmatprep.subr.mxu0 0.0
        %4669 = vmatpush1.msra.mxu0 0.0
        %4670 = vmatprep.subr.mxu0 0.0
        %4671 = vmatpush1.msra.mxu0 0.0
        %4672 = vmatprep.subr.mxu0 0.0
        %4673 = vmatpush1.msra.mxu0 0.0
        %4674 = vmatprep.subr.mxu0 0.0
        %4675 = vmatpush1.msra.mxu0 0.0
        %4676 = vmatprep.subr.mxu0 0.0
        %4677 = vmatpush1.msra.mxu0 0.0
        %4678 = vmatprep.subr.mxu0 0.0
        %4679 = vmatpush1.msra.mxu0 0.0
        %4680 = vmatprep.subr.mxu0 0.0
        %4681 = vmatpush1.msra.mxu0 0.0
        %4682 = vmatprep.subr.mxu0 0.0
        %4683 = vmatpush1.msra.mxu0 0.0
        %4684 = vmatprep.subr.mxu0 0.0
        %4685 = vmatpush1.msra.mxu0 0.0
        %4686 = vmatprep.subr.mxu0 0.0
        %4687 = vmatpush1.msra.mxu0 0.0
        %4688 = vmatprep.subr.mxu0 %v4568
        %4689 = vmatpush1.msra.mxu0 %v4567
        %4690 = vmatprep.subr.mxu0 %v4564
        %4691 = vmatpush1.msra.mxu0 %v4563
        %4692 = vmatprep.subr.mxu0 %v4560
        %4693 = vmatpush1.msra.mxu0 %v4559
        %4694 = vmatprep.subr.mxu0 %v4556
        %4695 = vmatpush1.msra.mxu0 %v4555
        %4696 = vmatprep.subr.mxu0 0.0
        %4697 = vmatpush2.msra.mxu0 0.0
        %4698 = vmatprep.subr.mxu0 0.0
        %4699 = vmatpush2.msra.mxu0 0.0
        %4700 = vmatprep.subr.mxu0 0.0
        %4701 = vmatpush2.msra.mxu0 0.0
        %4702 = vmatprep.subr.mxu0 0.0
        %4703 = vmatpush2.msra.mxu0 0.0
        %4704 = vmatprep.subr.mxu0 0.0
        %4705 = vmatpush2.msra.mxu0 0.0
        %4706 = vmatprep.subr.mxu0 0.0
        %4707 = vmatpush2.msra.mxu0 0.0
        %4708 = vmatprep.subr.mxu0 0.0
        %4709 = vmatpush2.msra.mxu0 0.0
        %4710 = vmatprep.subr.mxu0 0.0
        %4711 = vmatpush2.msra.mxu0 0.0
        %4712 = vmatprep.subr.mxu0 0.0
        %4713 = vmatpush2.msra.mxu0 0.0
        %4714 = vmatprep.subr.mxu0 0.0
        %4715 = vmatpush2.msra.mxu0 0.0
        %4716 = vmatprep.subr.mxu0 0.0
        %4717 = vmatpush2.msra.mxu0 0.0
        %4718 = vmatprep.subr.mxu0 0.0
        %4719 = vmatpush2.msra.mxu0 0.0
        %4720 = vmatprep.subr.mxu0 0.0
        %4721 = vmatpush2.msra.mxu0 0.0
        %4722 = vmatprep.subr.mxu0 0.0
        %4723 = vmatpush2.msra.mxu0 0.0
        %4724 = vmatprep.subr.mxu0 0.0
        %4725 = vmatpush2.msra.mxu0 0.0
        %4726 = vmatprep.subr.mxu0 0.0
        %4727 = vmatpush2.msra.mxu0 0.0
        %4728 = vmatprep.mubr.f32.mxu0 0.0
        %4729 = vmatmul.mubr.f32.gmra.mxu0 %v4591
        %v4730 = vpop.f32.mrf.mxu0
        %v4731 = vadd.f32 %v4581, %v4730
        %v4732 = vpop.f32.mrf.mxu0
        %v4733 = vadd.f32 %v4585, %v4732
        %4734 = vdwg.mxu0
        %v4735 = vmax.f32 %v4660, 0.0
        %v4736 = vmax.f32 %v4662, 0.0
        %v4737 = vmax.f32 %v4731, 0.0
        %v4738 = vmax.f32 %v4733, 0.0
        %s4739 = scalar_lea.vmem %s5, 512
        %v4740 = vld [vmem:[%s4739] sm:$0xff]
        %v4741 = vld [vmem:[%s4739 + $0x8] sm:$0xff]
        %v4742 = vld [vmem:[%s4739 + $0x10] sm:$0xff]
        %v4743 = vld [vmem:[%s4739 + $0x18] sm:$0xff]
        %v4744 = vld [vmem:[%s4739 + $0x20] sm:$0xff]
        %v4745 = vld [vmem:[%s4739 + $0x28] sm:$0xff]
        %v4746 = vld [vmem:[%s4739 + $0x30] sm:$0xff]
        %v4747 = vld [vmem:[%s4739 + $0x38] sm:$0xff]
        %v4748 = vld [vmem:[%s4739 + $0x40] sm:$0xff]
        %v4749 = vld [vmem:[%s4739 + $0x48] sm:$0xff]
        %v4750 = vld [vmem:[%s4739 + $0x50] sm:$0xff]
        %v4751 = vld [vmem:[%s4739 + $0x58] sm:$0xff]
        %v4752 = vld [vmem:[%s4739 + $0x60] sm:$0xff]
        %v4753 = vld [vmem:[%s4739 + $0x68] sm:$0xff]
        %v4754 = vld [vmem:[%s4739 + $0x70] sm:$0xff]
        %v4755 = vld [vmem:[%s4739 + $0x78] sm:$0xff]
        %v4756 = vld [vmem:[%s4739 + $0x80] sm:$0xff]
        %v4757 = vld [vmem:[%s4739 + $0x88] sm:$0xff]
        %v4758 = vld [vmem:[%s4739 + $0x90] sm:$0xff]
        %v4759 = vld [vmem:[%s4739 + $0x98] sm:$0xff]
        %v4760 = vld [vmem:[%s4739 + $0xa0] sm:$0xff]
        %v4761 = vld [vmem:[%s4739 + $0xa8] sm:$0xff]
        %v4762 = vld [vmem:[%s4739 + $0xb0] sm:$0xff]
        %v4763 = vld [vmem:[%s4739 + $0xb8] sm:$0xff]
        %v4764 = vld [vmem:[%s4739 + $0xc0] sm:$0xff]
        %v4765 = vld [vmem:[%s4739 + $0xc8] sm:$0xff]
        %v4766 = vld [vmem:[%s4739 + $0xd0] sm:$0xff]
        %v4767 = vld [vmem:[%s4739 + $0xd8] sm:$0xff]
        %v4768 = vld [vmem:[%s4739 + $0xe0] sm:$0xff]
        %v4769 = vld [vmem:[%s4739 + $0xe8] sm:$0xff]
        %v4770 = vld [vmem:[%s4739 + $0xf0] sm:$0xff]
        %v4771 = vld [vmem:[%s4739 + $0xf8] sm:$0xff]
        %v4772 = vld [vmem:[%s4739 + $0x100] sm:$0xff]
        %v4773 = vld [vmem:[%s4739 + $0x108] sm:$0xff]
        %v4774 = vld [vmem:[%s4739 + $0x110] sm:$0xff]
        %v4775 = vld [vmem:[%s4739 + $0x118] sm:$0xff]
        %v4776 = vld [vmem:[%s4739 + $0x120] sm:$0xff]
        %v4777 = vld [vmem:[%s4739 + $0x128] sm:$0xff]
        %v4778 = vld [vmem:[%s4739 + $0x130] sm:$0xff]
        %v4779 = vld [vmem:[%s4739 + $0x138] sm:$0xff]
        %v4780 = vld [vmem:[%s4739 + $0x140] sm:$0xff]
        %v4781 = vld [vmem:[%s4739 + $0x148] sm:$0xff]
        %v4782 = vld [vmem:[%s4739 + $0x150] sm:$0xff]
        %v4783 = vld [vmem:[%s4739 + $0x158] sm:$0xff]
        %v4784 = vld [vmem:[%s4739 + $0x160] sm:$0xff]
        %v4785 = vld [vmem:[%s4739 + $0x168] sm:$0xff]
        %v4786 = vld [vmem:[%s4739 + $0x170] sm:$0xff]
        %v4787 = vld [vmem:[%s4739 + $0x178] sm:$0xff]
        %v4788 = vld [vmem:[%s4739 + $0x180] sm:$0xff]
        %v4789 = vld [vmem:[%s4739 + $0x188] sm:$0xff]
        %v4790 = vld [vmem:[%s4739 + $0x190] sm:$0xff]
        %v4791 = vld [vmem:[%s4739 + $0x198] sm:$0xff]
        %v4792 = vld [vmem:[%s4739 + $0x1a0] sm:$0xff]
        %v4793 = vld [vmem:[%s4739 + $0x1a8] sm:$0xff]
        %v4794 = vld [vmem:[%s4739 + $0x1b0] sm:$0xff]
        %v4795 = vld [vmem:[%s4739 + $0x1b8] sm:$0xff]
        %v4796 = vld [vmem:[%s4739 + $0x1c0] sm:$0xff]
        %v4797 = vld [vmem:[%s4739 + $0x1c8] sm:$0xff]
        %v4798 = vld [vmem:[%s4739 + $0x1d0] sm:$0xff]
        %v4799 = vld [vmem:[%s4739 + $0x1d8] sm:$0xff]
        %v4800 = vld [vmem:[%s4739 + $0x1e0] sm:$0xff]
        %v4801 = vld [vmem:[%s4739 + $0x1e8] sm:$0xff]
        %v4802 = vld [vmem:[%s4739 + $0x1f0] sm:$0xff]
        %v4803 = vld [vmem:[%s4739 + $0x1f8] sm:$0xff]
        %4804 = vmatprep.subr.mxu0 0.0
        %4805 = vmatpush1.msra.mxu0 %v4755
        %4806 = vmatprep.subr.mxu0 0.0
        %4807 = vmatpush1.msra.mxu0 %v4754
        %4808 = vmatprep.subr.mxu0 0.0
        %4809 = vmatpush1.msra.mxu0 %v4753
        %4810 = vmatprep.subr.mxu0 0.0
        %4811 = vmatpush1.msra.mxu0 %v4752
        %4812 = vmatprep.subr.mxu0 0.0
        %4813 = vmatpush1.msra.mxu0 %v4751
        %4814 = vmatprep.subr.mxu0 0.0
        %4815 = vmatpush1.msra.mxu0 %v4750
        %4816 = vmatprep.subr.mxu0 0.0
        %4817 = vmatpush1.msra.mxu0 %v4749
        %4818 = vmatprep.subr.mxu0 0.0
        %4819 = vmatpush1.msra.mxu0 %v4748
        %4820 = vmatprep.subr.mxu0 0.0
        %4821 = vmatpush1.msra.mxu0 %v4747
        %4822 = vmatprep.subr.mxu0 0.0
        %4823 = vmatpush1.msra.mxu0 %v4746
        %4824 = vmatprep.subr.mxu0 0.0
        %4825 = vmatpush1.msra.mxu0 %v4745
        %4826 = vmatprep.subr.mxu0 0.0
        %4827 = vmatpush1.msra.mxu0 %v4744
        %4828 = vmatprep.subr.mxu0 0.0
        %4829 = vmatpush1.msra.mxu0 %v4743
        %4830 = vmatprep.subr.mxu0 0.0
        %4831 = vmatpush1.msra.mxu0 %v4742
        %4832 = vmatprep.subr.mxu0 0.0
        %4833 = vmatpush1.msra.mxu0 %v4741
        %4834 = vmatprep.subr.mxu0 0.0
        %4835 = vmatpush1.msra.mxu0 %v4740
        %4836 = vmatprep.subr.mxu0 0.0
        %4837 = vmatpush2.msra.mxu0 %v4771
        %4838 = vmatprep.subr.mxu0 0.0
        %4839 = vmatpush2.msra.mxu0 %v4770
        %4840 = vmatprep.subr.mxu0 0.0
        %4841 = vmatpush2.msra.mxu0 %v4769
        %4842 = vmatprep.subr.mxu0 0.0
        %4843 = vmatpush2.msra.mxu0 %v4768
        %4844 = vmatprep.subr.mxu0 0.0
        %4845 = vmatpush2.msra.mxu0 %v4767
        %4846 = vmatprep.subr.mxu0 0.0
        %4847 = vmatpush2.msra.mxu0 %v4766
        %4848 = vmatprep.subr.mxu0 0.0
        %4849 = vmatpush2.msra.mxu0 %v4765
        %4850 = vmatprep.subr.mxu0 0.0
        %4851 = vmatpush2.msra.mxu0 %v4764
        %4852 = vmatprep.subr.mxu0 0.0
        %4853 = vmatpush2.msra.mxu0 %v4763
        %4854 = vmatprep.subr.mxu0 0.0
        %4855 = vmatpush2.msra.mxu0 %v4762
        %4856 = vmatprep.subr.mxu0 0.0
        %4857 = vmatpush2.msra.mxu0 %v4761
        %4858 = vmatprep.subr.mxu0 0.0
        %4859 = vmatpush2.msra.mxu0 %v4760
        %4860 = vmatprep.subr.mxu0 0.0
        %4861 = vmatpush2.msra.mxu0 %v4759
        %4862 = vmatprep.subr.mxu0 0.0
        %4863 = vmatpush2.msra.mxu0 %v4758
        %4864 = vmatprep.subr.mxu0 0.0
        %4865 = vmatpush2.msra.mxu0 %v4757
        %4866 = vmatprep.subr.mxu0 0.0
        %4867 = vmatpush2.msra.mxu0 %v4756
        %4868 = vmatprep.mubr.f32.mxu0 %v4736
        %4869 = vmatmul.mubr.f32.gmra.mxu0 %v4735
        %v4870 = vpop.f32.mrf.mxu0
        %v4871 = vadd.f32 0.0, %v4870
        %v4872 = vpop.f32.mrf.mxu0
        %4873 = vdwg.mxu0
        %4874 = vmatprep.subr.mxu0 0.0
        %4875 = vmatpush1.msra.mxu0 %v4787
        %4876 = vmatprep.subr.mxu0 0.0
        %4877 = vmatpush1.msra.mxu0 %v4786
        %4878 = vmatprep.subr.mxu0 0.0
        %4879 = vmatpush1.msra.mxu0 %v4785
        %4880 = vmatprep.subr.mxu0 0.0
        %4881 = vmatpush1.msra.mxu0 %v4784
        %4882 = vmatprep.subr.mxu0 0.0
        %4883 = vmatpush1.msra.mxu0 %v4783
        %4884 = vmatprep.subr.mxu0 0.0
        %4885 = vmatpush1.msra.mxu0 %v4782
        %4886 = vmatprep.subr.mxu0 0.0
        %4887 = vmatpush1.msra.mxu0 %v4781
        %4888 = vmatprep.subr.mxu0 0.0
        %4889 = vmatpush1.msra.mxu0 %v4780
        %4890 = vmatprep.subr.mxu0 0.0
        %4891 = vmatpush1.msra.mxu0 %v4779
        %4892 = vmatprep.subr.mxu0 0.0
        %4893 = vmatpush1.msra.mxu0 %v4778
        %4894 = vmatprep.subr.mxu0 0.0
        %4895 = vmatpush1.msra.mxu0 %v4777
        %4896 = vmatprep.subr.mxu0 0.0
        %4897 = vmatpush1.msra.mxu0 %v4776
        %4898 = vmatprep.subr.mxu0 0.0
        %4899 = vmatpush1.msra.mxu0 %v4775
        %4900 = vmatprep.subr.mxu0 0.0
        %4901 = vmatpush1.msra.mxu0 %v4774
        %4902 = vmatprep.subr.mxu0 0.0
        %4903 = vmatpush1.msra.mxu0 %v4773
        %4904 = vmatprep.subr.mxu0 0.0
        %4905 = vmatpush1.msra.mxu0 %v4772
        %4906 = vmatprep.subr.mxu0 0.0
        %4907 = vmatpush2.msra.mxu0 %v4803
        %4908 = vmatprep.subr.mxu0 0.0
        %4909 = vmatpush2.msra.mxu0 %v4802
        %4910 = vmatprep.subr.mxu0 0.0
        %4911 = vmatpush2.msra.mxu0 %v4801
        %4912 = vmatprep.subr.mxu0 0.0
        %4913 = vmatpush2.msra.mxu0 %v4800
        %4914 = vmatprep.subr.mxu0 0.0
        %4915 = vmatpush2.msra.mxu0 %v4799
        %4916 = vmatprep.subr.mxu0 0.0
        %4917 = vmatpush2.msra.mxu0 %v4798
        %4918 = vmatprep.subr.mxu0 0.0
        %4919 = vmatpush2.msra.mxu0 %v4797
        %4920 = vmatprep.subr.mxu0 0.0
        %4921 = vmatpush2.msra.mxu0 %v4796
        %4922 = vmatprep.subr.mxu0 0.0
        %4923 = vmatpush2.msra.mxu0 %v4795
        %4924 = vmatprep.subr.mxu0 0.0
        %4925 = vmatpush2.msra.mxu0 %v4794
        %4926 = vmatprep.subr.mxu0 0.0
        %4927 = vmatpush2.msra.mxu0 %v4793
        %4928 = vmatprep.subr.mxu0 0.0
        %4929 = vmatpush2.msra.mxu0 %v4792
        %4930 = vmatprep.subr.mxu0 0.0
        %4931 = vmatpush2.msra.mxu0 %v4791
        %4932 = vmatprep.subr.mxu0 0.0
        %4933 = vmatpush2.msra.mxu0 %v4790
        %4934 = vmatprep.subr.mxu0 0.0
        %4935 = vmatpush2.msra.mxu0 %v4789
        %4936 = vmatprep.subr.mxu0 0.0
        %4937 = vmatpush2.msra.mxu0 %v4788
        %4938 = vmatprep.mubr.f32.mxu0 %v4738
        %4939 = vmatmul.mubr.f32.gmra.mxu0 %v4737
        %v4940 = vpop.f32.mrf.mxu0
        %v4941 = vadd.f32 %v4871, %v4940
        %v4942 = vpop.f32.mrf.mxu0
        %4943 = vdwg.mxu0
        %v4944 = vadd.f32 %v4547, %v4941
        %v4946 = vlaneseq
        %v4947 = vshrl.u32 %v4946, 7
        %v4948 = vsub.s32 0, %v4947
        %v4949 = vrot.slane %v4551, %v4948
        %v4951 = vadd.f32 %v4944, %v4949
        %4952 = vst.msk [vmem:[%s354] sm:$0xff] %vm459, %v4951
        %v4954 = vsel %vm673, 0.125, 0
        %4956 = vmatprep.subr.mxu0 0.0
        %4957 = vmatpush1.msra.mxu0 0.0
        %4958 = vmatprep.subr.mxu0 0.0
        %4959 = vmatpush1.msra.mxu0 0.0
        %4960 = vmatprep.subr.mxu0 0.0
        %4961 = vmatpush1.msra.mxu0 0.0
        %4962 = vmatprep.subr.mxu0 0.0
        %4963 = vmatpush1.msra.mxu0 0.0
        %4964 = vmatprep.subr.mxu0 0.0
        %4965 = vmatpush1.msra.mxu0 0.0
        %4966 = vmatprep.subr.mxu0 0.0
        %4967 = vmatpush1.msra.mxu0 0.0
        %4968 = vmatprep.subr.mxu0 0.0
        %4969 = vmatpush1.msra.mxu0 0.0
        %4970 = vmatprep.subr.mxu0 0.0
        %4971 = vmatpush1.msra.mxu0 0.0
        %4972 = vmatprep.subr.mxu0 0.0
        %4973 = vmatpush1.msra.mxu0 0.0
        %4974 = vmatprep.subr.mxu0 0.0
        %4975 = vmatpush1.msra.mxu0 0.0
        %4976 = vmatprep.subr.mxu0 0.0
        %4977 = vmatpush1.msra.mxu0 0.0
        %4978 = vmatprep.subr.mxu0 0.0
        %4979 = vmatpush1.msra.mxu0 0.0
        %4980 = vmatprep.subr.mxu0 0.0
        %4981 = vmatpush1.msra.mxu0 0.0
        %4982 = vmatprep.subr.mxu0 0.0
        %4983 = vmatpush1.msra.mxu0 0.0
        %4984 = vmatprep.subr.mxu0 0.0
        %4985 = vmatpush1.msra.mxu0 0.0
        %4986 = vmatprep.subr.mxu0 0.0
        %4987 = vmatpush1.msra.mxu0 %v4951
        %4988 = vmatprep.subr.mxu0 0.0
        %4989 = vmatpush2.msra.mxu0 0.0
        %4990 = vmatprep.subr.mxu0 0.0
        %4991 = vmatpush2.msra.mxu0 0.0
        %4992 = vmatprep.subr.mxu0 0.0
        %4993 = vmatpush2.msra.mxu0 0.0
        %4994 = vmatprep.subr.mxu0 0.0
        %4995 = vmatpush2.msra.mxu0 0.0
        %4996 = vmatprep.subr.mxu0 0.0
        %4997 = vmatpush2.msra.mxu0 0.0
        %4998 = vmatprep.subr.mxu0 0.0
        %4999 = vmatpush2.msra.mxu0 0.0
        %5000 = vmatprep.subr.mxu0 0.0
        %5001 = vmatpush2.msra.mxu0 0.0
        %5002 = vmatprep.subr.mxu0 0.0
        %5003 = vmatpush2.msra.mxu0 0.0
        %5004 = vmatprep.subr.mxu0 0.0
        %5005 = vmatpush2.msra.mxu0 0.0
        %5006 = vmatprep.subr.mxu0 0.0
        %5007 = vmatpush2.msra.mxu0 0.0
        %5008 = vmatprep.subr.mxu0 0.0
        %5009 = vmatpush2.msra.mxu0 0.0
        %5010 = vmatprep.subr.mxu0 0.0
        %5011 = vmatpush2.msra.mxu0 0.0
        %5012 = vmatprep.subr.mxu0 0.0
        %5013 = vmatpush2.msra.mxu0 0.0
        %5014 = vmatprep.subr.mxu0 0.0
        %5015 = vmatpush2.msra.mxu0 0.0
        %5016 = vmatprep.subr.mxu0 0.0
        %5017 = vmatpush2.msra.mxu0 0.0
        %5018 = vmatprep.subr.mxu0 0.0
        %5019 = vmatpush2.msra.mxu0 0.0
        %5020 = vmatprep.mubr.f32.mxu0 0.0
        %5021 = vmatmul.mubr.f32.gmra.mxu0 %v4954
        %v5022 = vpop.f32.mrf.mxu0
        %v5023 = vadd.f32 0.0, %v5022
        %v5024 = vpop.f32.mrf.mxu0
        %5025 = vdwg.mxu0
        %v5026 = vld [vmem:[%s7] sm:$0xff]
        %v5027 = vld [vmem:[%s7 + $0x8] sm:$0xff]
        %v5028 = vld [vmem:[%s7 + $0x10] sm:$0xff]
        %v5029 = vld [vmem:[%s7 + $0x18] sm:$0xff]
        %v5030 = vld [vmem:[%s8] sm:$0x1]
        %v5032 = vsel %vm459, %v5023, 0
        %5034 = vmatprep.subr.mxu0 0.0
        %5035 = vmatpush1.msra.mxu0 0.0
        %5036 = vmatprep.subr.mxu0 0.0
        %5037 = vmatpush1.msra.mxu0 0.0
        %5038 = vmatprep.subr.mxu0 0.0
        %5039 = vmatpush1.msra.mxu0 0.0
        %5040 = vmatprep.subr.mxu0 0.0
        %5041 = vmatpush1.msra.mxu0 0.0
        %5042 = vmatprep.subr.mxu0 0.0
        %5043 = vmatpush1.msra.mxu0 0.0
        %5044 = vmatprep.subr.mxu0 0.0
        %5045 = vmatpush1.msra.mxu0 0.0
        %5046 = vmatprep.subr.mxu0 0.0
        %5047 = vmatpush1.msra.mxu0 0.0
        %5048 = vmatprep.subr.mxu0 0.0
        %5049 = vmatpush1.msra.mxu0 0.0
        %5050 = vmatprep.subr.mxu0 0.0
        %5051 = vmatpush1.msra.mxu0 0.0
        %5052 = vmatprep.subr.mxu0 0.0
        %5053 = vmatpush1.msra.mxu0 0.0
        %5054 = vmatprep.subr.mxu0 0.0
        %5055 = vmatpush1.msra.mxu0 0.0
        %5056 = vmatprep.subr.mxu0 0.0
        %5057 = vmatpush1.msra.mxu0 0.0
        %5058 = vmatprep.subr.mxu0 0.0
        %5059 = vmatpush1.msra.mxu0 %v5029
        %5060 = vmatprep.subr.mxu0 0.0
        %5061 = vmatpush1.msra.mxu0 %v5028
        %5062 = vmatprep.subr.mxu0 0.0
        %5063 = vmatpush1.msra.mxu0 %v5027
        %5064 = vmatprep.subr.mxu0 0.0
        %5065 = vmatpush1.msra.mxu0 %v5026
        %5066 = vmatprep.subr.mxu0 0.0
        %5067 = vmatpush2.msra.mxu0 0.0
        %5068 = vmatprep.subr.mxu0 0.0
        %5069 = vmatpush2.msra.mxu0 0.0
        %5070 = vmatprep.subr.mxu0 0.0
        %5071 = vmatpush2.msra.mxu0 0.0
        %5072 = vmatprep.subr.mxu0 0.0
        %5073 = vmatpush2.msra.mxu0 0.0
        %5074 = vmatprep.subr.mxu0 0.0
        %5075 = vmatpush2.msra.mxu0 0.0
        %5076 = vmatprep.subr.mxu0 0.0
        %5077 = vmatpush2.msra.mxu0 0.0
        %5078 = vmatprep.subr.mxu0 0.0
        %5079 = vmatpush2.msra.mxu0 0.0
        %5080 = vmatprep.subr.mxu0 0.0
        %5081 = vmatpush2.msra.mxu0 0.0
        %5082 = vmatprep.subr.mxu0 0.0
        %5083 = vmatpush2.msra.mxu0 0.0
        %5084 = vmatprep.subr.mxu0 0.0
        %5085 = vmatpush2.msra.mxu0 0.0
        %5086 = vmatprep.subr.mxu0 0.0
        %5087 = vmatpush2.msra.mxu0 0.0
        %5088 = vmatprep.subr.mxu0 0.0
        %5089 = vmatpush2.msra.mxu0 0.0
        %5090 = vmatprep.subr.mxu0 0.0
        %5091 = vmatpush2.msra.mxu0 0.0
        %5092 = vmatprep.subr.mxu0 0.0
        %5093 = vmatpush2.msra.mxu0 0.0
        %5094 = vmatprep.subr.mxu0 0.0
        %5095 = vmatpush2.msra.mxu0 0.0
        %5096 = vmatprep.subr.mxu0 0.0
        %5097 = vmatpush2.msra.mxu0 0.0
        %5098 = vmatprep.mubr.f32.mxu0 0.0
        %5099 = vmatmul.mubr.f32.gmra.mxu0 %v5032
        %v5100 = vpop.f32.mrf.mxu0
        %v5101 = vadd.f32 %v5030, %v5100
        %v5102 = vpop.f32.mrf.mxu0
        %5103 = vdwg.mxu0
        %v5104 = vmax.f32 %v5101, 0.0
        %s5105 = scalar_lea.vmem %s7, 32
        %v5106 = vld [vmem:[%s5105] sm:$0xff]
        %v5107 = vld [vmem:[%s5105 + $0x8] sm:$0xff]
        %v5108 = vld [vmem:[%s5105 + $0x10] sm:$0xff]
        %v5109 = vld [vmem:[%s5105 + $0x18] sm:$0xff]
        %s5110 = scalar_lea.vmem %s8, 1
        %v5111 = vld [vmem:[%s5110] sm:$0x1]
        %v5113 = vsel %vm459, %v5104, 0
        %5115 = vmatprep.subr.mxu0 0.0
        %5116 = vmatpush1.msra.mxu0 0.0
        %5117 = vmatprep.subr.mxu0 0.0
        %5118 = vmatpush1.msra.mxu0 0.0
        %5119 = vmatprep.subr.mxu0 0.0
        %5120 = vmatpush1.msra.mxu0 0.0
        %5121 = vmatprep.subr.mxu0 0.0
        %5122 = vmatpush1.msra.mxu0 0.0
        %5123 = vmatprep.subr.mxu0 0.0
        %5124 = vmatpush1.msra.mxu0 0.0
        %5125 = vmatprep.subr.mxu0 0.0
        %5126 = vmatpush1.msra.mxu0 0.0
        %5127 = vmatprep.subr.mxu0 0.0
        %5128 = vmatpush1.msra.mxu0 0.0
        %5129 = vmatprep.subr.mxu0 0.0
        %5130 = vmatpush1.msra.mxu0 0.0
        %5131 = vmatprep.subr.mxu0 0.0
        %5132 = vmatpush1.msra.mxu0 0.0
        %5133 = vmatprep.subr.mxu0 0.0
        %5134 = vmatpush1.msra.mxu0 0.0
        %5135 = vmatprep.subr.mxu0 0.0
        %5136 = vmatpush1.msra.mxu0 0.0
        %5137 = vmatprep.subr.mxu0 0.0
        %5138 = vmatpush1.msra.mxu0 0.0
        %5139 = vmatprep.subr.mxu0 0.0
        %5140 = vmatpush1.msra.mxu0 %v5109
        %5141 = vmatprep.subr.mxu0 0.0
        %5142 = vmatpush1.msra.mxu0 %v5108
        %5143 = vmatprep.subr.mxu0 0.0
        %5144 = vmatpush1.msra.mxu0 %v5107
        %5145 = vmatprep.subr.mxu0 0.0
        %5146 = vmatpush1.msra.mxu0 %v5106
        %5147 = vmatprep.subr.mxu0 0.0
        %5148 = vmatpush2.msra.mxu0 0.0
        %5149 = vmatprep.subr.mxu0 0.0
        %5150 = vmatpush2.msra.mxu0 0.0
        %5151 = vmatprep.subr.mxu0 0.0
        %5152 = vmatpush2.msra.mxu0 0.0
        %5153 = vmatprep.subr.mxu0 0.0
        %5154 = vmatpush2.msra.mxu0 0.0
        %5155 = vmatprep.subr.mxu0 0.0
        %5156 = vmatpush2.msra.mxu0 0.0
        %5157 = vmatprep.subr.mxu0 0.0
        %5158 = vmatpush2.msra.mxu0 0.0
        %5159 = vmatprep.subr.mxu0 0.0
        %5160 = vmatpush2.msra.mxu0 0.0
        %5161 = vmatprep.subr.mxu0 0.0
        %5162 = vmatpush2.msra.mxu0 0.0
        %5163 = vmatprep.subr.mxu0 0.0
        %5164 = vmatpush2.msra.mxu0 0.0
        %5165 = vmatprep.subr.mxu0 0.0
        %5166 = vmatpush2.msra.mxu0 0.0
        %5167 = vmatprep.subr.mxu0 0.0
        %5168 = vmatpush2.msra.mxu0 0.0
        %5169 = vmatprep.subr.mxu0 0.0
        %5170 = vmatpush2.msra.mxu0 0.0
        %5171 = vmatprep.subr.mxu0 0.0
        %5172 = vmatpush2.msra.mxu0 0.0
        %5173 = vmatprep.subr.mxu0 0.0
        %5174 = vmatpush2.msra.mxu0 0.0
        %5175 = vmatprep.subr.mxu0 0.0
        %5176 = vmatpush2.msra.mxu0 0.0
        %5177 = vmatprep.subr.mxu0 0.0
        %5178 = vmatpush2.msra.mxu0 0.0
        %5179 = vmatprep.mubr.f32.mxu0 0.0
        %5180 = vmatmul.mubr.f32.gmra.mxu0 %v5113
        %v5181 = vpop.f32.mrf.mxu0
        %v5182 = vadd.f32 %v5111, %v5181
        %v5183 = vpop.f32.mrf.mxu0
        %5184 = vdwg.mxu0
        %v5185 = vmax.f32 %v5182, 0.0
        %s5186 = scalar_lea.vmem %s7, 64
        %v5187 = vld [vmem:[%s5186] sm:$0xff]
        %v5188 = vld [vmem:[%s5186 + $0x8] sm:$0xff]
        %v5189 = vld [vmem:[%s5186 + $0x10] sm:$0xff]
        %v5190 = vld [vmem:[%s5186 + $0x18] sm:$0xff]
        %s5191 = scalar_lea.vmem %s8, 2
        %v5192 = vld [vmem:[%s5191] sm:$0x1]
        %v5194 = vsel %vm459, %v5185, 0
        %5196 = vmatprep.subr.mxu0 0.0
        %5197 = vmatpush1.msra.mxu0 0.0
        %5198 = vmatprep.subr.mxu0 0.0
        %5199 = vmatpush1.msra.mxu0 0.0
        %5200 = vmatprep.subr.mxu0 0.0
        %5201 = vmatpush1.msra.mxu0 0.0
        %5202 = vmatprep.subr.mxu0 0.0
        %5203 = vmatpush1.msra.mxu0 0.0
        %5204 = vmatprep.subr.mxu0 0.0
        %5205 = vmatpush1.msra.mxu0 0.0
        %5206 = vmatprep.subr.mxu0 0.0
        %5207 = vmatpush1.msra.mxu0 0.0
        %5208 = vmatprep.subr.mxu0 0.0
        %5209 = vmatpush1.msra.mxu0 0.0
        %5210 = vmatprep.subr.mxu0 0.0
        %5211 = vmatpush1.msra.mxu0 0.0
        %5212 = vmatprep.subr.mxu0 0.0
        %5213 = vmatpush1.msra.mxu0 0.0
        %5214 = vmatprep.subr.mxu0 0.0
        %5215 = vmatpush1.msra.mxu0 0.0
        %5216 = vmatprep.subr.mxu0 0.0
        %5217 = vmatpush1.msra.mxu0 0.0
        %5218 = vmatprep.subr.mxu0 0.0
        %5219 = vmatpush1.msra.mxu0 0.0
        %5220 = vmatprep.subr.mxu0 0.0
        %5221 = vmatpush1.msra.mxu0 %v5190
        %5222 = vmatprep.subr.mxu0 0.0
        %5223 = vmatpush1.msra.mxu0 %v5189
        %5224 = vmatprep.subr.mxu0 0.0
        %5225 = vmatpush1.msra.mxu0 %v5188
        %5226 = vmatprep.subr.mxu0 0.0
        %5227 = vmatpush1.msra.mxu0 %v5187
        %5228 = vmatprep.subr.mxu0 0.0
        %5229 = vmatpush2.msra.mxu0 0.0
        %5230 = vmatprep.subr.mxu0 0.0
        %5231 = vmatpush2.msra.mxu0 0.0
        %5232 = vmatprep.subr.mxu0 0.0
        %5233 = vmatpush2.msra.mxu0 0.0
        %5234 = vmatprep.subr.mxu0 0.0
        %5235 = vmatpush2.msra.mxu0 0.0
        %5236 = vmatprep.subr.mxu0 0.0
        %5237 = vmatpush2.msra.mxu0 0.0
        %5238 = vmatprep.subr.mxu0 0.0
        %5239 = vmatpush2.msra.mxu0 0.0
        %5240 = vmatprep.subr.mxu0 0.0
        %5241 = vmatpush2.msra.mxu0 0.0
        %5242 = vmatprep.subr.mxu0 0.0
        %5243 = vmatpush2.msra.mxu0 0.0
        %5244 = vmatprep.subr.mxu0 0.0
        %5245 = vmatpush2.msra.mxu0 0.0
        %5246 = vmatprep.subr.mxu0 0.0
        %5247 = vmatpush2.msra.mxu0 0.0
        %5248 = vmatprep.subr.mxu0 0.0
        %5249 = vmatpush2.msra.mxu0 0.0
        %5250 = vmatprep.subr.mxu0 0.0
        %5251 = vmatpush2.msra.mxu0 0.0
        %5252 = vmatprep.subr.mxu0 0.0
        %5253 = vmatpush2.msra.mxu0 0.0
        %5254 = vmatprep.subr.mxu0 0.0
        %5255 = vmatpush2.msra.mxu0 0.0
        %5256 = vmatprep.subr.mxu0 0.0
        %5257 = vmatpush2.msra.mxu0 0.0
        %5258 = vmatprep.subr.mxu0 0.0
        %5259 = vmatpush2.msra.mxu0 0.0
        %5260 = vmatprep.mubr.f32.mxu0 0.0
        %5261 = vmatmul.mubr.f32.gmra.mxu0 %v5194
        %v5262 = vpop.f32.mrf.mxu0
        %v5263 = vadd.f32 %v5192, %v5262
        %v5264 = vpop.f32.mrf.mxu0
        %5265 = vdwg.mxu0
        %vm5266 = vcmask 253952
        %5267 = vst.msk [vmem:[%s360] sm:$0x1] %vm5266, %v5263
        %s5268 = sand.u32 %s230, 1
        %s5269 = scalar_lea.sflag [#allocation3], %s5268
        %s5270 = sand.u32 %s230, 1
        %s5271 = smul.addr %s5270, 8
        %s5272 = scalar_lea.vmem [#allocation2], %s5271
        %s5273 = sand.u32 %s256, 1
        %s5274 = scalar_lea.sflag [#allocation5], %s5273
        %s5275 = sand.u32 %s256, 1
        %s5276 = scalar_lea.vmem [#allocation4], %s5275
        // Predicated region
        $region57: #{tpu_custom_call.1} parent=55 // pred_check
          %p5277 = pneg %p240
        $region58: #{tpu_custom_call.1} parent=55 // pred_check_branch
          %5279 = sbr.rel (%p5277) target = $region60
        $region59: #{tpu_custom_call.1} parent=55 // pred_region
          %s5281 = ssub.s32 128, 128
          %5282 = vsyncadd %s5269, %s5281
          %s5283 = smul.addr %s28, 128
          %s5284 = scalar_lea.hbm %s9, %s5283
          %s5286 = sshll.u32 %s5272, 4
          %s5287 = int_to_ptr.vmem [resolvable:$true] %s5286
          %5289 = dma.vmem_to_hbm [thread:$0]  %s5287, 128, %s5284, %s5269
        $region60: #{tpu_custom_call.1} parent=55 // pred_fallthru
          _
        // Predicated region
        $region61: #{tpu_custom_call.1} parent=55 // pred_check
          %p5290 = pneg %p266
        $region62: #{tpu_custom_call.1} parent=55 // pred_check_branch
          %5292 = sbr.rel (%p5290) target = $region64
        $region63: #{tpu_custom_call.1} parent=55 // pred_region
          %s5294 = ssub.s32 16, 16
          %5295 = vsyncadd %s5274, %s5294
          %s5296 = smul.addr %s28, 16
          %s5297 = scalar_lea.hbm %s10, %s5296
          %s5299 = sshll.u32 %s5276, 4
          %s5300 = int_to_ptr.vmem [resolvable:$true] %s5299
          %5302 = dma.vmem_to_hbm [thread:$0]  %s5300, 16, %s5297, %s5274
        $region64: #{tpu_custom_call.1} parent=55 // pred_fallthru
          _
      $region56: #{tpu_custom_call.1} parent=5 // pred_fallthru
        _
      %p5303 = scmp.le.s32.totalorder 2, %s23
      // Predicated region
      $region65: #{tpu_custom_call.1} parent=5 // pred_check
        %p5304 = pneg %p5303
      $region66: #{tpu_custom_call.1} parent=5 // pred_check_branch
        %5306 = sbr.rel (%p5304) target = $region68
      $region67: #{tpu_custom_call.1} parent=5 // pred_region
        %s5307 = ssub.s32 %s23, 2
        // Predicated region
        $region69: #{tpu_custom_call.1} parent=67 // pred_check
          %p5308 = pneg %p246
        $region70: #{tpu_custom_call.1} parent=67 // pred_check_branch
          %5310 = sbr.rel (%p5308) target = $region72
        $region71: #{tpu_custom_call.1} parent=67 // pred_region
          %s5311 = sand.u32 %s231, 1
          %s5312 = scalar_lea.sflag [#allocation3], %s5311
          %s5313 = sand.u32 %s231, 1
          %s5314 = smul.addr %s5313, 8
          %s5315 = scalar_lea.vmem [#allocation2], %s5314
          %5316 = dma.done %s5312, 128
        $region72: #{tpu_custom_call.1} parent=67 // pred_fallthru
          _
        // Predicated region
        $region73: #{tpu_custom_call.1} parent=67 // pred_check
          %p5317 = pneg %p272
        $region74: #{tpu_custom_call.1} parent=67 // pred_check_branch
          %5319 = sbr.rel (%p5317) target = $region76
        $region75: #{tpu_custom_call.1} parent=67 // pred_region
          %s5320 = sand.u32 %s257, 1
          %s5321 = scalar_lea.sflag [#allocation5], %s5320
          %s5322 = sand.u32 %s257, 1
          %s5323 = scalar_lea.vmem [#allocation4], %s5322
          %5324 = dma.done %s5321, 16
        $region76: #{tpu_custom_call.1} parent=67 // pred_fallthru
          _
      $region68: #{tpu_custom_call.1} parent=5 // pred_fallthru
        _
    $region6: #{tpu_custom_call.1} parent=1 // loop_footer
      %s27 = sadd.s32 1, %s23
    $region7: #{tpu_custom_call.1} parent=1 // loop_footer_branch
      %22 = sbr.rel target = $region3
    $region8: #{tpu_custom_call.1} parent=1 // loop_exit
      _
    %5325 = vsyncpa [#allocation3], 1
    %s5326 = scalar_lea.sflag [#allocation3], 1
    %5327 = vsyncpa %s5326, 1
    %5328 = vsyncpa [#allocation5], 1
    %s5329 = scalar_lea.sflag [#allocation5], 1
    %5330 = vsyncpa %s5329, 1

</llo_original>
